<compile_context>
chip_gen: v6e
topology: v6e:2x2x1
jax: 0.10.0
libtpu: 0.0.40
codegen_flags: <defaults>
</compile_context>

<pallas_src>
import jax
import jax.numpy as jnp
import numpy as np
from jax.experimental import pallas as pl
from jax.experimental.pallas import tpu as pltpu


# ---------------- fused kernel ----------------

def lenet_kernel(x_ref, w1_ref, b1_ref, w2_ref, b2_ref,
                 fw1_ref, fb1_ref, fw2_ref, fb2_ref, o_ref):
    # x_ref:  (B, H, W)        single input channel
    # w1_ref: (3, 3, C1)       b1_ref: (1, C1)
    # w2_ref: (9*C1, C2)       b2_ref: (1, C2)        (im2col-flattened conv2 weight)
    # fw1_ref:(Hp*Wp*C2, D2)   fb1_ref:(1, D2)        (rows pre-permuted to HWC order)
    # fw2_ref:(D2, NCLS)       fb2_ref:(1, NCLS)
    # o_ref:  (1, B, NCLS)
    B, H, W = x_ref.shape
    C1 = w1_ref.shape[-1]
    C2 = w2_ref.shape[-1]
    Ho1, Wo1 = H - 2, W - 2
    Ho2, Wo2 = Ho1 - 2, Wo1 - 2
    Hp, Wp = Ho2 // 2, Wo2 // 2
    M2 = B * Ho2 * Wo2

    # ---- conv1 (1->C1, 3x3, VALID) + ReLU.  Tiny (K=9): VPU broadcast taps,
    # cost hides under the MXU matmuls below.  Kept f32 (no bf16 VPU on v5e).
    x = x_ref[...]
    w1 = w1_ref[...]
    acc1 = jnp.zeros((B, Ho1, Wo1, C1), jnp.float32) + b1_ref[0, :]
    for dh in range(3):
        for dw in range(3):
            acc1 = acc1 + x[:, dh:dh + Ho1, dw:dw + Wo1][..., None] * w1[dh, dw, :]
    h1 = jnp.maximum(acc1, 0.0)                       # (B, Ho1, Wo1, C1)

    # ---- conv2 (C1->C2, 3x3, VALID) + ReLU as a single im2col matmul, K = 9*C1.
    cols = [h1[:, dh:dh + Ho2, dw:dw + Wo2, :].reshape(M2, C1)
            for dh in range(3) for dw in range(3)]
    patches = jnp.concatenate(cols, axis=-1).astype(jnp.bfloat16)   # (M2, 9*C1)
    h2 = jnp.dot(patches, w2_ref[...], preferred_element_type=jnp.float32)
    h2 = jnp.maximum(h2 + b2_ref[0, :], 0.0)          # (M2, C2)

    # ---- 2x2 max pool, stride 2 (same proven reshape+max pattern, B folded in).
    h2 = h2.reshape(B * Hp, 2, Wp, 2, C2)
    h2 = jnp.max(h2, axis=3)
    h2 = jnp.max(h2, axis=1)                          # (B*Hp, Wp, C2)
    hp = h2.reshape(B, Hp * Wp, C2)                   # (B, P, C2)

    # TODO(synk): nn.Dropout(0.25) / nn.Dropout(0.4) are identity (eval semantics).

    # ---- flatten to lane-dense (B, P*C2) in (H,W,C) order; fw1 rows were
    # pre-permuted on the host to match, so no transpose is needed anywhere.
    flat = jnp.concatenate([hp[:, p, :] for p in range(Hp * Wp)], axis=-1)
    flat = flat.astype(jnp.bfloat16)                  # (B, Hp*Wp*C2)

    # ---- fc1 + ReLU + fc2 (bf16 operands, f32 accumulation).
    h3 = jnp.dot(flat, fw1_ref[...], preferred_element_type=jnp.float32) + fb1_ref[0, :]
    h3 = jnp.maximum(h3, 0.0).astype(jnp.bfloat16)
    out = jnp.dot(h3, fw2_ref[...], preferred_element_type=jnp.float32) + fb2_ref[0, :]
    o_ref[0] = out.astype(o_ref.dtype)


# ---------------- host-side weight prep (done once) ----------------

def prepare_params(params, input_dim):
    """Reshape / permute / cast the PyTorch-convention weights for the kernel."""
    w1, b1, w2, b2, fw1, fb1, fw2, fb2 = params
    H, W = input_dim
    C1 = w1.shape[-1]
    C2 = w2.shape[-1]
    Hp, Wp = (H - 4) // 2, (W - 4) // 2
    D2 = fw1.shape[-1]
    # conv2 weight (3,3,C1,C2) -> (9*C1, C2) matching the im2col column order.
    w2m = w2.reshape(9 * C1, C2).astype(jnp.bfloat16)
    # fc1 rows: PyTorch (C,H,W) flatten order -> kernel (H,W,C) flatten order.
    fw1p = jnp.transpose(fw1.reshape(C2, Hp, Wp, D2), (1, 2, 0, 3))
    fw1p = fw1p.reshape(Hp * Wp * C2, D2).astype(jnp.bfloat16)
    return (w1.astype(jnp.float32), b1.astype(jnp.float32),
            w2m, b2.astype(jnp.float32),
            fw1p, fb1.astype(jnp.float32),
            fw2.astype(jnp.bfloat16), fb2.astype(jnp.float32))


def _pick_block_b(n_images):
    if n_images <= 1:
        return 1
    # Keep >=2 grid steps (feeds both v7x TensorCores); cap at 8 images/step so
    # per-step working set stays tiny on every generation.
    return max(1, min(8, n_images // 2))


# ---------------- wrapper ----------------

def lenet_forward(x_nchw, kparams, *, block_b=None):
    w1, b1, w2m, b2, fw1p, fb1, fw2, fb2 = kparams
    N, Cin, H, W = x_nchw.shape
    assert Cin == 1
    assert (H - 4) % 2 == 0 and (W - 4) % 2 == 0, "pooling needs even (H-4),(W-4)"
    C1 = w1.shape[-1]
    C2 = w2m.shape[-1]
    Hp, Wp = (H - 4) // 2, (W - 4) // 2
    D1, D2 = fw1p.shape
    NCLS = fw2.shape[-1]
    assert D1 == C2 * Hp * Wp

    if block_b is None:
        block_b = _pick_block_b(N)
    x = x_nchw[:, 0, :, :]                                  # (N, H, W)
    n_pad = (-N) % block_b
    if n_pad:
        x = jnp.concatenate([x, jnp.zeros((n_pad, H, W), x.dtype)], axis=0)
    Np = x.shape[0]
    n_blocks = Np // block_b

    out3 = pl.pallas_call(
        lenet_kernel,
        out_shape=jax.ShapeDtypeStruct((n_blocks, block_b, NCLS), jnp.float32),
        grid=(n_blocks,),
        in_specs=[
            pl.BlockSpec((block_b, H, W), lambda n: (n, 0, 0)),
            pl.BlockSpec((3, 3, C1), lambda n: (0, 0, 0)),
            pl.BlockSpec((1, C1), lambda n: (0, 0)),
            pl.BlockSpec((9 * C1, C2), lambda n: (0, 0)),
            pl.BlockSpec((1, C2), lambda n: (0, 0)),
            pl.BlockSpec((D1, D2), lambda n: (0, 0)),
            pl.BlockSpec((1, D2), lambda n: (0, 0)),
            pl.BlockSpec((D2, NCLS), lambda n: (0, 0)),
            pl.BlockSpec((1, NCLS), lambda n: (0, 0)),
        ],
        out_specs=pl.BlockSpec((1, block_b, NCLS), lambda n: (n, 0, 0)),
        compiler_params=pltpu.CompilerParams(dimension_semantics=("parallel",)),
    )(x, w1, b1, w2m, b2, fw1p, fb1, fw2, fb2)
    return out3.reshape(Np, NCLS)[:N]


# ---------------- main ----------------

if __name__ == "__main__":
    key = jax.random.PRNGKey(0)
    N, H, W = 2, 16, 16                 # input_dim = (16, 16), single channel
    C1, C2, D2, NCLS = 32, 64, 128, 10
    Hp, Wp = (H - 4) // 2, (W - 4) // 2
    D1 = C2 * Hp * Wp                   # d1 = c2 * prod((input_dim - 4) // 2)

    ks = jax.random.split(key, 9)
    s = 0.05
    w1 = (s * jax.random.normal(ks[0], (3, 3, C1))).astype(jnp.float32)       # HWIO, I=1
    b1 = (s * jax.random.normal(ks[1], (1, C1))).astype(jnp.float32)
    w2 = (s * jax.random.normal(ks[2], (3, 3, C1, C2))).astype(jnp.float32)   # HWIO
    b2 = (s * jax.random.normal(ks[3], (1, C2))).astype(jnp.float32)
    fw1 = (s * jax.random.normal(ks[4], (D1, D2))).astype(jnp.float32)        # rows in CHW order
    fb1 = (s * jax.random.normal(ks[5], (1, D2))).astype(jnp.float32)
    fw2 = (s * jax.random.normal(ks[6], (D2, NCLS))).astype(jnp.float32)
    fb2 = (s * jax.random.normal(ks[7], (1, NCLS))).astype(jnp.float32)
    x = jax.random.normal(ks[8], (N, 1, H, W), dtype=jnp.float32)             # NCHW

    params = (w1, b1, w2, b2, fw1, fb1, fw2, fb2)
    kparams = prepare_params(params, (H, W))              # one-time host-side prep

    fwd = jax.jit(lenet_forward)
    out = jax.block_until_ready(fwd(x, kparams))
    assert out.shape == (N, NCLS)

    # Pure-JAX f32 reference (weights dequantized from the same bf16 values the
    # kernel uses, so only activation-side bf16 rounding differs).
    w2q = w2.astype(jnp.bfloat16).astype(jnp.float32)
    fw1q = fw1.astype(jnp.bfloat16).astype(jnp.float32)
    fw2q = fw2.astype(jnp.bfloat16).astype(jnp.float32)
    dn = ("NHWC", "HWIO", "NHWC")
    xh = jnp.transpose(x, (0, 2, 3, 1))
    r1 = jax.lax.conv_general_dilated(xh, w1.reshape(3, 3, 1, C1), (1, 1),
                                      "VALID", dimension_numbers=dn) + b1[0]
    r1 = jnp.maximum(r1, 0.0)
    r2 = jax.lax.conv_general_dilated(r1, w2q, (1, 1), "VALID",
                                      dimension_numbers=dn) + b2[0]
    r2 = jnp.maximum(r2, 0.0)
    rp = jax.lax.reduce_window(r2, -jnp.inf, jax.lax.max,
                               (1, 2, 2, 1), (1, 2, 2, 1), "VALID")
    rf = jnp.transpose(rp, (0, 3, 1, 2)).reshape(N, -1)   # PyTorch (C,H,W) flatten
    ref = jnp.maximum(rf @ fw1q + fb1[0], 0.0) @ fw2q + fb2[0]

    np.testing.assert_allclose(np.asarray(out), np.asarray(ref),
                               rtol=5e-2, atol=2e-2)
    print("KERNEL_OK")
</pallas_src>

<mosaic_0001>
module attributes {stable_mosaic.version = 11 : i64} {
  func.func @lenet_kernel(%arg0: i32, %arg1: memref<1x16x16xf32, #tpu.memory_space<vmem>>, %arg2: memref<3x3x32xf32, #tpu.memory_space<vmem>>, %arg3: memref<1x32xf32, #tpu.memory_space<vmem>>, %arg4: memref<288x64xbf16, #tpu.memory_space<vmem>>, %arg5: memref<1x64xf32, #tpu.memory_space<vmem>>, %arg6: memref<2304x128xbf16, #tpu.memory_space<vmem>>, %arg7: memref<1x128xf32, #tpu.memory_space<vmem>>, %arg8: memref<128x10xbf16, #tpu.memory_space<vmem>>, %arg9: memref<1x10xf32, #tpu.memory_space<vmem>>, %arg10: memref<1x1x10xf32, #tpu.memory_space<vmem>>) attributes {dimension_semantics = [#tpu.dimension_semantics<parallel>], iteration_bounds = array<i64: 2>, scalar_prefetch = 0 : i64, scratch_operands = 0 : i64, tpu.core_type = #tpu.core_type<tc>, window_params = [{transform_indices = @transform_0, window_bounds = array<i64: 1, 16, 16>}, {pipeline_mode = #tpu.pipeline_mode<synchronous>, transform_indices = @transform_1, window_bounds = array<i64: 3, 3, 32>}, {pipeline_mode = #tpu.pipeline_mode<synchronous>, transform_indices = @transform_2, window_bounds = array<i64: 1, 32>}, {pipeline_mode = #tpu.pipeline_mode<synchronous>, transform_indices = @transform_3, window_bounds = array<i64: 288, 64>}, {pipeline_mode = #tpu.pipeline_mode<synchronous>, transform_indices = @transform_4, window_bounds = array<i64: 1, 64>}, {pipeline_mode = #tpu.pipeline_mode<synchronous>, transform_indices = @transform_5, window_bounds = array<i64: 2304, 128>}, {pipeline_mode = #tpu.pipeline_mode<synchronous>, transform_indices = @transform_6, window_bounds = array<i64: 1, 128>}, {pipeline_mode = #tpu.pipeline_mode<synchronous>, transform_indices = @transform_7, window_bounds = array<i64: 128, 10>}, {pipeline_mode = #tpu.pipeline_mode<synchronous>, transform_indices = @transform_8, window_bounds = array<i64: 1, 10>}, {transform_indices = @transform_9, window_bounds = array<i64: 1, 1, 10>}]} {
    %c0 = arith.constant 0 : index
    %c0_0 = arith.constant 0 : index
    %c0_1 = arith.constant 0 : index
    %0 = vector.load %arg1[%c0, %c0_0, %c0_1] : memref<1x16x16xf32, #tpu.memory_space<vmem>>, vector<1x16x16xf32>
    %c0_2 = arith.constant 0 : index
    %c0_3 = arith.constant 0 : index
    %c0_4 = arith.constant 0 : index
    %1 = vector.load %arg2[%c0_2, %c0_3, %c0_4] : memref<3x3x32xf32, #tpu.memory_space<vmem>>, vector<3x3x32xf32>
    %cst = arith.constant 0.000000e+00 : f32
    %2 = vector.broadcast %cst : f32 to vector<1x14x14x32xf32>
    %c0_5 = arith.constant 0 : index
    %c0_6 = arith.constant 0 : index
    %3 = vector.load %arg3[%c0_5, %c0_6] : memref<1x32xf32, #tpu.memory_space<vmem>>, vector<1x32xf32>
    %4 = vector.shape_cast %3 : vector<1x32xf32> to vector<32xf32>
    %5 = vector.shape_cast %4 : vector<32xf32> to vector<1x1x1x32xf32>
    %6 = vector.broadcast %5 : vector<1x1x1x32xf32> to vector<1x14x14x32xf32>
    %7 = arith.addf %2, %6 : vector<1x14x14x32xf32>
    %8 = vector.extract_strided_slice %0 {offsets = [0, 0, 0], sizes = [1, 14, 14], strides = [1, 1, 1]} : vector<1x16x16xf32> to vector<1x14x14xf32>
    %9 = vector.shape_cast %8 : vector<1x14x14xf32> to vector<1x14x14x1xf32>
    %10 = vector.extract_strided_slice %1 {offsets = [0, 0, 0], sizes = [1, 1, 32], strides = [1, 1, 1]} : vector<3x3x32xf32> to vector<1x1x32xf32>
    %11 = vector.shape_cast %10 : vector<1x1x32xf32> to vector<32xf32>
    %12 = vector.shape_cast %11 : vector<32xf32> to vector<1x1x1x32xf32>
    %13 = vector.broadcast %9 : vector<1x14x14x1xf32> to vector<1x14x14x32xf32>
    %14 = vector.broadcast %12 : vector<1x1x1x32xf32> to vector<1x14x14x32xf32>
    %15 = arith.mulf %13, %14 : vector<1x14x14x32xf32>
    %16 = arith.addf %7, %15 : vector<1x14x14x32xf32>
    %17 = vector.extract_strided_slice %0 {offsets = [0, 0, 1], sizes = [1, 14, 14], strides = [1, 1, 1]} : vector<1x16x16xf32> to vector<1x14x14xf32>
    %18 = vector.shape_cast %17 : vector<1x14x14xf32> to vector<1x14x14x1xf32>
    %19 = vector.extract_strided_slice %1 {offsets = [0, 1, 0], sizes = [1, 1, 32], strides = [1, 1, 1]} : vector<3x3x32xf32> to vector<1x1x32xf32>
    %20 = vector.shape_cast %19 : vector<1x1x32xf32> to vector<32xf32>
    %21 = vector.shape_cast %20 : vector<32xf32> to vector<1x1x1x32xf32>
    %22 = vector.broadcast %18 : vector<1x14x14x1xf32> to vector<1x14x14x32xf32>
    %23 = vector.broadcast %21 : vector<1x1x1x32xf32> to vector<1x14x14x32xf32>
    %24 = arith.mulf %22, %23 : vector<1x14x14x32xf32>
    %25 = arith.addf %16, %24 : vector<1x14x14x32xf32>
    %26 = vector.extract_strided_slice %0 {offsets = [0, 0, 2], sizes = [1, 14, 14], strides = [1, 1, 1]} : vector<1x16x16xf32> to vector<1x14x14xf32>
    %27 = vector.shape_cast %26 : vector<1x14x14xf32> to vector<1x14x14x1xf32>
    %28 = vector.extract_strided_slice %1 {offsets = [0, 2, 0], sizes = [1, 1, 32], strides = [1, 1, 1]} : vector<3x3x32xf32> to vector<1x1x32xf32>
    %29 = vector.shape_cast %28 : vector<1x1x32xf32> to vector<32xf32>
    %30 = vector.shape_cast %29 : vector<32xf32> to vector<1x1x1x32xf32>
    %31 = vector.broadcast %27 : vector<1x14x14x1xf32> to vector<1x14x14x32xf32>
    %32 = vector.broadcast %30 : vector<1x1x1x32xf32> to vector<1x14x14x32xf32>
    %33 = arith.mulf %31, %32 : vector<1x14x14x32xf32>
    %34 = arith.addf %25, %33 : vector<1x14x14x32xf32>
    %35 = vector.extract_strided_slice %0 {offsets = [0, 1, 0], sizes = [1, 14, 14], strides = [1, 1, 1]} : vector<1x16x16xf32> to vector<1x14x14xf32>
    %36 = vector.shape_cast %35 : vector<1x14x14xf32> to vector<1x14x14x1xf32>
    %37 = vector.extract_strided_slice %1 {offsets = [1, 0, 0], sizes = [1, 1, 32], strides = [1, 1, 1]} : vector<3x3x32xf32> to vector<1x1x32xf32>
    %38 = vector.shape_cast %37 : vector<1x1x32xf32> to vector<32xf32>
    %39 = vector.shape_cast %38 : vector<32xf32> to vector<1x1x1x32xf32>
    %40 = vector.broadcast %36 : vector<1x14x14x1xf32> to vector<1x14x14x32xf32>
    %41 = vector.broadcast %39 : vector<1x1x1x32xf32> to vector<1x14x14x32xf32>
    %42 = arith.mulf %40, %41 : vector<1x14x14x32xf32>
    %43 = arith.addf %34, %42 : vector<1x14x14x32xf32>
    %44 = vector.extract_strided_slice %0 {offsets = [0, 1, 1], sizes = [1, 14, 14], strides = [1, 1, 1]} : vector<1x16x16xf32> to vector<1x14x14xf32>
    %45 = vector.shape_cast %44 : vector<1x14x14xf32> to vector<1x14x14x1xf32>
    %46 = vector.extract_strided_slice %1 {offsets = [1, 1, 0], sizes = [1, 1, 32], strides = [1, 1, 1]} : vector<3x3x32xf32> to vector<1x1x32xf32>
    %47 = vector.shape_cast %46 : vector<1x1x32xf32> to vector<32xf32>
    %48 = vector.shape_cast %47 : vector<32xf32> to vector<1x1x1x32xf32>
    %49 = vector.broadcast %45 : vector<1x14x14x1xf32> to vector<1x14x14x32xf32>
    %50 = vector.broadcast %48 : vector<1x1x1x32xf32> to vector<1x14x14x32xf32>
    %51 = arith.mulf %49, %50 : vector<1x14x14x32xf32>
    %52 = arith.addf %43, %51 : vector<1x14x14x32xf32>
    %53 = vector.extract_strided_slice %0 {offsets = [0, 1, 2], sizes = [1, 14, 14], strides = [1, 1, 1]} : vector<1x16x16xf32> to vector<1x14x14xf32>
    %54 = vector.shape_cast %53 : vector<1x14x14xf32> to vector<1x14x14x1xf32>
    %55 = vector.extract_strided_slice %1 {offsets = [1, 2, 0], sizes = [1, 1, 32], strides = [1, 1, 1]} : vector<3x3x32xf32> to vector<1x1x32xf32>
    %56 = vector.shape_cast %55 : vector<1x1x32xf32> to vector<32xf32>
    %57 = vector.shape_cast %56 : vector<32xf32> to vector<1x1x1x32xf32>
    %58 = vector.broadcast %54 : vector<1x14x14x1xf32> to vector<1x14x14x32xf32>
    %59 = vector.broadcast %57 : vector<1x1x1x32xf32> to vector<1x14x14x32xf32>
    %60 = arith.mulf %58, %59 : vector<1x14x14x32xf32>
    %61 = arith.addf %52, %60 : vector<1x14x14x32xf32>
    %62 = vector.extract_strided_slice %0 {offsets = [0, 2, 0], sizes = [1, 14, 14], strides = [1, 1, 1]} : vector<1x16x16xf32> to vector<1x14x14xf32>
    %63 = vector.shape_cast %62 : vector<1x14x14xf32> to vector<1x14x14x1xf32>
    %64 = vector.extract_strided_slice %1 {offsets = [2, 0, 0], sizes = [1, 1, 32], strides = [1, 1, 1]} : vector<3x3x32xf32> to vector<1x1x32xf32>
    %65 = vector.shape_cast %64 : vector<1x1x32xf32> to vector<32xf32>
    %66 = vector.shape_cast %65 : vector<32xf32> to vector<1x1x1x32xf32>
    %67 = vector.broadcast %63 : vector<1x14x14x1xf32> to vector<1x14x14x32xf32>
    %68 = vector.broadcast %66 : vector<1x1x1x32xf32> to vector<1x14x14x32xf32>
    %69 = arith.mulf %67, %68 : vector<1x14x14x32xf32>
    %70 = arith.addf %61, %69 : vector<1x14x14x32xf32>
    %71 = vector.extract_strided_slice %0 {offsets = [0, 2, 1], sizes = [1, 14, 14], strides = [1, 1, 1]} : vector<1x16x16xf32> to vector<1x14x14xf32>
    %72 = vector.shape_cast %71 : vector<1x14x14xf32> to vector<1x14x14x1xf32>
    %73 = vector.extract_strided_slice %1 {offsets = [2, 1, 0], sizes = [1, 1, 32], strides = [1, 1, 1]} : vector<3x3x32xf32> to vector<1x1x32xf32>
    %74 = vector.shape_cast %73 : vector<1x1x32xf32> to vector<32xf32>
    %75 = vector.shape_cast %74 : vector<32xf32> to vector<1x1x1x32xf32>
    %76 = vector.broadcast %72 : vector<1x14x14x1xf32> to vector<1x14x14x32xf32>
    %77 = vector.broadcast %75 : vector<1x1x1x32xf32> to vector<1x14x14x32xf32>
    %78 = arith.mulf %76, %77 : vector<1x14x14x32xf32>
    %79 = arith.addf %70, %78 : vector<1x14x14x32xf32>
    %80 = vector.extract_strided_slice %0 {offsets = [0, 2, 2], sizes = [1, 14, 14], strides = [1, 1, 1]} : vector<1x16x16xf32> to vector<1x14x14xf32>
    %81 = vector.shape_cast %80 : vector<1x14x14xf32> to vector<1x14x14x1xf32>
    %82 = vector.extract_strided_slice %1 {offsets = [2, 2, 0], sizes = [1, 1, 32], strides = [1, 1, 1]} : vector<3x3x32xf32> to vector<1x1x32xf32>
    %83 = vector.shape_cast %82 : vector<1x1x32xf32> to vector<32xf32>
    %84 = vector.shape_cast %83 : vector<32xf32> to vector<1x1x1x32xf32>
    %85 = vector.broadcast %81 : vector<1x14x14x1xf32> to vector<1x14x14x32xf32>
    %86 = vector.broadcast %84 : vector<1x1x1x32xf32> to vector<1x14x14x32xf32>
    %87 = arith.mulf %85, %86 : vector<1x14x14x32xf32>
    %88 = arith.addf %79, %87 : vector<1x14x14x32xf32>
    %cst_7 = arith.constant 0.000000e+00 : f32
    %89 = vector.broadcast %cst_7 : f32 to vector<1x14x14x32xf32>
    %90 = arith.maximumf %88, %89 : vector<1x14x14x32xf32>
    %91 = vector.extract_strided_slice %90 {offsets = [0, 0, 0, 0], sizes = [1, 12, 12, 32], strides = [1, 1, 1, 1]} : vector<1x14x14x32xf32> to vector<1x12x12x32xf32>
    %92 = vector.shape_cast %91 : vector<1x12x12x32xf32> to vector<144x32xf32>
    %93 = vector.extract_strided_slice %90 {offsets = [0, 0, 1, 0], sizes = [1, 12, 12, 32], strides = [1, 1, 1, 1]} : vector<1x14x14x32xf32> to vector<1x12x12x32xf32>
    %94 = vector.shape_cast %93 : vector<1x12x12x32xf32> to vector<144x32xf32>
    %95 = vector.extract_strided_slice %90 {offsets = [0, 0, 2, 0], sizes = [1, 12, 12, 32], strides = [1, 1, 1, 1]} : vector<1x14x14x32xf32> to vector<1x12x12x32xf32>
    %96 = vector.shape_cast %95 : vector<1x12x12x32xf32> to vector<144x32xf32>
    %97 = vector.extract_strided_slice %90 {offsets = [0, 1, 0, 0], sizes = [1, 12, 12, 32], strides = [1, 1, 1, 1]} : vector<1x14x14x32xf32> to vector<1x12x12x32xf32>
    %98 = vector.shape_cast %97 : vector<1x12x12x32xf32> to vector<144x32xf32>
    %99 = vector.extract_strided_slice %90 {offsets = [0, 1, 1, 0], sizes = [1, 12, 12, 32], strides = [1, 1, 1, 1]} : vector<1x14x14x32xf32> to vector<1x12x12x32xf32>
    %100 = vector.shape_cast %99 : vector<1x12x12x32xf32> to vector<144x32xf32>
    %101 = vector.extract_strided_slice %90 {offsets = [0, 1, 2, 0], sizes = [1, 12, 12, 32], strides = [1, 1, 1, 1]} : vector<1x14x14x32xf32> to vector<1x12x12x32xf32>
    %102 = vector.shape_cast %101 : vector<1x12x12x32xf32> to vector<144x32xf32>
    %103 = vector.extract_strided_slice %90 {offsets = [0, 2, 0, 0], sizes = [1, 12, 12, 32], strides = [1, 1, 1, 1]} : vector<1x14x14x32xf32> to vector<1x12x12x32xf32>
    %104 = vector.shape_cast %103 : vector<1x12x12x32xf32> to vector<144x32xf32>
    %105 = vector.extract_strided_slice %90 {offsets = [0, 2, 1, 0], sizes = [1, 12, 12, 32], strides = [1, 1, 1, 1]} : vector<1x14x14x32xf32> to vector<1x12x12x32xf32>
    %106 = vector.shape_cast %105 : vector<1x12x12x32xf32> to vector<144x32xf32>
    %107 = vector.extract_strided_slice %90 {offsets = [0, 2, 2, 0], sizes = [1, 12, 12, 32], strides = [1, 1, 1, 1]} : vector<1x14x14x32xf32> to vector<1x12x12x32xf32>
    %108 = vector.shape_cast %107 : vector<1x12x12x32xf32> to vector<144x32xf32>
    %109 = tpu.concatenate %92, %94, %96, %98, %100, %102, %104, %106, %108 in 1 : vector<144x32xf32>, vector<144x32xf32>, vector<144x32xf32>, vector<144x32xf32>, vector<144x32xf32>, vector<144x32xf32>, vector<144x32xf32>, vector<144x32xf32>, vector<144x32xf32> -> vector<144x288xf32>
    %110 = arith.truncf %109 : vector<144x288xf32> to vector<144x288xbf16>
    %c0_8 = arith.constant 0 : index
    %c0_9 = arith.constant 0 : index
    %111 = vector.load %arg4[%c0_8, %c0_9] : memref<288x64xbf16, #tpu.memory_space<vmem>>, vector<288x64xbf16>
    %cst_10 = arith.constant dense<0.000000e+00> : vector<144x64xf32>
    %112 = tpu.matmul %110, %111, %cst_10 {dimension_numbers = #tpu.dot_dimension_numbers<[1], [0], [0], [1], [0, 0, 1, 1], [], []>} : vector<144x288xbf16>, vector<288x64xbf16>, vector<144x64xf32> -> vector<144x64xf32>
    %c0_11 = arith.constant 0 : index
    %c0_12 = arith.constant 0 : index
    %113 = vector.load %arg5[%c0_11, %c0_12] : memref<1x64xf32, #tpu.memory_space<vmem>>, vector<1x64xf32>
    %114 = vector.shape_cast %113 : vector<1x64xf32> to vector<64xf32>
    %115 = vector.shape_cast %114 : vector<64xf32> to vector<1x64xf32>
    %116 = vector.broadcast %115 : vector<1x64xf32> to vector<144x64xf32>
    %117 = arith.addf %112, %116 : vector<144x64xf32>
    %cst_13 = arith.constant 0.000000e+00 : f32
    %118 = vector.broadcast %cst_13 : f32 to vector<144x64xf32>
    %119 = arith.maximumf %117, %118 : vector<144x64xf32>
    %120 = vector.shape_cast %119 : vector<144x64xf32> to vector<6x2x6x2x64xf32>
    %cst_14 = arith.constant dense<0xFF800000> : vector<6x2x6x64xf32>
    %121 = vector.multi_reduction <maximumf>, %120, %cst_14 [3] : vector<6x2x6x2x64xf32> to vector<6x2x6x64xf32>
    %cst_15 = arith.constant dense<0xFF800000> : vector<6x6x64xf32>
    %122 = vector.multi_reduction <maximumf>, %121, %cst_15 [1] : vector<6x2x6x64xf32> to vector<6x6x64xf32>
    %123 = vector.shape_cast %122 : vector<6x6x64xf32> to vector<1x36x64xf32>
    %124 = vector.extract_strided_slice %123 {offsets = [0, 0, 0], sizes = [1, 1, 64], strides = [1, 1, 1]} : vector<1x36x64xf32> to vector<1x1x64xf32>
    %125 = vector.shape_cast %124 : vector<1x1x64xf32> to vector<1x64xf32>
    %126 = vector.extract_strided_slice %123 {offsets = [0, 1, 0], sizes = [1, 1, 64], strides = [1, 1, 1]} : vector<1x36x64xf32> to vector<1x1x64xf32>
    %127 = vector.shape_cast %126 : vector<1x1x64xf32> to vector<1x64xf32>
    %128 = vector.extract_strided_slice %123 {offsets = [0, 2, 0], sizes = [1, 1, 64], strides = [1, 1, 1]} : vector<1x36x64xf32> to vector<1x1x64xf32>
    %129 = vector.shape_cast %128 : vector<1x1x64xf32> to vector<1x64xf32>
    %130 = vector.extract_strided_slice %123 {offsets = [0, 3, 0], sizes = [1, 1, 64], strides = [1, 1, 1]} : vector<1x36x64xf32> to vector<1x1x64xf32>
    %131 = vector.shape_cast %130 : vector<1x1x64xf32> to vector<1x64xf32>
    %132 = vector.extract_strided_slice %123 {offsets = [0, 4, 0], sizes = [1, 1, 64], strides = [1, 1, 1]} : vector<1x36x64xf32> to vector<1x1x64xf32>
    %133 = vector.shape_cast %132 : vector<1x1x64xf32> to vector<1x64xf32>
    %134 = vector.extract_strided_slice %123 {offsets = [0, 5, 0], sizes = [1, 1, 64], strides = [1, 1, 1]} : vector<1x36x64xf32> to vector<1x1x64xf32>
    %135 = vector.shape_cast %134 : vector<1x1x64xf32> to vector<1x64xf32>
    %136 = vector.extract_strided_slice %123 {offsets = [0, 6, 0], sizes = [1, 1, 64], strides = [1, 1, 1]} : vector<1x36x64xf32> to vector<1x1x64xf32>
    %137 = vector.shape_cast %136 : vector<1x1x64xf32> to vector<1x64xf32>
    %138 = vector.extract_strided_slice %123 {offsets = [0, 7, 0], sizes = [1, 1, 64], strides = [1, 1, 1]} : vector<1x36x64xf32> to vector<1x1x64xf32>
    %139 = vector.shape_cast %138 : vector<1x1x64xf32> to vector<1x64xf32>
    %140 = vector.extract_strided_slice %123 {offsets = [0, 8, 0], sizes = [1, 1, 64], strides = [1, 1, 1]} : vector<1x36x64xf32> to vector<1x1x64xf32>
    %141 = vector.shape_cast %140 : vector<1x1x64xf32> to vector<1x64xf32>
    %142 = vector.extract_strided_slice %123 {offsets = [0, 9, 0], sizes = [1, 1, 64], strides = [1, 1, 1]} : vector<1x36x64xf32> to vector<1x1x64xf32>
    %143 = vector.shape_cast %142 : vector<1x1x64xf32> to vector<1x64xf32>
    %144 = vector.extract_strided_slice %123 {offsets = [0, 10, 0], sizes = [1, 1, 64], strides = [1, 1, 1]} : vector<1x36x64xf32> to vector<1x1x64xf32>
    %145 = vector.shape_cast %144 : vector<1x1x64xf32> to vector<1x64xf32>
    %146 = vector.extract_strided_slice %123 {offsets = [0, 11, 0], sizes = [1, 1, 64], strides = [1, 1, 1]} : vector<1x36x64xf32> to vector<1x1x64xf32>
    %147 = vector.shape_cast %146 : vector<1x1x64xf32> to vector<1x64xf32>
    %148 = vector.extract_strided_slice %123 {offsets = [0, 12, 0], sizes = [1, 1, 64], strides = [1, 1, 1]} : vector<1x36x64xf32> to vector<1x1x64xf32>
    %149 = vector.shape_cast %148 : vector<1x1x64xf32> to vector<1x64xf32>
    %150 = vector.extract_strided_slice %123 {offsets = [0, 13, 0], sizes = [1, 1, 64], strides = [1, 1, 1]} : vector<1x36x64xf32> to vector<1x1x64xf32>
    %151 = vector.shape_cast %150 : vector<1x1x64xf32> to vector<1x64xf32>
    %152 = vector.extract_strided_slice %123 {offsets = [0, 14, 0], sizes = [1, 1, 64], strides = [1, 1, 1]} : vector<1x36x64xf32> to vector<1x1x64xf32>
    %153 = vector.shape_cast %152 : vector<1x1x64xf32> to vector<1x64xf32>
    %154 = vector.extract_strided_slice %123 {offsets = [0, 15, 0], sizes = [1, 1, 64], strides = [1, 1, 1]} : vector<1x36x64xf32> to vector<1x1x64xf32>
    %155 = vector.shape_cast %154 : vector<1x1x64xf32> to vector<1x64xf32>
    %156 = vector.extract_strided_slice %123 {offsets = [0, 16, 0], sizes = [1, 1, 64], strides = [1, 1, 1]} : vector<1x36x64xf32> to vector<1x1x64xf32>
    %157 = vector.shape_cast %156 : vector<1x1x64xf32> to vector<1x64xf32>
    %158 = vector.extract_strided_slice %123 {offsets = [0, 17, 0], sizes = [1, 1, 64], strides = [1, 1, 1]} : vector<1x36x64xf32> to vector<1x1x64xf32>
    %159 = vector.shape_cast %158 : vector<1x1x64xf32> to vector<1x64xf32>
    %160 = vector.extract_strided_slice %123 {offsets = [0, 18, 0], sizes = [1, 1, 64], strides = [1, 1, 1]} : vector<1x36x64xf32> to vector<1x1x64xf32>
    %161 = vector.shape_cast %160 : vector<1x1x64xf32> to vector<1x64xf32>
    %162 = vector.extract_strided_slice %123 {offsets = [0, 19, 0], sizes = [1, 1, 64], strides = [1, 1, 1]} : vector<1x36x64xf32> to vector<1x1x64xf32>
    %163 = vector.shape_cast %162 : vector<1x1x64xf32> to vector<1x64xf32>
    %164 = vector.extract_strided_slice %123 {offsets = [0, 20, 0], sizes = [1, 1, 64], strides = [1, 1, 1]} : vector<1x36x64xf32> to vector<1x1x64xf32>
    %165 = vector.shape_cast %164 : vector<1x1x64xf32> to vector<1x64xf32>
    %166 = vector.extract_strided_slice %123 {offsets = [0, 21, 0], sizes = [1, 1, 64], strides = [1, 1, 1]} : vector<1x36x64xf32> to vector<1x1x64xf32>
    %167 = vector.shape_cast %166 : vector<1x1x64xf32> to vector<1x64xf32>
    %168 = vector.extract_strided_slice %123 {offsets = [0, 22, 0], sizes = [1, 1, 64], strides = [1, 1, 1]} : vector<1x36x64xf32> to vector<1x1x64xf32>
    %169 = vector.shape_cast %168 : vector<1x1x64xf32> to vector<1x64xf32>
    %170 = vector.extract_strided_slice %123 {offsets = [0, 23, 0], sizes = [1, 1, 64], strides = [1, 1, 1]} : vector<1x36x64xf32> to vector<1x1x64xf32>
    %171 = vector.shape_cast %170 : vector<1x1x64xf32> to vector<1x64xf32>
    %172 = vector.extract_strided_slice %123 {offsets = [0, 24, 0], sizes = [1, 1, 64], strides = [1, 1, 1]} : vector<1x36x64xf32> to vector<1x1x64xf32>
    %173 = vector.shape_cast %172 : vector<1x1x64xf32> to vector<1x64xf32>
    %174 = vector.extract_strided_slice %123 {offsets = [0, 25, 0], sizes = [1, 1, 64], strides = [1, 1, 1]} : vector<1x36x64xf32> to vector<1x1x64xf32>
    %175 = vector.shape_cast %174 : vector<1x1x64xf32> to vector<1x64xf32>
    %176 = vector.extract_strided_slice %123 {offsets = [0, 26, 0], sizes = [1, 1, 64], strides = [1, 1, 1]} : vector<1x36x64xf32> to vector<1x1x64xf32>
    %177 = vector.shape_cast %176 : vector<1x1x64xf32> to vector<1x64xf32>
    %178 = vector.extract_strided_slice %123 {offsets = [0, 27, 0], sizes = [1, 1, 64], strides = [1, 1, 1]} : vector<1x36x64xf32> to vector<1x1x64xf32>
    %179 = vector.shape_cast %178 : vector<1x1x64xf32> to vector<1x64xf32>
    %180 = vector.extract_strided_slice %123 {offsets = [0, 28, 0], sizes = [1, 1, 64], strides = [1, 1, 1]} : vector<1x36x64xf32> to vector<1x1x64xf32>
    %181 = vector.shape_cast %180 : vector<1x1x64xf32> to vector<1x64xf32>
    %182 = vector.extract_strided_slice %123 {offsets = [0, 29, 0], sizes = [1, 1, 64], strides = [1, 1, 1]} : vector<1x36x64xf32> to vector<1x1x64xf32>
    %183 = vector.shape_cast %182 : vector<1x1x64xf32> to vector<1x64xf32>
    %184 = vector.extract_strided_slice %123 {offsets = [0, 30, 0], sizes = [1, 1, 64], strides = [1, 1, 1]} : vector<1x36x64xf32> to vector<1x1x64xf32>
    %185 = vector.shape_cast %184 : vector<1x1x64xf32> to vector<1x64xf32>
    %186 = vector.extract_strided_slice %123 {offsets = [0, 31, 0], sizes = [1, 1, 64], strides = [1, 1, 1]} : vector<1x36x64xf32> to vector<1x1x64xf32>
    %187 = vector.shape_cast %186 : vector<1x1x64xf32> to vector<1x64xf32>
    %188 = vector.extract_strided_slice %123 {offsets = [0, 32, 0], sizes = [1, 1, 64], strides = [1, 1, 1]} : vector<1x36x64xf32> to vector<1x1x64xf32>
    %189 = vector.shape_cast %188 : vector<1x1x64xf32> to vector<1x64xf32>
    %190 = vector.extract_strided_slice %123 {offsets = [0, 33, 0], sizes = [1, 1, 64], strides = [1, 1, 1]} : vector<1x36x64xf32> to vector<1x1x64xf32>
    %191 = vector.shape_cast %190 : vector<1x1x64xf32> to vector<1x64xf32>
    %192 = vector.extract_strided_slice %123 {offsets = [0, 34, 0], sizes = [1, 1, 64], strides = [1, 1, 1]} : vector<1x36x64xf32> to vector<1x1x64xf32>
    %193 = vector.shape_cast %192 : vector<1x1x64xf32> to vector<1x64xf32>
    %194 = vector.extract_strided_slice %123 {offsets = [0, 35, 0], sizes = [1, 1, 64], strides = [1, 1, 1]} : vector<1x36x64xf32> to vector<1x1x64xf32>
    %195 = vector.shape_cast %194 : vector<1x1x64xf32> to vector<1x64xf32>
    %196 = tpu.concatenate %125, %127, %129, %131, %133, %135, %137, %139, %141, %143, %145, %147, %149, %151, %153, %155 in 1 : vector<1x64xf32>, vector<1x64xf32>, vector<1x64xf32>, vector<1x64xf32>, vector<1x64xf32>, vector<1x64xf32>, vector<1x64xf32>, vector<1x64xf32>, vector<1x64xf32>, vector<1x64xf32>, vector<1x64xf32>, vector<1x64xf32>, vector<1x64xf32>, vector<1x64xf32>, vector<1x64xf32>, vector<1x64xf32> -> vector<1x1024xf32>
    %197 = tpu.concatenate %157, %159, %161, %163, %165, %167, %169, %171, %173, %175, %177, %179, %181, %183, %185, %187 in 1 : vector<1x64xf32>, vector<1x64xf32>, vector<1x64xf32>, vector<1x64xf32>, vector<1x64xf32>, vector<1x64xf32>, vector<1x64xf32>, vector<1x64xf32>, vector<1x64xf32>, vector<1x64xf32>, vector<1x64xf32>, vector<1x64xf32>, vector<1x64xf32>, vector<1x64xf32>, vector<1x64xf32>, vector<1x64xf32> -> vector<1x1024xf32>
    %198 = tpu.concatenate %189, %191, %193, %195 in 1 : vector<1x64xf32>, vector<1x64xf32>, vector<1x64xf32>, vector<1x64xf32> -> vector<1x256xf32>
    %199 = tpu.concatenate %196, %197, %198 in 1 : vector<1x1024xf32>, vector<1x1024xf32>, vector<1x256xf32> -> vector<1x2304xf32>
    %200 = arith.truncf %199 : vector<1x2304xf32> to vector<1x2304xbf16>
    %c0_16 = arith.constant 0 : index
    %c0_17 = arith.constant 0 : index
    %201 = vector.load %arg6[%c0_16, %c0_17] : memref<2304x128xbf16, #tpu.memory_space<vmem>>, vector<2304x128xbf16>
    %cst_18 = arith.constant dense<0.000000e+00> : vector<1x128xf32>
    %202 = tpu.matmul %200, %201, %cst_18 {dimension_numbers = #tpu.dot_dimension_numbers<[1], [0], [0], [1], [0, 0, 1, 1], [], []>} : vector<1x2304xbf16>, vector<2304x128xbf16>, vector<1x128xf32> -> vector<1x128xf32>
    %c0_19 = arith.constant 0 : index
    %c0_20 = arith.constant 0 : index
    %203 = vector.load %arg7[%c0_19, %c0_20] : memref<1x128xf32, #tpu.memory_space<vmem>>, vector<1x128xf32>
    %204 = vector.shape_cast %203 : vector<1x128xf32> to vector<128xf32>
    %205 = vector.shape_cast %204 : vector<128xf32> to vector<1x128xf32>
    %206 = arith.addf %202, %205 : vector<1x128xf32>
    %cst_21 = arith.constant 0.000000e+00 : f32
    %207 = vector.broadcast %cst_21 : f32 to vector<1x128xf32>
    %208 = arith.maximumf %206, %207 : vector<1x128xf32>
    %209 = arith.truncf %208 : vector<1x128xf32> to vector<1x128xbf16>
    %c0_22 = arith.constant 0 : index
    %c0_23 = arith.constant 0 : index
    %210 = vector.load %arg8[%c0_22, %c0_23] : memref<128x10xbf16, #tpu.memory_space<vmem>>, vector<128x10xbf16>
    %cst_24 = arith.constant dense<0.000000e+00> : vector<1x10xf32>
    %211 = tpu.matmul %209, %210, %cst_24 {dimension_numbers = #tpu.dot_dimension_numbers<[1], [0], [0], [1], [0, 0, 1, 1], [], []>} : vector<1x128xbf16>, vector<128x10xbf16>, vector<1x10xf32> -> vector<1x10xf32>
    %c0_25 = arith.constant 0 : index
    %c0_26 = arith.constant 0 : index
    %212 = vector.load %arg9[%c0_25, %c0_26] : memref<1x10xf32, #tpu.memory_space<vmem>>, vector<1x10xf32>
    %213 = vector.shape_cast %212 : vector<1x10xf32> to vector<10xf32>
    %214 = vector.shape_cast %213 : vector<10xf32> to vector<1x10xf32>
    %215 = arith.addf %211, %214 : vector<1x10xf32>
    %c0_27 = arith.constant 0 : index
    %c0_28 = arith.constant 0 : index
    %c0_29 = arith.constant 0 : index
    %216 = vector.load %arg10[%c0_27, %c0_28, %c0_29] : memref<1x1x10xf32, #tpu.memory_space<vmem>>, vector<1x1x10xf32>
    %217 = vector.shape_cast %216 : vector<1x1x10xf32> to vector<1x10xf32>
    %218 = vector.shape_cast %215 : vector<1x10xf32> to vector<1x1x10xf32>
    tpu.vector_store %arg10[%c0_27, %c0_28, %c0_29], %218 {strides = array<i32>} : memref<1x1x10xf32, #tpu.memory_space<vmem>>, vector<1x1x10xf32>,
    return
  }
  func.func @transform_0(%arg0: i32) -> (i32, i32, i32) {
    %c0_i32 = arith.constant 0 : i32
    %c0_i32_0 = arith.constant 0 : i32
    %c0_i32_1 = arith.constant 0 : i32
    return %arg0, %c0_i32, %c0_i32_0 : i32, i32, i32
  }
  func.func @transform_1(%arg0: i32) -> (i32, i32, i32) {
    %c0_i32 = arith.constant 0 : i32
    %c0_i32_0 = arith.constant 0 : i32
    %c0_i32_1 = arith.constant 0 : i32
    %c0_i32_2 = arith.constant 0 : i32
    return %c0_i32, %c0_i32_0, %c0_i32_1 : i32, i32, i32
  }
  func.func @transform_2(%arg0: i32) -> (i32, i32) {
    %c0_i32 = arith.constant 0 : i32
    %c0_i32_0 = arith.constant 0 : i32
    %c0_i32_1 = arith.constant 0 : i32
    return %c0_i32, %c0_i32_0 : i32, i32
  }
  func.func @transform_3(%arg0: i32) -> (i32, i32) {
    %c0_i32 = arith.constant 0 : i32
    %c0_i32_0 = arith.constant 0 : i32
    %c0_i32_1 = arith.constant 0 : i32
    return %c0_i32, %c0_i32_0 : i32, i32
  }
  func.func @transform_4(%arg0: i32) -> (i32, i32) {
    %c0_i32 = arith.constant 0 : i32
    %c0_i32_0 = arith.constant 0 : i32
    %c0_i32_1 = arith.constant 0 : i32
    return %c0_i32, %c0_i32_0 : i32, i32
  }
  func.func @transform_5(%arg0: i32) -> (i32, i32) {
    %c0_i32 = arith.constant 0 : i32
    %c0_i32_0 = arith.constant 0 : i32
    %c0_i32_1 = arith.constant 0 : i32
    return %c0_i32, %c0_i32_0 : i32, i32
  }
  func.func @transform_6(%arg0: i32) -> (i32, i32) {
    %c0_i32 = arith.constant 0 : i32
    %c0_i32_0 = arith.constant 0 : i32
    %c0_i32_1 = arith.constant 0 : i32
    return %c0_i32, %c0_i32_0 : i32, i32
  }
  func.func @transform_7(%arg0: i32) -> (i32, i32) {
    %c0_i32 = arith.constant 0 : i32
    %c0_i32_0 = arith.constant 0 : i32
    %c0_i32_1 = arith.constant 0 : i32
    return %c0_i32, %c0_i32_0 : i32, i32
  }
  func.func @transform_8(%arg0: i32) -> (i32, i32) {
    %c0_i32 = arith.constant 0 : i32
    %c0_i32_0 = arith.constant 0 : i32
    %c0_i32_1 = arith.constant 0 : i32
    return %c0_i32, %c0_i32_0 : i32, i32
  }
  func.func @transform_9(%arg0: i32) -> (i32, i32, i32) {
    %c0_i32 = arith.constant 0 : i32
    %c0_i32_0 = arith.constant 0 : i32
    %c0_i32_1 = arith.constant 0 : i32
    return %arg0, %c0_i32, %c0_i32_0 : i32, i32, i32
  }
}

</mosaic_0001>

<llo_original>
// kernel: lenet_forward.1
$region0: #{lenet_forward.1}
  #allocation0 [shape = 'u32[]', space=smem, size = 0x4, offset = 0x4, fixed_abs, tag = 'smem constant byte address 0x4 - core index']
  #allocation1 [shape = 'u32[144,128]{1,0:T(1,128)}', space=vmem, size = 0x12000, scoped, tag = 'internal scratch']
  %s0 = inlined_call_operand.vmem [shape: f32[2,16,16], index: 0, kind: input, shape index: {}]
  %s1 = inlined_call_operand.vmem [shape: f32[3,3,32], index: 1, kind: input, shape index: {}]
  %s2 = inlined_call_operand.vmem [shape: f32[1,32], index: 2, kind: input, shape index: {}]
  %s3 = inlined_call_operand.vmem [shape: bf16[288,64], index: 3, kind: input, shape index: {}]
  %s4 = inlined_call_operand.vmem [shape: f32[1,64], index: 4, kind: input, shape index: {}]
  %s5 = inlined_call_operand.hbm [shape: bf16[2304,128], index: 5, kind: input, shape index: {}]
  %s6 = inlined_call_operand.vmem [shape: f32[1,128], index: 6, kind: input, shape index: {}]
  %s7 = inlined_call_operand.vmem [shape: bf16[128,10], index: 7, kind: input, shape index: {}]
  %s8 = inlined_call_operand.vmem [shape: f32[1,10], index: 8, kind: input, shape index: {}]
  %s9 = inlined_call_operand.hbm [shape: f32[2,1,10], index: 9, kind: output, shape index: {}]
  %s10 = sld [smem:[#allocation0]]
  $region73: #{lenet_forward.1} parent=0
    _
  %s12 = ssub.s32 1, %s10
  %s13 = scalar_select 0, %s12, %s10
  $region1: #{lenet_forward.1} parent=0
    #allocation2 [shape = 'u8[589824]{0}', space=vmem, size = 0x90000, scoped, tag = 'input window, operand 5, single buffered']
    #allocation3 [shape = 's32[2]{0}', space=sflag, size = 0x8, scoped, tag = 'scoped memory for lenet_forward.1']
    #allocation4 [shape = 's32[2]{0}', space=sflag, size = 0x8, scoped, tag = 'scoped memory for lenet_forward.1']
    #allocation5 [shape = 'u8[1024]{0}', space=vmem, size = 0x400, scoped, tag = 'output window, operand 0']
    %14 = vsyncpa [#allocation3], 0
    %15 = vsyncpa [#allocation4], 0
    %s16 = scalar_lea.sflag [#allocation4], 1
    %17 = vsyncpa %s16, 0
    loop: start=0, step=1, limit=4
    $region2: #{lenet_forward.1} parent=1 // loop_pre_header
      _
    $region3: #{lenet_forward.1} parent=1 // loop_header
      %s19 = sphi 0, %s23
      %p20 = scmp.ge.s32.totalorder %s19, 4
      %s29 = sphi 0, %s31
      %s32 = sphi 0, %s29
      %s33 = sphi 0, %s32
      %s49 = sphi 0, %s33
      %s53 = sphi 0, %s53
      %s55 = sphi 0, %s53
      %s56 = sphi 0, %s55
      %s70 = sphi 0, %s56
      %s74 = sphi 0, %s74
      %s76 = sphi 0, %s74
      %s77 = sphi 0, %s76
      %s91 = sphi 0, %s77
      %s95 = sphi 0, %s95
      %s97 = sphi 0, %s95
      %s98 = sphi 0, %s97
      %s112 = sphi 0, %s98
      %s116 = sphi 0, %s116
      %s118 = sphi 0, %s116
      %s119 = sphi 0, %s118
      %s133 = sphi 0, %s119
      %s137 = sphi 0, %s137
      %s139 = sphi 0, %s137
      %s140 = sphi 0, %s139
      %s154 = sphi 0, %s140
      %s158 = sphi 0, %s158
      %s160 = sphi 0, %s158
      %s161 = sphi 0, %s160
      %s175 = sphi 0, %s161
      %s179 = sphi 0, %s179
      %s181 = sphi 0, %s179
      %s182 = sphi 0, %s181
      %s196 = sphi 0, %s182
      %s200 = sphi 0, %s200
      %s202 = sphi 0, %s200
      %s203 = sphi 0, %s202
      %s217 = sphi 0, %s203
      %s223 = sphi 0, %s225
      %s226 = sphi 0, %s223
      %s227 = sphi 0, %s226
      %s243 = sphi 0, %s227
    $region4: #{lenet_forward.1} parent=1 // loop_header_branch
      %22 = sbr.rel (%p20) target = $region8
    $region5: #{lenet_forward.1} parent=1 // loop_body
      %s24 = ssub.s32 %s19, 1
      %s25 = ssub.s32 %s19, 2
      %s26 = sadd.s32 %s19, 1
      %s27 = ssub.s32 %s19, %s26
      %p28 = scmp.eq.s32.totalorder %s27, 0
      %s30 = sadd.s32 %s29, 1
      %s31 = scalar_select %p28, %s29, %s30
      %p34 = pneg %p28
      %p35 = scmp.eq.s32.totalorder %s19, 1
      %p36 = por %p34, %p35
      %p37 = scmp.ne.s32.totalorder %s29, %s32
      %p38 = scmp.eq.s32.totalorder %s19, 0
      %p39 = por %p37, %p38
      %p40 = scmp.ne.s32.totalorder %s29, %s32
      %p41 = scmp.eq.s32.totalorder %s24, 1
      %p42 = por %p40, %p41
      %p43 = scmp.ne.s32.totalorder %s32, %s33
      %p44 = scmp.eq.s32.totalorder %s24, 0
      %p45 = por %p43, %p44
      %p46 = scmp.ne.s32.totalorder %s32, %s33
      %p47 = scmp.eq.s32.totalorder %s25, 1
      %p48 = por %p46, %p47
      %p50 = scmp.ne.s32.totalorder %s33, %s49
      %p51 = scmp.eq.s32.totalorder %s25, 0
      %p52 = por %p50, %p51
      %s54 = sadd.s32 %s53, 1
      %p57 = scmp.eq.s32.totalorder %s19, 1
      %p58 = scmp.ne.s32.totalorder %s53, %s55
      %p59 = scmp.eq.s32.totalorder %s19, 0
      %p60 = por %p58, %p59
      %p61 = scmp.ne.s32.totalorder %s53, %s55
      %p62 = scmp.eq.s32.totalorder %s24, 1
      %p63 = por %p61, %p62
      %p64 = scmp.ne.s32.totalorder %s55, %s56
      %p65 = scmp.eq.s32.totalorder %s24, 0
      %p66 = por %p64, %p65
      %p67 = scmp.ne.s32.totalorder %s55, %s56
      %p68 = scmp.eq.s32.totalorder %s25, 1
      %p69 = por %p67, %p68
      %p71 = scmp.ne.s32.totalorder %s56, %s70
      %p72 = scmp.eq.s32.totalorder %s25, 0
      %p73 = por %p71, %p72
      %s75 = sadd.s32 %s74, 1
      %p78 = scmp.eq.s32.totalorder %s19, 1
      %p79 = scmp.ne.s32.totalorder %s74, %s76
      %p80 = scmp.eq.s32.totalorder %s19, 0
      %p81 = por %p79, %p80
      %p82 = scmp.ne.s32.totalorder %s74, %s76
      %p83 = scmp.eq.s32.totalorder %s24, 1
      %p84 = por %p82, %p83
      %p85 = scmp.ne.s32.totalorder %s76, %s77
      %p86 = scmp.eq.s32.totalorder %s24, 0
      %p87 = por %p85, %p86
      %p88 = scmp.ne.s32.totalorder %s76, %s77
      %p89 = scmp.eq.s32.totalorder %s25, 1
      %p90 = por %p88, %p89
      %p92 = scmp.ne.s32.totalorder %s77, %s91
      %p93 = scmp.eq.s32.totalorder %s25, 0
      %p94 = por %p92, %p93
      %s96 = sadd.s32 %s95, 1
      %p99 = scmp.eq.s32.totalorder %s19, 1
      %p100 = scmp.ne.s32.totalorder %s95, %s97
      %p101 = scmp.eq.s32.totalorder %s19, 0
      %p102 = por %p100, %p101
      %p103 = scmp.ne.s32.totalorder %s95, %s97
      %p104 = scmp.eq.s32.totalorder %s24, 1
      %p105 = por %p103, %p104
      %p106 = scmp.ne.s32.totalorder %s97, %s98
      %p107 = scmp.eq.s32.totalorder %s24, 0
      %p108 = por %p106, %p107
      %p109 = scmp.ne.s32.totalorder %s97, %s98
      %p110 = scmp.eq.s32.totalorder %s25, 1
      %p111 = por %p109, %p110
      %p113 = scmp.ne.s32.totalorder %s98, %s112
      %p114 = scmp.eq.s32.totalorder %s25, 0
      %p115 = por %p113, %p114
      %s117 = sadd.s32 %s116, 1
      %p120 = scmp.eq.s32.totalorder %s19, 1
      %p121 = scmp.ne.s32.totalorder %s116, %s118
      %p122 = scmp.eq.s32.totalorder %s19, 0
      %p123 = por %p121, %p122
      %p124 = scmp.ne.s32.totalorder %s116, %s118
      %p125 = scmp.eq.s32.totalorder %s24, 1
      %p126 = por %p124, %p125
      %p127 = scmp.ne.s32.totalorder %s118, %s119
      %p128 = scmp.eq.s32.totalorder %s24, 0
      %p129 = por %p127, %p128
      %p130 = scmp.ne.s32.totalorder %s118, %s119
      %p131 = scmp.eq.s32.totalorder %s25, 1
      %p132 = por %p130, %p131
      %p134 = scmp.ne.s32.totalorder %s119, %s133
      %p135 = scmp.eq.s32.totalorder %s25, 0
      %p136 = por %p134, %p135
      %s138 = sadd.s32 %s137, 1
      %p141 = scmp.eq.s32.totalorder %s19, 1
      %p142 = scmp.ne.s32.totalorder %s137, %s139
      %p143 = scmp.eq.s32.totalorder %s19, 0
      %p144 = por %p142, %p143
      %p145 = scmp.ne.s32.totalorder %s137, %s139
      %p146 = scmp.eq.s32.totalorder %s24, 1
      %p147 = por %p145, %p146
      %p148 = scmp.ne.s32.totalorder %s139, %s140
      %p149 = scmp.eq.s32.totalorder %s24, 0
      %p150 = por %p148, %p149
      %p151 = scmp.ne.s32.totalorder %s139, %s140
      %p152 = scmp.eq.s32.totalorder %s25, 1
      %p153 = por %p151, %p152
      %p155 = scmp.ne.s32.totalorder %s140, %s154
      %p156 = scmp.eq.s32.totalorder %s25, 0
      %p157 = por %p155, %p156
      %s159 = sadd.s32 %s158, 1
      %p162 = scmp.eq.s32.totalorder %s19, 1
      %p163 = scmp.ne.s32.totalorder %s158, %s160
      %p164 = scmp.eq.s32.totalorder %s19, 0
      %p165 = por %p163, %p164
      %p166 = scmp.ne.s32.totalorder %s158, %s160
      %p167 = scmp.eq.s32.totalorder %s24, 1
      %p168 = por %p166, %p167
      %p169 = scmp.ne.s32.totalorder %s160, %s161
      %p170 = scmp.eq.s32.totalorder %s24, 0
      %p171 = por %p169, %p170
      %p172 = scmp.ne.s32.totalorder %s160, %s161
      %p173 = scmp.eq.s32.totalorder %s25, 1
      %p174 = por %p172, %p173
      %p176 = scmp.ne.s32.totalorder %s161, %s175
      %p177 = scmp.eq.s32.totalorder %s25, 0
      %p178 = por %p176, %p177
      %s180 = sadd.s32 %s179, 1
      %p183 = scmp.eq.s32.totalorder %s19, 1
      %p184 = scmp.ne.s32.totalorder %s179, %s181
      %p185 = scmp.eq.s32.totalorder %s19, 0
      %p186 = por %p184, %p185
      %p187 = scmp.ne.s32.totalorder %s179, %s181
      %p188 = scmp.eq.s32.totalorder %s24, 1
      %p189 = por %p187, %p188
      %p190 = scmp.ne.s32.totalorder %s181, %s182
      %p191 = scmp.eq.s32.totalorder %s24, 0
      %p192 = por %p190, %p191
      %p193 = scmp.ne.s32.totalorder %s181, %s182
      %p194 = scmp.eq.s32.totalorder %s25, 1
      %p195 = por %p193, %p194
      %p197 = scmp.ne.s32.totalorder %s182, %s196
      %p198 = scmp.eq.s32.totalorder %s25, 0
      %p199 = por %p197, %p198
      %s201 = sadd.s32 %s200, 1
      %p204 = scmp.eq.s32.totalorder %s19, 1
      %p205 = scmp.ne.s32.totalorder %s200, %s202
      %p206 = scmp.eq.s32.totalorder %s19, 0
      %p207 = por %p205, %p206
      %p208 = scmp.ne.s32.totalorder %s200, %s202
      %p209 = scmp.eq.s32.totalorder %s24, 1
      %p210 = por %p208, %p209
      %p211 = scmp.ne.s32.totalorder %s202, %s203
      %p212 = scmp.eq.s32.totalorder %s24, 0
      %p213 = por %p211, %p212
      %p214 = scmp.ne.s32.totalorder %s202, %s203
      %p215 = scmp.eq.s32.totalorder %s25, 1
      %p216 = por %p214, %p215
      %p218 = scmp.ne.s32.totalorder %s203, %s217
      %p219 = scmp.eq.s32.totalorder %s25, 0
      %p220 = por %p218, %p219
      %s221 = ssub.s32 %s19, %s26
      %p222 = scmp.eq.s32.totalorder %s221, 0
      %s224 = sadd.s32 %s223, 1
      %s225 = scalar_select %p222, %s223, %s224
      %p228 = pneg %p222
      %p229 = scmp.eq.s32.totalorder %s19, 1
      %p230 = por %p228, %p229
      %p231 = scmp.ne.s32.totalorder %s223, %s226
      %p232 = scmp.eq.s32.totalorder %s19, 0
      %p233 = por %p231, %p232
      %p234 = scmp.ne.s32.totalorder %s223, %s226
      %p235 = scmp.eq.s32.totalorder %s24, 1
      %p236 = por %p234, %p235
      %p237 = scmp.ne.s32.totalorder %s226, %s227
      %p238 = scmp.eq.s32.totalorder %s24, 0
      %p239 = por %p237, %p238
      %p240 = scmp.ne.s32.totalorder %s226, %s227
      %p241 = scmp.eq.s32.totalorder %s25, 1
      %p242 = por %p240, %p241
      %p244 = scmp.ne.s32.totalorder %s227, %s243
      %p245 = scmp.eq.s32.totalorder %s25, 0
      %p246 = por %p244, %p245
      %p247 = scmp.le.s32.totalorder 1, %s19
      %p248 = scmp.lt.s32.totalorder %s19, 3
      %p249 = pnand %p247, %p248
      %p250 = pneg %p249
      // Predicated region
      $region9: #{lenet_forward.1} parent=5 // pred_check
        _
      $region10: #{lenet_forward.1} parent=5 // pred_check_branch
        %252 = sbr.rel (%p249) target = $region12
      $region11: #{lenet_forward.1} parent=5 // pred_region
        %s253 = ssub.s32 %s19, 1
        // Predicated region
        $region13: #{lenet_forward.1} parent=11 // pred_check
          %p254 = pneg %p66
        $region14: #{lenet_forward.1} parent=11 // pred_check_branch
          %256 = sbr.rel (%p254) target = $region16
        $region15: #{lenet_forward.1} parent=11 // pred_region
          _
        $region16: #{lenet_forward.1} parent=11 // pred_fallthru
          _
        // Predicated region
        $region17: #{lenet_forward.1} parent=11 // pred_check
          %p257 = pneg %p87
        $region18: #{lenet_forward.1} parent=11 // pred_check_branch
          %259 = sbr.rel (%p257) target = $region20
        $region19: #{lenet_forward.1} parent=11 // pred_region
          _
        $region20: #{lenet_forward.1} parent=11 // pred_fallthru
          _
        // Predicated region
        $region21: #{lenet_forward.1} parent=11 // pred_check
          %p260 = pneg %p108
        $region22: #{lenet_forward.1} parent=11 // pred_check_branch
          %262 = sbr.rel (%p260) target = $region24
        $region23: #{lenet_forward.1} parent=11 // pred_region
          _
        $region24: #{lenet_forward.1} parent=11 // pred_fallthru
          _
        // Predicated region
        $region25: #{lenet_forward.1} parent=11 // pred_check
          %p263 = pneg %p129
        $region26: #{lenet_forward.1} parent=11 // pred_check_branch
          %265 = sbr.rel (%p263) target = $region28
        $region27: #{lenet_forward.1} parent=11 // pred_region
          _
        $region28: #{lenet_forward.1} parent=11 // pred_fallthru
          _
        // Predicated region
        $region29: #{lenet_forward.1} parent=11 // pred_check
          %p266 = pneg %p150
        $region30: #{lenet_forward.1} parent=11 // pred_check_branch
          %268 = sbr.rel (%p266) target = $region32
        $region31: #{lenet_forward.1} parent=11 // pred_region
          %s270 = ssub.s32 18432, 18432
          %271 = vsyncadd [#allocation3], %s270
          %s272 = sshll.u32 [#allocation2], 4
          %s273 = int_to_ptr.vmem [resolvable:$true] %s272
          %278 = dma.hbm_to_vmem [thread:$0]  %s5, 18432, %s273, [#allocation3], 64, 64, 4
        $region32: #{lenet_forward.1} parent=11 // pred_fallthru
          _
        // Predicated region
        $region33: #{lenet_forward.1} parent=11 // pred_check
          %p279 = pneg %p171
        $region34: #{lenet_forward.1} parent=11 // pred_check_branch
          %281 = sbr.rel (%p279) target = $region36
        $region35: #{lenet_forward.1} parent=11 // pred_region
          _
        $region36: #{lenet_forward.1} parent=11 // pred_fallthru
          _
        // Predicated region
        $region37: #{lenet_forward.1} parent=11 // pred_check
          %p282 = pneg %p192
        $region38: #{lenet_forward.1} parent=11 // pred_check_branch
          %284 = sbr.rel (%p282) target = $region40
        $region39: #{lenet_forward.1} parent=11 // pred_region
          _
        $region40: #{lenet_forward.1} parent=11 // pred_fallthru
          _
        // Predicated region
        $region41: #{lenet_forward.1} parent=11 // pred_check
          %p285 = pneg %p213
        $region42: #{lenet_forward.1} parent=11 // pred_check_branch
          %287 = sbr.rel (%p285) target = $region44
        $region43: #{lenet_forward.1} parent=11 // pred_region
          _
        $region44: #{lenet_forward.1} parent=11 // pred_fallthru
          _
      $region12: #{lenet_forward.1} parent=5 // pred_fallthru
        _
      %p288 = scmp.lt.s32.totalorder %s19, 2
      // Predicated region
      $region45: #{lenet_forward.1} parent=5 // pred_check
        %p289 = pneg %p288
      $region46: #{lenet_forward.1} parent=5 // pred_check_branch
        %291 = sbr.rel (%p289) target = $region48
      $region47: #{lenet_forward.1} parent=5 // pred_region
        // Predicated region
        $region49: #{lenet_forward.1} parent=47 // pred_check
          %p292 = pneg %p39
        $region50: #{lenet_forward.1} parent=47 // pred_check_branch
          %294 = sbr.rel (%p292) target = $region52
        $region51: #{lenet_forward.1} parent=47 // pred_region
          %p295 = scmp.lt.s32.totalorder %s19, 1
          %s296 = scalar_select %p295, %s19, 1
          %s297 = smul.addr %s296, 2
          %s298 = smul.addr %s297, 8
          %s299 = scalar_lea.vmem %s0, %s298
        $region52: #{lenet_forward.1} parent=47 // pred_fallthru
          _
      $region48: #{lenet_forward.1} parent=5 // pred_fallthru
        _
      %p300 = scmp.le.s32.totalorder 1, %s19
      %p301 = scmp.lt.s32.totalorder %s19, 3
      %p302 = pnand %p300, %p301
      %p303 = pneg %p302
      // Predicated region
      $region53: #{lenet_forward.1} parent=5 // pred_check
        _
      $region54: #{lenet_forward.1} parent=5 // pred_check_branch
        %305 = sbr.rel (%p302) target = $region56
      $region55: #{lenet_forward.1} parent=5 // pred_region
        %s306 = ssub.s32 %s19, 1
        // Predicated region
        $region57: #{lenet_forward.1} parent=55 // pred_check
          %p307 = pneg %p150
        $region58: #{lenet_forward.1} parent=55 // pred_check_branch
          %309 = sbr.rel (%p307) target = $region60
        $region59: #{lenet_forward.1} parent=55 // pred_region
          %310 = dma.done [#allocation3], 18432
        $region60: #{lenet_forward.1} parent=55 // pred_fallthru
          _
        %p311 = scmp.lt.s32.totalorder %s24, 1
        %s312 = scalar_select %p311, %s24, 1
        %s313 = smul.addr %s312, 2
        %s314 = smul.addr %s313, 8
        %s315 = scalar_lea.vmem %s0, %s314
        %p316 = pneg %p45
        %p317 = pneg %p42
        %p318 = pneg %p66
        %p319 = pneg %p63
        %p320 = pneg %p87
        %p321 = pneg %p84
        %p322 = pneg %p108
        %p323 = pneg %p105
        %p324 = pneg %p129
        %p325 = pneg %p126
        %p326 = pneg %p150
        %p327 = pneg %p147
        %p328 = pneg %p171
        %p329 = pneg %p168
        %p330 = pneg %p192
        %p331 = pneg %p189
        %p332 = pneg %p213
        %p333 = pneg %p210
        %p334 = pneg %p239
        %p335 = pneg %p236
        %s336 = sand.u32 %s226, 1
        %s337 = scalar_lea.sflag [#allocation4], %s336
        %s338 = sand.u32 %s226, 1
        %s339 = scalar_lea.vmem [#allocation5], %s338
        %p340 = scmp.lt.s32.totalorder %s24, 1
        %s341 = scalar_select %p340, %s24, 1
        %s342 = smul.addr %s341, 2
        %s343 = smul.addr %s342, 8
        %s344 = scalar_lea.vmem %s0, %s343
        %v346 = vld [vmem:[%s344] sm:$0xff]
        %v347 = vld [vmem:[%s344 + $0x8] sm:$0xff]
        %v348 = vld [vmem:[%s1] sm:$0x7]
        %v349 = vld [vmem:[%s1 + $0x4] sm:$0x7]
        %v350 = vld [vmem:[%s1 + $0x8] sm:$0x7]
        %v351 = vld [vmem:[%s2] sm:$0x1]
        %v353 = vlaneseq
        %v354 = vshrl.u32 %v353, 7
        %v355 = vsub.s32 0, %v354
        %v356 = vrot.slane %v351, %v355
        %v358 = vadd.f32 %v356, 0.0
        %v359 = vlaneseq
        %v360 = vshrl.u32 %v359, 7
        %v361 = vsub.s32 0, %v360
        %v362 = vrot.slane %v346, %v361
        %364 = vbcast.lane.b32.xlu0 %v362, 256
        %v365 = vpop.permute.xlu0 %364
        %s367 = sor.u32 256, 8
        %368 = vbcast.lane.b32.xlu0 %v362, %s367
        %v369 = vpop.permute.xlu0 %368
        %v370 = vlaneseq
        %v371 = vshrl.u32 %v370, 7
        %v372 = vsub.s32 1, %v371
        %v373 = vrot.slane %v346, %v372
        %375 = vbcast.lane.b32.xlu0 %v373, 256
        %v376 = vpop.permute.xlu0 %375
        %s378 = sor.u32 256, 8
        %379 = vbcast.lane.b32.xlu0 %v373, %s378
        %v380 = vpop.permute.xlu0 %379
        %v381 = vlaneseq
        %v382 = vshrl.u32 %v381, 7
        %v383 = vsub.s32 2, %v382
        %v384 = vrot.slane %v346, %v383
        %386 = vbcast.lane.b32.xlu0 %v384, 256
        %v387 = vpop.permute.xlu0 %386
        %s389 = sor.u32 256, 8
        %390 = vbcast.lane.b32.xlu0 %v384, %s389
        %v391 = vpop.permute.xlu0 %390
        %v392 = vlaneseq
        %v393 = vshrl.u32 %v392, 7
        %v394 = vsub.s32 3, %v393
        %v395 = vrot.slane %v346, %v394
        %397 = vbcast.lane.b32.xlu0 %v395, 256
        %v398 = vpop.permute.xlu0 %397
        %s400 = sor.u32 256, 8
        %401 = vbcast.lane.b32.xlu0 %v395, %s400
        %v402 = vpop.permute.xlu0 %401
        %v403 = vlaneseq
        %v404 = vshrl.u32 %v403, 7
        %v405 = vsub.s32 4, %v404
        %v406 = vrot.slane %v346, %v405
        %408 = vbcast.lane.b32.xlu0 %v406, 256
        %v409 = vpop.permute.xlu0 %408
        %s411 = sor.u32 256, 8
        %412 = vbcast.lane.b32.xlu0 %v406, %s411
        %v413 = vpop.permute.xlu0 %412
        %v414 = vlaneseq
        %v415 = vshrl.u32 %v414, 7
        %v416 = vsub.s32 5, %v415
        %v417 = vrot.slane %v346, %v416
        %419 = vbcast.lane.b32.xlu0 %v417, 256
        %v420 = vpop.permute.xlu0 %419
        %s422 = sor.u32 256, 8
        %423 = vbcast.lane.b32.xlu0 %v417, %s422
        %v424 = vpop.permute.xlu0 %423
        %v425 = vlaneseq
        %v426 = vshrl.u32 %v425, 7
        %v427 = vsub.s32 6, %v426
        %v428 = vrot.slane %v346, %v427
        %430 = vbcast.lane.b32.xlu0 %v428, 256
        %v431 = vpop.permute.xlu0 %430
        %s433 = sor.u32 256, 8
        %434 = vbcast.lane.b32.xlu0 %v428, %s433
        %v435 = vpop.permute.xlu0 %434
        %v436 = vlaneseq
        %v437 = vshrl.u32 %v436, 7
        %v438 = vsub.s32 7, %v437
        %v439 = vrot.slane %v346, %v438
        %441 = vbcast.lane.b32.xlu0 %v439, 256
        %v442 = vpop.permute.xlu0 %441
        %s444 = sor.u32 256, 8
        %445 = vbcast.lane.b32.xlu0 %v439, %s444
        %v446 = vpop.permute.xlu0 %445
        %v447 = vlaneseq
        %v448 = vshrl.u32 %v447, 7
        %v449 = vsub.s32 0, %v448
        %v450 = vrot.slane %v347, %v449
        %452 = vbcast.lane.b32.xlu0 %v450, 256
        %v453 = vpop.permute.xlu0 %452
        %s455 = sor.u32 256, 8
        %456 = vbcast.lane.b32.xlu0 %v450, %s455
        %v457 = vpop.permute.xlu0 %456
        %v458 = vlaneseq
        %v459 = vshrl.u32 %v458, 7
        %v460 = vsub.s32 1, %v459
        %v461 = vrot.slane %v347, %v460
        %463 = vbcast.lane.b32.xlu0 %v461, 256
        %v464 = vpop.permute.xlu0 %463
        %s466 = sor.u32 256, 8
        %467 = vbcast.lane.b32.xlu0 %v461, %s466
        %v468 = vpop.permute.xlu0 %467
        %v469 = vlaneseq
        %v470 = vshrl.u32 %v469, 7
        %v471 = vsub.s32 2, %v470
        %v472 = vrot.slane %v347, %v471
        %474 = vbcast.lane.b32.xlu0 %v472, 256
        %v475 = vpop.permute.xlu0 %474
        %s477 = sor.u32 256, 8
        %478 = vbcast.lane.b32.xlu0 %v472, %s477
        %v479 = vpop.permute.xlu0 %478
        %v480 = vlaneseq
        %v481 = vshrl.u32 %v480, 7
        %v482 = vsub.s32 3, %v481
        %v483 = vrot.slane %v347, %v482
        %485 = vbcast.lane.b32.xlu0 %v483, 256
        %v486 = vpop.permute.xlu0 %485
        %s488 = sor.u32 256, 8
        %489 = vbcast.lane.b32.xlu0 %v483, %s488
        %v490 = vpop.permute.xlu0 %489
        %v491 = vlaneseq
        %v492 = vshrl.u32 %v491, 7
        %v493 = vsub.s32 4, %v492
        %v494 = vrot.slane %v347, %v493
        %496 = vbcast.lane.b32.xlu0 %v494, 256
        %v497 = vpop.permute.xlu0 %496
        %s499 = sor.u32 256, 8
        %500 = vbcast.lane.b32.xlu0 %v494, %s499
        %v501 = vpop.permute.xlu0 %500
        %v502 = vlaneseq
        %v503 = vshrl.u32 %v502, 7
        %v504 = vsub.s32 5, %v503
        %v505 = vrot.slane %v347, %v504
        %507 = vbcast.lane.b32.xlu0 %v505, 256
        %v508 = vpop.permute.xlu0 %507
        %s510 = sor.u32 256, 8
        %511 = vbcast.lane.b32.xlu0 %v505, %s510
        %v512 = vpop.permute.xlu0 %511
        %v513 = vlaneseq
        %v514 = vshrl.u32 %v513, 7
        %v515 = vsub.s32 0, %v514
        %v516 = vrot.slane %v348, %v515
        %v517 = vmul.f32 %v365, %v516
        %v518 = vmul.f32 %v369, %v516
        %v519 = vmul.f32 %v376, %v516
        %v520 = vmul.f32 %v380, %v516
        %v521 = vmul.f32 %v387, %v516
        %v522 = vmul.f32 %v391, %v516
        %v523 = vmul.f32 %v398, %v516
        %v524 = vmul.f32 %v402, %v516
        %v525 = vmul.f32 %v409, %v516
        %v526 = vmul.f32 %v413, %v516
        %v527 = vmul.f32 %v420, %v516
        %v528 = vmul.f32 %v424, %v516
        %v529 = vmul.f32 %v431, %v516
        %v530 = vmul.f32 %v435, %v516
        %v531 = vmul.f32 %v442, %v516
        %v532 = vmul.f32 %v446, %v516
        %v533 = vmul.f32 %v453, %v516
        %v534 = vmul.f32 %v457, %v516
        %v535 = vmul.f32 %v464, %v516
        %v536 = vmul.f32 %v468, %v516
        %v537 = vmul.f32 %v475, %v516
        %v538 = vmul.f32 %v479, %v516
        %v539 = vmul.f32 %v486, %v516
        %v540 = vmul.f32 %v490, %v516
        %v541 = vmul.f32 %v497, %v516
        %v542 = vmul.f32 %v501, %v516
        %v543 = vmul.f32 %v508, %v516
        %v544 = vmul.f32 %v512, %v516
        %v545 = vadd.f32 %v358, %v517
        %v546 = vadd.f32 %v358, %v518
        %v547 = vadd.f32 %v358, %v519
        %v548 = vadd.f32 %v358, %v520
        %v549 = vadd.f32 %v358, %v521
        %v550 = vadd.f32 %v358, %v522
        %v551 = vadd.f32 %v358, %v523
        %v552 = vadd.f32 %v358, %v524
        %v553 = vadd.f32 %v358, %v525
        %v554 = vadd.f32 %v358, %v526
        %v555 = vadd.f32 %v358, %v527
        %v556 = vadd.f32 %v358, %v528
        %v557 = vadd.f32 %v358, %v529
        %v558 = vadd.f32 %v358, %v530
        %v559 = vadd.f32 %v358, %v531
        %v560 = vadd.f32 %v358, %v532
        %v561 = vadd.f32 %v358, %v533
        %v562 = vadd.f32 %v358, %v534
        %v563 = vadd.f32 %v358, %v535
        %v564 = vadd.f32 %v358, %v536
        %v565 = vadd.f32 %v358, %v537
        %v566 = vadd.f32 %v358, %v538
        %v567 = vadd.f32 %v358, %v539
        %v568 = vadd.f32 %v358, %v540
        %v569 = vadd.f32 %v358, %v541
        %v570 = vadd.f32 %v358, %v542
        %v571 = vadd.f32 %v358, %v543
        %v572 = vadd.f32 %v358, %v544
        %s574 = sor.u32 256, 1
        %575 = vbcast.lane.b32.xlu0 %v362, %s574
        %v576 = vpop.permute.xlu0 %575
        %s578 = sor.u32 256, 9
        %579 = vbcast.lane.b32.xlu0 %v362, %s578
        %v580 = vpop.permute.xlu0 %579
        %s582 = sor.u32 256, 1
        %583 = vbcast.lane.b32.xlu0 %v373, %s582
        %v584 = vpop.permute.xlu0 %583
        %s586 = sor.u32 256, 9
        %587 = vbcast.lane.b32.xlu0 %v373, %s586
        %v588 = vpop.permute.xlu0 %587
        %s590 = sor.u32 256, 1
        %591 = vbcast.lane.b32.xlu0 %v384, %s590
        %v592 = vpop.permute.xlu0 %591
        %s594 = sor.u32 256, 9
        %595 = vbcast.lane.b32.xlu0 %v384, %s594
        %v596 = vpop.permute.xlu0 %595
        %s598 = sor.u32 256, 1
        %599 = vbcast.lane.b32.xlu0 %v395, %s598
        %v600 = vpop.permute.xlu0 %599
        %s602 = sor.u32 256, 9
        %603 = vbcast.lane.b32.xlu0 %v395, %s602
        %v604 = vpop.permute.xlu0 %603
        %s606 = sor.u32 256, 1
        %607 = vbcast.lane.b32.xlu0 %v406, %s606
        %v608 = vpop.permute.xlu0 %607
        %s610 = sor.u32 256, 9
        %611 = vbcast.lane.b32.xlu0 %v406, %s610
        %v612 = vpop.permute.xlu0 %611
        %s614 = sor.u32 256, 1
        %615 = vbcast.lane.b32.xlu0 %v417, %s614
        %v616 = vpop.permute.xlu0 %615
        %s618 = sor.u32 256, 9
        %619 = vbcast.lane.b32.xlu0 %v417, %s618
        %v620 = vpop.permute.xlu0 %619
        %s622 = sor.u32 256, 1
        %623 = vbcast.lane.b32.xlu0 %v428, %s622
        %v624 = vpop.permute.xlu0 %623
        %s626 = sor.u32 256, 9
        %627 = vbcast.lane.b32.xlu0 %v428, %s626
        %v628 = vpop.permute.xlu0 %627
        %s630 = sor.u32 256, 1
        %631 = vbcast.lane.b32.xlu0 %v439, %s630
        %v632 = vpop.permute.xlu0 %631
        %s634 = sor.u32 256, 9
        %635 = vbcast.lane.b32.xlu0 %v439, %s634
        %v636 = vpop.permute.xlu0 %635
        %s638 = sor.u32 256, 1
        %639 = vbcast.lane.b32.xlu0 %v450, %s638
        %v640 = vpop.permute.xlu0 %639
        %s642 = sor.u32 256, 9
        %643 = vbcast.lane.b32.xlu0 %v450, %s642
        %v644 = vpop.permute.xlu0 %643
        %s646 = sor.u32 256, 1
        %647 = vbcast.lane.b32.xlu0 %v461, %s646
        %v648 = vpop.permute.xlu0 %647
        %s650 = sor.u32 256, 9
        %651 = vbcast.lane.b32.xlu0 %v461, %s650
        %v652 = vpop.permute.xlu0 %651
        %s654 = sor.u32 256, 1
        %655 = vbcast.lane.b32.xlu0 %v472, %s654
        %v656 = vpop.permute.xlu0 %655
        %s658 = sor.u32 256, 9
        %659 = vbcast.lane.b32.xlu0 %v472, %s658
        %v660 = vpop.permute.xlu0 %659
        %s662 = sor.u32 256, 1
        %663 = vbcast.lane.b32.xlu0 %v483, %s662
        %v664 = vpop.permute.xlu0 %663
        %s666 = sor.u32 256, 9
        %667 = vbcast.lane.b32.xlu0 %v483, %s666
        %v668 = vpop.permute.xlu0 %667
        %s670 = sor.u32 256, 1
        %671 = vbcast.lane.b32.xlu0 %v494, %s670
        %v672 = vpop.permute.xlu0 %671
        %s674 = sor.u32 256, 9
        %675 = vbcast.lane.b32.xlu0 %v494, %s674
        %v676 = vpop.permute.xlu0 %675
        %s678 = sor.u32 256, 1
        %679 = vbcast.lane.b32.xlu0 %v505, %s678
        %v680 = vpop.permute.xlu0 %679
        %s682 = sor.u32 256, 9
        %683 = vbcast.lane.b32.xlu0 %v505, %s682
        %v684 = vpop.permute.xlu0 %683
        %v685 = vlaneseq
        %v686 = vshrl.u32 %v685, 7
        %v687 = vsub.s32 1, %v686
        %v688 = vrot.slane %v348, %v687
        %v689 = vmul.f32 %v576, %v688
        %v690 = vmul.f32 %v580, %v688
        %v691 = vmul.f32 %v584, %v688
        %v692 = vmul.f32 %v588, %v688
        %v693 = vmul.f32 %v592, %v688
        %v694 = vmul.f32 %v596, %v688
        %v695 = vmul.f32 %v600, %v688
        %v696 = vmul.f32 %v604, %v688
        %v697 = vmul.f32 %v608, %v688
        %v698 = vmul.f32 %v612, %v688
        %v699 = vmul.f32 %v616, %v688
        %v700 = vmul.f32 %v620, %v688
        %v701 = vmul.f32 %v624, %v688
        %v702 = vmul.f32 %v628, %v688
        %v703 = vmul.f32 %v632, %v688
        %v704 = vmul.f32 %v636, %v688
        %v705 = vmul.f32 %v640, %v688
        %v706 = vmul.f32 %v644, %v688
        %v707 = vmul.f32 %v648, %v688
        %v708 = vmul.f32 %v652, %v688
        %v709 = vmul.f32 %v656, %v688
        %v710 = vmul.f32 %v660, %v688
        %v711 = vmul.f32 %v664, %v688
        %v712 = vmul.f32 %v668, %v688
        %v713 = vmul.f32 %v672, %v688
        %v714 = vmul.f32 %v676, %v688
        %v715 = vmul.f32 %v680, %v688
        %v716 = vmul.f32 %v684, %v688
        %v717 = vadd.f32 %v545, %v689
        %v718 = vadd.f32 %v546, %v690
        %v719 = vadd.f32 %v547, %v691
        %v720 = vadd.f32 %v548, %v692
        %v721 = vadd.f32 %v549, %v693
        %v722 = vadd.f32 %v550, %v694
        %v723 = vadd.f32 %v551, %v695
        %v724 = vadd.f32 %v552, %v696
        %v725 = vadd.f32 %v553, %v697
        %v726 = vadd.f32 %v554, %v698
        %v727 = vadd.f32 %v555, %v699
        %v728 = vadd.f32 %v556, %v700
        %v729 = vadd.f32 %v557, %v701
        %v730 = vadd.f32 %v558, %v702
        %v731 = vadd.f32 %v559, %v703
        %v732 = vadd.f32 %v560, %v704
        %v733 = vadd.f32 %v561, %v705
        %v734 = vadd.f32 %v562, %v706
        %v735 = vadd.f32 %v563, %v707
        %v736 = vadd.f32 %v564, %v708
        %v737 = vadd.f32 %v565, %v709
        %v738 = vadd.f32 %v566, %v710
        %v739 = vadd.f32 %v567, %v711
        %v740 = vadd.f32 %v568, %v712
        %v741 = vadd.f32 %v569, %v713
        %v742 = vadd.f32 %v570, %v714
        %v743 = vadd.f32 %v571, %v715
        %v744 = vadd.f32 %v572, %v716
        %s746 = sor.u32 256, 2
        %747 = vbcast.lane.b32.xlu0 %v362, %s746
        %v748 = vpop.permute.xlu0 %747
        %s750 = sor.u32 256, 10
        %751 = vbcast.lane.b32.xlu0 %v362, %s750
        %v752 = vpop.permute.xlu0 %751
        %s754 = sor.u32 256, 2
        %755 = vbcast.lane.b32.xlu0 %v373, %s754
        %v756 = vpop.permute.xlu0 %755
        %s758 = sor.u32 256, 10
        %759 = vbcast.lane.b32.xlu0 %v373, %s758
        %v760 = vpop.permute.xlu0 %759
        %s762 = sor.u32 256, 2
        %763 = vbcast.lane.b32.xlu0 %v384, %s762
        %v764 = vpop.permute.xlu0 %763
        %s766 = sor.u32 256, 10
        %767 = vbcast.lane.b32.xlu0 %v384, %s766
        %v768 = vpop.permute.xlu0 %767
        %s770 = sor.u32 256, 2
        %771 = vbcast.lane.b32.xlu0 %v395, %s770
        %v772 = vpop.permute.xlu0 %771
        %s774 = sor.u32 256, 10
        %775 = vbcast.lane.b32.xlu0 %v395, %s774
        %v776 = vpop.permute.xlu0 %775
        %s778 = sor.u32 256, 2
        %779 = vbcast.lane.b32.xlu0 %v406, %s778
        %v780 = vpop.permute.xlu0 %779
        %s782 = sor.u32 256, 10
        %783 = vbcast.lane.b32.xlu0 %v406, %s782
        %v784 = vpop.permute.xlu0 %783
        %s786 = sor.u32 256, 2
        %787 = vbcast.lane.b32.xlu0 %v417, %s786
        %v788 = vpop.permute.xlu0 %787
        %s790 = sor.u32 256, 10
        %791 = vbcast.lane.b32.xlu0 %v417, %s790
        %v792 = vpop.permute.xlu0 %791
        %s794 = sor.u32 256, 2
        %795 = vbcast.lane.b32.xlu0 %v428, %s794
        %v796 = vpop.permute.xlu0 %795
        %s798 = sor.u32 256, 10
        %799 = vbcast.lane.b32.xlu0 %v428, %s798
        %v800 = vpop.permute.xlu0 %799
        %s802 = sor.u32 256, 2
        %803 = vbcast.lane.b32.xlu0 %v439, %s802
        %v804 = vpop.permute.xlu0 %803
        %s806 = sor.u32 256, 10
        %807 = vbcast.lane.b32.xlu0 %v439, %s806
        %v808 = vpop.permute.xlu0 %807
        %s810 = sor.u32 256, 2
        %811 = vbcast.lane.b32.xlu0 %v450, %s810
        %v812 = vpop.permute.xlu0 %811
        %s814 = sor.u32 256, 10
        %815 = vbcast.lane.b32.xlu0 %v450, %s814
        %v816 = vpop.permute.xlu0 %815
        %s818 = sor.u32 256, 2
        %819 = vbcast.lane.b32.xlu0 %v461, %s818
        %v820 = vpop.permute.xlu0 %819
        %s822 = sor.u32 256, 10
        %823 = vbcast.lane.b32.xlu0 %v461, %s822
        %v824 = vpop.permute.xlu0 %823
        %s826 = sor.u32 256, 2
        %827 = vbcast.lane.b32.xlu0 %v472, %s826
        %v828 = vpop.permute.xlu0 %827
        %s830 = sor.u32 256, 10
        %831 = vbcast.lane.b32.xlu0 %v472, %s830
        %v832 = vpop.permute.xlu0 %831
        %s834 = sor.u32 256, 2
        %835 = vbcast.lane.b32.xlu0 %v483, %s834
        %v836 = vpop.permute.xlu0 %835
        %s838 = sor.u32 256, 10
        %839 = vbcast.lane.b32.xlu0 %v483, %s838
        %v840 = vpop.permute.xlu0 %839
        %s842 = sor.u32 256, 2
        %843 = vbcast.lane.b32.xlu0 %v494, %s842
        %v844 = vpop.permute.xlu0 %843
        %s846 = sor.u32 256, 10
        %847 = vbcast.lane.b32.xlu0 %v494, %s846
        %v848 = vpop.permute.xlu0 %847
        %s850 = sor.u32 256, 2
        %851 = vbcast.lane.b32.xlu0 %v505, %s850
        %v852 = vpop.permute.xlu0 %851
        %s854 = sor.u32 256, 10
        %855 = vbcast.lane.b32.xlu0 %v505, %s854
        %v856 = vpop.permute.xlu0 %855
        %v857 = vlaneseq
        %v858 = vshrl.u32 %v857, 7
        %v859 = vsub.s32 2, %v858
        %v860 = vrot.slane %v348, %v859
        %v861 = vmul.f32 %v748, %v860
        %v862 = vmul.f32 %v752, %v860
        %v863 = vmul.f32 %v756, %v860
        %v864 = vmul.f32 %v760, %v860
        %v865 = vmul.f32 %v764, %v860
        %v866 = vmul.f32 %v768, %v860
        %v867 = vmul.f32 %v772, %v860
        %v868 = vmul.f32 %v776, %v860
        %v869 = vmul.f32 %v780, %v860
        %v870 = vmul.f32 %v784, %v860
        %v871 = vmul.f32 %v788, %v860
        %v872 = vmul.f32 %v792, %v860
        %v873 = vmul.f32 %v796, %v860
        %v874 = vmul.f32 %v800, %v860
        %v875 = vmul.f32 %v804, %v860
        %v876 = vmul.f32 %v808, %v860
        %v877 = vmul.f32 %v812, %v860
        %v878 = vmul.f32 %v816, %v860
        %v879 = vmul.f32 %v820, %v860
        %v880 = vmul.f32 %v824, %v860
        %v881 = vmul.f32 %v828, %v860
        %v882 = vmul.f32 %v832, %v860
        %v883 = vmul.f32 %v836, %v860
        %v884 = vmul.f32 %v840, %v860
        %v885 = vmul.f32 %v844, %v860
        %v886 = vmul.f32 %v848, %v860
        %v887 = vmul.f32 %v852, %v860
        %v888 = vmul.f32 %v856, %v860
        %v889 = vadd.f32 %v717, %v861
        %v890 = vadd.f32 %v718, %v862
        %v891 = vadd.f32 %v719, %v863
        %v892 = vadd.f32 %v720, %v864
        %v893 = vadd.f32 %v721, %v865
        %v894 = vadd.f32 %v722, %v866
        %v895 = vadd.f32 %v723, %v867
        %v896 = vadd.f32 %v724, %v868
        %v897 = vadd.f32 %v725, %v869
        %v898 = vadd.f32 %v726, %v870
        %v899 = vadd.f32 %v727, %v871
        %v900 = vadd.f32 %v728, %v872
        %v901 = vadd.f32 %v729, %v873
        %v902 = vadd.f32 %v730, %v874
        %v903 = vadd.f32 %v731, %v875
        %v904 = vadd.f32 %v732, %v876
        %v905 = vadd.f32 %v733, %v877
        %v906 = vadd.f32 %v734, %v878
        %v907 = vadd.f32 %v735, %v879
        %v908 = vadd.f32 %v736, %v880
        %v909 = vadd.f32 %v737, %v881
        %v910 = vadd.f32 %v738, %v882
        %v911 = vadd.f32 %v739, %v883
        %v912 = vadd.f32 %v740, %v884
        %v913 = vadd.f32 %v741, %v885
        %v914 = vadd.f32 %v742, %v886
        %v915 = vadd.f32 %v743, %v887
        %v916 = vadd.f32 %v744, %v888
        %v917 = vlaneseq
        %v918 = vshrl.u32 %v917, 7
        %v919 = vsub.s32 6, %v918
        %v920 = vrot.slane %v347, %v919
        %922 = vbcast.lane.b32.xlu0 %v920, 256
        %v923 = vpop.permute.xlu0 %922
        %s925 = sor.u32 256, 8
        %926 = vbcast.lane.b32.xlu0 %v920, %s925
        %v927 = vpop.permute.xlu0 %926
        %v928 = vlaneseq
        %v929 = vshrl.u32 %v928, 7
        %v930 = vsub.s32 0, %v929
        %v931 = vrot.slane %v349, %v930
        %v932 = vmul.f32 %v376, %v931
        %v933 = vmul.f32 %v380, %v931
        %v934 = vmul.f32 %v387, %v931
        %v935 = vmul.f32 %v391, %v931
        %v936 = vmul.f32 %v398, %v931
        %v937 = vmul.f32 %v402, %v931
        %v938 = vmul.f32 %v409, %v931
        %v939 = vmul.f32 %v413, %v931
        %v940 = vmul.f32 %v420, %v931
        %v941 = vmul.f32 %v424, %v931
        %v942 = vmul.f32 %v431, %v931
        %v943 = vmul.f32 %v435, %v931
        %v944 = vmul.f32 %v442, %v931
        %v945 = vmul.f32 %v446, %v931
        %v946 = vmul.f32 %v453, %v931
        %v947 = vmul.f32 %v457, %v931
        %v948 = vmul.f32 %v464, %v931
        %v949 = vmul.f32 %v468, %v931
        %v950 = vmul.f32 %v475, %v931
        %v951 = vmul.f32 %v479, %v931
        %v952 = vmul.f32 %v486, %v931
        %v953 = vmul.f32 %v490, %v931
        %v954 = vmul.f32 %v497, %v931
        %v955 = vmul.f32 %v501, %v931
        %v956 = vmul.f32 %v508, %v931
        %v957 = vmul.f32 %v512, %v931
        %v958 = vmul.f32 %v923, %v931
        %v959 = vmul.f32 %v927, %v931
        %v960 = vadd.f32 %v889, %v932
        %v961 = vadd.f32 %v890, %v933
        %v962 = vadd.f32 %v891, %v934
        %v963 = vadd.f32 %v892, %v935
        %v964 = vadd.f32 %v893, %v936
        %v965 = vadd.f32 %v894, %v937
        %v966 = vadd.f32 %v895, %v938
        %v967 = vadd.f32 %v896, %v939
        %v968 = vadd.f32 %v897, %v940
        %v969 = vadd.f32 %v898, %v941
        %v970 = vadd.f32 %v899, %v942
        %v971 = vadd.f32 %v900, %v943
        %v972 = vadd.f32 %v901, %v944
        %v973 = vadd.f32 %v902, %v945
        %v974 = vadd.f32 %v903, %v946
        %v975 = vadd.f32 %v904, %v947
        %v976 = vadd.f32 %v905, %v948
        %v977 = vadd.f32 %v906, %v949
        %v978 = vadd.f32 %v907, %v950
        %v979 = vadd.f32 %v908, %v951
        %v980 = vadd.f32 %v909, %v952
        %v981 = vadd.f32 %v910, %v953
        %v982 = vadd.f32 %v911, %v954
        %v983 = vadd.f32 %v912, %v955
        %v984 = vadd.f32 %v913, %v956
        %v985 = vadd.f32 %v914, %v957
        %v986 = vadd.f32 %v915, %v958
        %v987 = vadd.f32 %v916, %v959
        %s989 = sor.u32 256, 1
        %990 = vbcast.lane.b32.xlu0 %v920, %s989
        %v991 = vpop.permute.xlu0 %990
        %s993 = sor.u32 256, 9
        %994 = vbcast.lane.b32.xlu0 %v920, %s993
        %v995 = vpop.permute.xlu0 %994
        %v996 = vlaneseq
        %v997 = vshrl.u32 %v996, 7
        %v998 = vsub.s32 1, %v997
        %v999 = vrot.slane %v349, %v998
        %v1000 = vmul.f32 %v584, %v999
        %v1001 = vmul.f32 %v588, %v999
        %v1002 = vmul.f32 %v592, %v999
        %v1003 = vmul.f32 %v596, %v999
        %v1004 = vmul.f32 %v600, %v999
        %v1005 = vmul.f32 %v604, %v999
        %v1006 = vmul.f32 %v608, %v999
        %v1007 = vmul.f32 %v612, %v999
        %v1008 = vmul.f32 %v616, %v999
        %v1009 = vmul.f32 %v620, %v999
        %v1010 = vmul.f32 %v624, %v999
        %v1011 = vmul.f32 %v628, %v999
        %v1012 = vmul.f32 %v632, %v999
        %v1013 = vmul.f32 %v636, %v999
        %v1014 = vmul.f32 %v640, %v999
        %v1015 = vmul.f32 %v644, %v999
        %v1016 = vmul.f32 %v648, %v999
        %v1017 = vmul.f32 %v652, %v999
        %v1018 = vmul.f32 %v656, %v999
        %v1019 = vmul.f32 %v660, %v999
        %v1020 = vmul.f32 %v664, %v999
        %v1021 = vmul.f32 %v668, %v999
        %v1022 = vmul.f32 %v672, %v999
        %v1023 = vmul.f32 %v676, %v999
        %v1024 = vmul.f32 %v680, %v999
        %v1025 = vmul.f32 %v684, %v999
        %v1026 = vmul.f32 %v991, %v999
        %v1027 = vmul.f32 %v995, %v999
        %v1028 = vadd.f32 %v960, %v1000
        %v1029 = vadd.f32 %v961, %v1001
        %v1030 = vadd.f32 %v962, %v1002
        %v1031 = vadd.f32 %v963, %v1003
        %v1032 = vadd.f32 %v964, %v1004
        %v1033 = vadd.f32 %v965, %v1005
        %v1034 = vadd.f32 %v966, %v1006
        %v1035 = vadd.f32 %v967, %v1007
        %v1036 = vadd.f32 %v968, %v1008
        %v1037 = vadd.f32 %v969, %v1009
        %v1038 = vadd.f32 %v970, %v1010
        %v1039 = vadd.f32 %v971, %v1011
        %v1040 = vadd.f32 %v972, %v1012
        %v1041 = vadd.f32 %v973, %v1013
        %v1042 = vadd.f32 %v974, %v1014
        %v1043 = vadd.f32 %v975, %v1015
        %v1044 = vadd.f32 %v976, %v1016
        %v1045 = vadd.f32 %v977, %v1017
        %v1046 = vadd.f32 %v978, %v1018
        %v1047 = vadd.f32 %v979, %v1019
        %v1048 = vadd.f32 %v980, %v1020
        %v1049 = vadd.f32 %v981, %v1021
        %v1050 = vadd.f32 %v982, %v1022
        %v1051 = vadd.f32 %v983, %v1023
        %v1052 = vadd.f32 %v984, %v1024
        %v1053 = vadd.f32 %v985, %v1025
        %v1054 = vadd.f32 %v986, %v1026
        %v1055 = vadd.f32 %v987, %v1027
        %s1057 = sor.u32 256, 2
        %1058 = vbcast.lane.b32.xlu0 %v920, %s1057
        %v1059 = vpop.permute.xlu0 %1058
        %s1061 = sor.u32 256, 10
        %1062 = vbcast.lane.b32.xlu0 %v920, %s1061
        %v1063 = vpop.permute.xlu0 %1062
        %v1064 = vlaneseq
        %v1065 = vshrl.u32 %v1064, 7
        %v1066 = vsub.s32 2, %v1065
        %v1067 = vrot.slane %v349, %v1066
        %v1068 = vmul.f32 %v756, %v1067
        %v1069 = vmul.f32 %v760, %v1067
        %v1070 = vmul.f32 %v764, %v1067
        %v1071 = vmul.f32 %v768, %v1067
        %v1072 = vmul.f32 %v772, %v1067
        %v1073 = vmul.f32 %v776, %v1067
        %v1074 = vmul.f32 %v780, %v1067
        %v1075 = vmul.f32 %v784, %v1067
        %v1076 = vmul.f32 %v788, %v1067
        %v1077 = vmul.f32 %v792, %v1067
        %v1078 = vmul.f32 %v796, %v1067
        %v1079 = vmul.f32 %v800, %v1067
        %v1080 = vmul.f32 %v804, %v1067
        %v1081 = vmul.f32 %v808, %v1067
        %v1082 = vmul.f32 %v812, %v1067
        %v1083 = vmul.f32 %v816, %v1067
        %v1084 = vmul.f32 %v820, %v1067
        %v1085 = vmul.f32 %v824, %v1067
        %v1086 = vmul.f32 %v828, %v1067
        %v1087 = vmul.f32 %v832, %v1067
        %v1088 = vmul.f32 %v836, %v1067
        %v1089 = vmul.f32 %v840, %v1067
        %v1090 = vmul.f32 %v844, %v1067
        %v1091 = vmul.f32 %v848, %v1067
        %v1092 = vmul.f32 %v852, %v1067
        %v1093 = vmul.f32 %v856, %v1067
        %v1094 = vmul.f32 %v1059, %v1067
        %v1095 = vmul.f32 %v1063, %v1067
        %v1096 = vadd.f32 %v1028, %v1068
        %v1097 = vadd.f32 %v1029, %v1069
        %v1098 = vadd.f32 %v1030, %v1070
        %v1099 = vadd.f32 %v1031, %v1071
        %v1100 = vadd.f32 %v1032, %v1072
        %v1101 = vadd.f32 %v1033, %v1073
        %v1102 = vadd.f32 %v1034, %v1074
        %v1103 = vadd.f32 %v1035, %v1075
        %v1104 = vadd.f32 %v1036, %v1076
        %v1105 = vadd.f32 %v1037, %v1077
        %v1106 = vadd.f32 %v1038, %v1078
        %v1107 = vadd.f32 %v1039, %v1079
        %v1108 = vadd.f32 %v1040, %v1080
        %v1109 = vadd.f32 %v1041, %v1081
        %v1110 = vadd.f32 %v1042, %v1082
        %v1111 = vadd.f32 %v1043, %v1083
        %v1112 = vadd.f32 %v1044, %v1084
        %v1113 = vadd.f32 %v1045, %v1085
        %v1114 = vadd.f32 %v1046, %v1086
        %v1115 = vadd.f32 %v1047, %v1087
        %v1116 = vadd.f32 %v1048, %v1088
        %v1117 = vadd.f32 %v1049, %v1089
        %v1118 = vadd.f32 %v1050, %v1090
        %v1119 = vadd.f32 %v1051, %v1091
        %v1120 = vadd.f32 %v1052, %v1092
        %v1121 = vadd.f32 %v1053, %v1093
        %v1122 = vadd.f32 %v1054, %v1094
        %v1123 = vadd.f32 %v1055, %v1095
        %v1124 = vlaneseq
        %v1125 = vshrl.u32 %v1124, 7
        %v1126 = vsub.s32 7, %v1125
        %v1127 = vrot.slane %v347, %v1126
        %1129 = vbcast.lane.b32.xlu0 %v1127, 256
        %v1130 = vpop.permute.xlu0 %1129
        %s1132 = sor.u32 256, 8
        %1133 = vbcast.lane.b32.xlu0 %v1127, %s1132
        %v1134 = vpop.permute.xlu0 %1133
        %v1135 = vlaneseq
        %v1136 = vshrl.u32 %v1135, 7
        %v1137 = vsub.s32 0, %v1136
        %v1138 = vrot.slane %v350, %v1137
        %v1139 = vmul.f32 %v387, %v1138
        %v1140 = vmul.f32 %v391, %v1138
        %v1141 = vmul.f32 %v398, %v1138
        %v1142 = vmul.f32 %v402, %v1138
        %v1143 = vmul.f32 %v409, %v1138
        %v1144 = vmul.f32 %v413, %v1138
        %v1145 = vmul.f32 %v420, %v1138
        %v1146 = vmul.f32 %v424, %v1138
        %v1147 = vmul.f32 %v431, %v1138
        %v1148 = vmul.f32 %v435, %v1138
        %v1149 = vmul.f32 %v442, %v1138
        %v1150 = vmul.f32 %v446, %v1138
        %v1151 = vmul.f32 %v453, %v1138
        %v1152 = vmul.f32 %v457, %v1138
        %v1153 = vmul.f32 %v464, %v1138
        %v1154 = vmul.f32 %v468, %v1138
        %v1155 = vmul.f32 %v475, %v1138
        %v1156 = vmul.f32 %v479, %v1138
        %v1157 = vmul.f32 %v486, %v1138
        %v1158 = vmul.f32 %v490, %v1138
        %v1159 = vmul.f32 %v497, %v1138
        %v1160 = vmul.f32 %v501, %v1138
        %v1161 = vmul.f32 %v508, %v1138
        %v1162 = vmul.f32 %v512, %v1138
        %v1163 = vmul.f32 %v923, %v1138
        %v1164 = vmul.f32 %v927, %v1138
        %v1165 = vmul.f32 %v1130, %v1138
        %v1166 = vmul.f32 %v1134, %v1138
        %v1167 = vadd.f32 %v1096, %v1139
        %v1168 = vadd.f32 %v1097, %v1140
        %v1169 = vadd.f32 %v1098, %v1141
        %v1170 = vadd.f32 %v1099, %v1142
        %v1171 = vadd.f32 %v1100, %v1143
        %v1172 = vadd.f32 %v1101, %v1144
        %v1173 = vadd.f32 %v1102, %v1145
        %v1174 = vadd.f32 %v1103, %v1146
        %v1175 = vadd.f32 %v1104, %v1147
        %v1176 = vadd.f32 %v1105, %v1148
        %v1177 = vadd.f32 %v1106, %v1149
        %v1178 = vadd.f32 %v1107, %v1150
        %v1179 = vadd.f32 %v1108, %v1151
        %v1180 = vadd.f32 %v1109, %v1152
        %v1181 = vadd.f32 %v1110, %v1153
        %v1182 = vadd.f32 %v1111, %v1154
        %v1183 = vadd.f32 %v1112, %v1155
        %v1184 = vadd.f32 %v1113, %v1156
        %v1185 = vadd.f32 %v1114, %v1157
        %v1186 = vadd.f32 %v1115, %v1158
        %v1187 = vadd.f32 %v1116, %v1159
        %v1188 = vadd.f32 %v1117, %v1160
        %v1189 = vadd.f32 %v1118, %v1161
        %v1190 = vadd.f32 %v1119, %v1162
        %v1191 = vadd.f32 %v1120, %v1163
        %v1192 = vadd.f32 %v1121, %v1164
        %v1193 = vadd.f32 %v1122, %v1165
        %v1194 = vadd.f32 %v1123, %v1166
        %s1196 = sor.u32 256, 1
        %1197 = vbcast.lane.b32.xlu0 %v1127, %s1196
        %v1198 = vpop.permute.xlu0 %1197
        %s1200 = sor.u32 256, 9
        %1201 = vbcast.lane.b32.xlu0 %v1127, %s1200
        %v1202 = vpop.permute.xlu0 %1201
        %v1203 = vlaneseq
        %v1204 = vshrl.u32 %v1203, 7
        %v1205 = vsub.s32 1, %v1204
        %v1206 = vrot.slane %v350, %v1205
        %v1207 = vmul.f32 %v592, %v1206
        %v1208 = vmul.f32 %v596, %v1206
        %v1209 = vmul.f32 %v600, %v1206
        %v1210 = vmul.f32 %v604, %v1206
        %v1211 = vmul.f32 %v608, %v1206
        %v1212 = vmul.f32 %v612, %v1206
        %v1213 = vmul.f32 %v616, %v1206
        %v1214 = vmul.f32 %v620, %v1206
        %v1215 = vmul.f32 %v624, %v1206
        %v1216 = vmul.f32 %v628, %v1206
        %v1217 = vmul.f32 %v632, %v1206
        %v1218 = vmul.f32 %v636, %v1206
        %v1219 = vmul.f32 %v640, %v1206
        %v1220 = vmul.f32 %v644, %v1206
        %v1221 = vmul.f32 %v648, %v1206
        %v1222 = vmul.f32 %v652, %v1206
        %v1223 = vmul.f32 %v656, %v1206
        %v1224 = vmul.f32 %v660, %v1206
        %v1225 = vmul.f32 %v664, %v1206
        %v1226 = vmul.f32 %v668, %v1206
        %v1227 = vmul.f32 %v672, %v1206
        %v1228 = vmul.f32 %v676, %v1206
        %v1229 = vmul.f32 %v680, %v1206
        %v1230 = vmul.f32 %v684, %v1206
        %v1231 = vmul.f32 %v991, %v1206
        %v1232 = vmul.f32 %v995, %v1206
        %v1233 = vmul.f32 %v1198, %v1206
        %v1234 = vmul.f32 %v1202, %v1206
        %v1235 = vadd.f32 %v1167, %v1207
        %v1236 = vadd.f32 %v1168, %v1208
        %v1237 = vadd.f32 %v1169, %v1209
        %v1238 = vadd.f32 %v1170, %v1210
        %v1239 = vadd.f32 %v1171, %v1211
        %v1240 = vadd.f32 %v1172, %v1212
        %v1241 = vadd.f32 %v1173, %v1213
        %v1242 = vadd.f32 %v1174, %v1214
        %v1243 = vadd.f32 %v1175, %v1215
        %v1244 = vadd.f32 %v1176, %v1216
        %v1245 = vadd.f32 %v1177, %v1217
        %v1246 = vadd.f32 %v1178, %v1218
        %v1247 = vadd.f32 %v1179, %v1219
        %v1248 = vadd.f32 %v1180, %v1220
        %v1249 = vadd.f32 %v1181, %v1221
        %v1250 = vadd.f32 %v1182, %v1222
        %v1251 = vadd.f32 %v1183, %v1223
        %v1252 = vadd.f32 %v1184, %v1224
        %v1253 = vadd.f32 %v1185, %v1225
        %v1254 = vadd.f32 %v1186, %v1226
        %v1255 = vadd.f32 %v1187, %v1227
        %v1256 = vadd.f32 %v1188, %v1228
        %v1257 = vadd.f32 %v1189, %v1229
        %v1258 = vadd.f32 %v1190, %v1230
        %v1259 = vadd.f32 %v1191, %v1231
        %v1260 = vadd.f32 %v1192, %v1232
        %v1261 = vadd.f32 %v1193, %v1233
        %v1262 = vadd.f32 %v1194, %v1234
        %s1264 = sor.u32 256, 2
        %1265 = vbcast.lane.b32.xlu0 %v1127, %s1264
        %v1266 = vpop.permute.xlu0 %1265
        %s1268 = sor.u32 256, 10
        %1269 = vbcast.lane.b32.xlu0 %v1127, %s1268
        %v1270 = vpop.permute.xlu0 %1269
        %v1271 = vlaneseq
        %v1272 = vshrl.u32 %v1271, 7
        %v1273 = vsub.s32 2, %v1272
        %v1274 = vrot.slane %v350, %v1273
        %v1275 = vmul.f32 %v764, %v1274
        %v1276 = vmul.f32 %v768, %v1274
        %v1277 = vmul.f32 %v772, %v1274
        %v1278 = vmul.f32 %v776, %v1274
        %v1279 = vmul.f32 %v780, %v1274
        %v1280 = vmul.f32 %v784, %v1274
        %v1281 = vmul.f32 %v788, %v1274
        %v1282 = vmul.f32 %v792, %v1274
        %v1283 = vmul.f32 %v796, %v1274
        %v1284 = vmul.f32 %v800, %v1274
        %v1285 = vmul.f32 %v804, %v1274
        %v1286 = vmul.f32 %v808, %v1274
        %v1287 = vmul.f32 %v812, %v1274
        %v1288 = vmul.f32 %v816, %v1274
        %v1289 = vmul.f32 %v820, %v1274
        %v1290 = vmul.f32 %v824, %v1274
        %v1291 = vmul.f32 %v828, %v1274
        %v1292 = vmul.f32 %v832, %v1274
        %v1293 = vmul.f32 %v836, %v1274
        %v1294 = vmul.f32 %v840, %v1274
        %v1295 = vmul.f32 %v844, %v1274
        %v1296 = vmul.f32 %v848, %v1274
        %v1297 = vmul.f32 %v852, %v1274
        %v1298 = vmul.f32 %v856, %v1274
        %v1299 = vmul.f32 %v1059, %v1274
        %v1300 = vmul.f32 %v1063, %v1274
        %v1301 = vmul.f32 %v1266, %v1274
        %v1302 = vmul.f32 %v1270, %v1274
        %v1303 = vadd.f32 %v1235, %v1275
        %v1304 = vadd.f32 %v1236, %v1276
        %v1305 = vadd.f32 %v1237, %v1277
        %v1306 = vadd.f32 %v1238, %v1278
        %v1307 = vadd.f32 %v1239, %v1279
        %v1308 = vadd.f32 %v1240, %v1280
        %v1309 = vadd.f32 %v1241, %v1281
        %v1310 = vadd.f32 %v1242, %v1282
        %v1311 = vadd.f32 %v1243, %v1283
        %v1312 = vadd.f32 %v1244, %v1284
        %v1313 = vadd.f32 %v1245, %v1285
        %v1314 = vadd.f32 %v1246, %v1286
        %v1315 = vadd.f32 %v1247, %v1287
        %v1316 = vadd.f32 %v1248, %v1288
        %v1317 = vadd.f32 %v1249, %v1289
        %v1318 = vadd.f32 %v1250, %v1290
        %v1319 = vadd.f32 %v1251, %v1291
        %v1320 = vadd.f32 %v1252, %v1292
        %v1321 = vadd.f32 %v1253, %v1293
        %v1322 = vadd.f32 %v1254, %v1294
        %v1323 = vadd.f32 %v1255, %v1295
        %v1324 = vadd.f32 %v1256, %v1296
        %v1325 = vadd.f32 %v1257, %v1297
        %v1326 = vadd.f32 %v1258, %v1298
        %v1327 = vadd.f32 %v1259, %v1299
        %v1328 = vadd.f32 %v1260, %v1300
        %v1329 = vadd.f32 %v1261, %v1301
        %v1330 = vadd.f32 %v1262, %v1302
        %v1331 = vmax.f32 %v1303, 0.0
        %v1332 = vmax.f32 %v1304, 0.0
        %v1333 = vmax.f32 %v1305, 0.0
        %v1334 = vmax.f32 %v1306, 0.0
        %v1335 = vmax.f32 %v1307, 0.0
        %v1336 = vmax.f32 %v1308, 0.0
        %v1337 = vmax.f32 %v1309, 0.0
        %v1338 = vmax.f32 %v1310, 0.0
        %v1339 = vmax.f32 %v1311, 0.0
        %v1340 = vmax.f32 %v1312, 0.0
        %v1341 = vmax.f32 %v1313, 0.0
        %v1342 = vmax.f32 %v1314, 0.0
        %v1343 = vmax.f32 %v1315, 0.0
        %v1344 = vmax.f32 %v1316, 0.0
        %v1345 = vmax.f32 %v1317, 0.0
        %v1346 = vmax.f32 %v1318, 0.0
        %v1347 = vmax.f32 %v1319, 0.0
        %v1348 = vmax.f32 %v1320, 0.0
        %v1349 = vmax.f32 %v1321, 0.0
        %v1350 = vmax.f32 %v1322, 0.0
        %v1351 = vmax.f32 %v1323, 0.0
        %v1352 = vmax.f32 %v1324, 0.0
        %v1353 = vmax.f32 %v1325, 0.0
        %v1354 = vmax.f32 %v1326, 0.0
        %v1355 = vmax.f32 %v1327, 0.0
        %v1356 = vmax.f32 %v1328, 0.0
        %v1357 = vmax.f32 %v1329, 0.0
        %v1358 = vmax.f32 %v1330, 0.0
        %v1383 = vcombine.high %v1331, %v1331
        %v1384 = vcombine.high %v1333, %v1333
        %v1385 = vcombine.high %v1335, %v1335
        %v1386 = vcombine.high %v1337, %v1337
        %v1387 = vcombine.high %v1339, %v1339
        %v1388 = vcombine.high %v1341, %v1341
        %v1389 = vcombine.high %v1343, %v1343
        %v1390 = vcombine.high %v1345, %v1345
        %v1391 = vcombine.high %v1347, %v1347
        %v1392 = vcombine.high %v1349, %v1349
        %v1393 = vcombine.high %v1351, %v1351
        %v1394 = vcombine.high %v1353, %v1353
        %v1395 = vcombine.high %v1332, %v1332
        %v1396 = vcombine.high %v1334, %v1334
        %v1397 = vcombine.high %v1336, %v1336
        %v1398 = vcombine.high %v1338, %v1338
        %v1399 = vcombine.high %v1340, %v1340
        %v1400 = vcombine.high %v1342, %v1342
        %v1401 = vcombine.high %v1344, %v1344
        %v1402 = vcombine.high %v1346, %v1346
        %v1403 = vcombine.high %v1348, %v1348
        %v1404 = vcombine.high %v1350, %v1350
        %v1405 = vcombine.high %v1352, %v1352
        %v1406 = vcombine.high %v1354, %v1354
        %vm1407 = vcmask 1042432
        %vm1408 = vcmask 1046532
        %vm1409 = vmor %vm1407, %vm1408
        %v1410 = vrot.slane %v1331, 5
        %v1411 = vrot.slane %v1410, 4
        %v1412 = vrot.slane %v1383, 5
        %v1413 = vsel %vm1409, %v1411, %v1412
        %v1414 = vrot.slane %v1412, 4
        %v1415 = vrot.slane %v1332, 5
        %v1416 = vsel %vm1409, %v1414, %v1415
        %v1417 = vrot.slane %v1415, 4
        %v1418 = vrot.slane %v1395, 5
        %v1419 = vsel %vm1409, %v1417, %v1418
        %v1420 = vrot.slane %v1333, 5
        %v1421 = vrot.slane %v1420, 4
        %v1422 = vrot.slane %v1384, 5
        %v1423 = vsel %vm1409, %v1421, %v1422
        %v1424 = vrot.slane %v1422, 4
        %v1425 = vrot.slane %v1334, 5
        %v1426 = vsel %vm1409, %v1424, %v1425
        %v1427 = vrot.slane %v1425, 4
        %v1428 = vrot.slane %v1396, 5
        %v1429 = vsel %vm1409, %v1427, %v1428
        %v1430 = vrot.slane %v1335, 5
        %v1431 = vrot.slane %v1430, 4
        %v1432 = vrot.slane %v1385, 5
        %v1433 = vsel %vm1409, %v1431, %v1432
        %v1434 = vrot.slane %v1432, 4
        %v1435 = vrot.slane %v1336, 5
        %v1436 = vsel %vm1409, %v1434, %v1435
        %v1437 = vrot.slane %v1435, 4
        %v1438 = vrot.slane %v1397, 5
        %v1439 = vsel %vm1409, %v1437, %v1438
        %v1440 = vrot.slane %v1337, 5
        %v1441 = vrot.slane %v1440, 4
        %v1442 = vrot.slane %v1386, 5
        %v1443 = vsel %vm1409, %v1441, %v1442
        %v1444 = vrot.slane %v1442, 4
        %v1445 = vrot.slane %v1338, 5
        %v1446 = vsel %vm1409, %v1444, %v1445
        %v1447 = vrot.slane %v1445, 4
        %v1448 = vrot.slane %v1398, 5
        %v1449 = vsel %vm1409, %v1447, %v1448
        %v1450 = vrot.slane %v1339, 5
        %v1451 = vrot.slane %v1450, 4
        %v1452 = vrot.slane %v1387, 5
        %v1453 = vsel %vm1409, %v1451, %v1452
        %v1454 = vrot.slane %v1452, 4
        %v1455 = vrot.slane %v1340, 5
        %v1456 = vsel %vm1409, %v1454, %v1455
        %v1457 = vrot.slane %v1455, 4
        %v1458 = vrot.slane %v1399, 5
        %v1459 = vsel %vm1409, %v1457, %v1458
        %v1460 = vrot.slane %v1341, 5
        %v1461 = vrot.slane %v1460, 4
        %v1462 = vrot.slane %v1388, 5
        %v1463 = vsel %vm1409, %v1461, %v1462
        %v1464 = vrot.slane %v1462, 4
        %v1465 = vrot.slane %v1342, 5
        %v1466 = vsel %vm1409, %v1464, %v1465
        %v1467 = vrot.slane %v1465, 4
        %v1468 = vrot.slane %v1400, 5
        %v1469 = vsel %vm1409, %v1467, %v1468
        %v1470 = vrot.slane %v1343, 5
        %v1471 = vrot.slane %v1470, 4
        %v1472 = vrot.slane %v1389, 5
        %v1473 = vsel %vm1409, %v1471, %v1472
        %v1474 = vrot.slane %v1472, 4
        %v1475 = vrot.slane %v1344, 5
        %v1476 = vsel %vm1409, %v1474, %v1475
        %v1477 = vrot.slane %v1475, 4
        %v1478 = vrot.slane %v1401, 5
        %v1479 = vsel %vm1409, %v1477, %v1478
        %v1480 = vrot.slane %v1345, 5
        %v1481 = vrot.slane %v1480, 4
        %v1482 = vrot.slane %v1390, 5
        %v1483 = vsel %vm1409, %v1481, %v1482
        %v1484 = vrot.slane %v1482, 4
        %v1485 = vrot.slane %v1346, 5
        %v1486 = vsel %vm1409, %v1484, %v1485
        %v1487 = vrot.slane %v1485, 4
        %v1488 = vrot.slane %v1402, 5
        %v1489 = vsel %vm1409, %v1487, %v1488
        %v1490 = vrot.slane %v1347, 5
        %v1491 = vrot.slane %v1490, 4
        %v1492 = vrot.slane %v1391, 5
        %v1493 = vsel %vm1409, %v1491, %v1492
        %v1494 = vrot.slane %v1492, 4
        %v1495 = vrot.slane %v1348, 5
        %v1496 = vsel %vm1409, %v1494, %v1495
        %v1497 = vrot.slane %v1495, 4
        %v1498 = vrot.slane %v1403, 5
        %v1499 = vsel %vm1409, %v1497, %v1498
        %v1500 = vrot.slane %v1349, 5
        %v1501 = vrot.slane %v1500, 4
        %v1502 = vrot.slane %v1392, 5
        %v1503 = vsel %vm1409, %v1501, %v1502
        %v1504 = vrot.slane %v1502, 4
        %v1505 = vrot.slane %v1350, 5
        %v1506 = vsel %vm1409, %v1504, %v1505
        %v1507 = vrot.slane %v1505, 4
        %v1508 = vrot.slane %v1404, 5
        %v1509 = vsel %vm1409, %v1507, %v1508
        %v1510 = vrot.slane %v1351, 5
        %v1511 = vrot.slane %v1510, 4
        %v1512 = vrot.slane %v1393, 5
        %v1513 = vsel %vm1409, %v1511, %v1512
        %v1514 = vrot.slane %v1512, 4
        %v1515 = vrot.slane %v1352, 5
        %v1516 = vsel %vm1409, %v1514, %v1515
        %v1517 = vrot.slane %v1515, 4
        %v1518 = vrot.slane %v1405, 5
        %v1519 = vsel %vm1409, %v1517, %v1518
        %v1520 = vrot.slane %v1353, 5
        %v1521 = vrot.slane %v1520, 4
        %v1522 = vrot.slane %v1394, 5
        %v1523 = vsel %vm1409, %v1521, %v1522
        %v1524 = vrot.slane %v1522, 4
        %v1525 = vrot.slane %v1354, 5
        %v1526 = vsel %vm1409, %v1524, %v1525
        %v1527 = vrot.slane %v1525, 4
        %v1528 = vrot.slane %v1406, 5
        %v1529 = vsel %vm1409, %v1527, %v1528
        %vm1530 = vcmask 1041408
        %vm1531 = vcmask 1045508
        %vm1532 = vmor %vm1530, %vm1531
        %v1533 = vrot.slane %v1331, 6
        %v1534 = vrot.slane %v1533, 4
        %v1535 = vrot.slane %v1383, 6
        %v1536 = vsel %vm1532, %v1534, %v1535
        %v1537 = vrot.slane %v1535, 4
        %v1538 = vrot.slane %v1332, 6
        %v1539 = vsel %vm1532, %v1537, %v1538
        %v1540 = vrot.slane %v1538, 4
        %v1541 = vrot.slane %v1395, 6
        %v1542 = vsel %vm1532, %v1540, %v1541
        %v1543 = vrot.slane %v1333, 6
        %v1544 = vrot.slane %v1543, 4
        %v1545 = vrot.slane %v1384, 6
        %v1546 = vsel %vm1532, %v1544, %v1545
        %v1547 = vrot.slane %v1545, 4
        %v1548 = vrot.slane %v1334, 6
        %v1549 = vsel %vm1532, %v1547, %v1548
        %v1550 = vrot.slane %v1548, 4
        %v1551 = vrot.slane %v1396, 6
        %v1552 = vsel %vm1532, %v1550, %v1551
        %v1553 = vrot.slane %v1335, 6
        %v1554 = vrot.slane %v1553, 4
        %v1555 = vrot.slane %v1385, 6
        %v1556 = vsel %vm1532, %v1554, %v1555
        %v1557 = vrot.slane %v1555, 4
        %v1558 = vrot.slane %v1336, 6
        %v1559 = vsel %vm1532, %v1557, %v1558
        %v1560 = vrot.slane %v1558, 4
        %v1561 = vrot.slane %v1397, 6
        %v1562 = vsel %vm1532, %v1560, %v1561
        %v1563 = vrot.slane %v1337, 6
        %v1564 = vrot.slane %v1563, 4
        %v1565 = vrot.slane %v1386, 6
        %v1566 = vsel %vm1532, %v1564, %v1565
        %v1567 = vrot.slane %v1565, 4
        %v1568 = vrot.slane %v1338, 6
        %v1569 = vsel %vm1532, %v1567, %v1568
        %v1570 = vrot.slane %v1568, 4
        %v1571 = vrot.slane %v1398, 6
        %v1572 = vsel %vm1532, %v1570, %v1571
        %v1573 = vrot.slane %v1339, 6
        %v1574 = vrot.slane %v1573, 4
        %v1575 = vrot.slane %v1387, 6
        %v1576 = vsel %vm1532, %v1574, %v1575
        %v1577 = vrot.slane %v1575, 4
        %v1578 = vrot.slane %v1340, 6
        %v1579 = vsel %vm1532, %v1577, %v1578
        %v1580 = vrot.slane %v1578, 4
        %v1581 = vrot.slane %v1399, 6
        %v1582 = vsel %vm1532, %v1580, %v1581
        %v1583 = vrot.slane %v1341, 6
        %v1584 = vrot.slane %v1583, 4
        %v1585 = vrot.slane %v1388, 6
        %v1586 = vsel %vm1532, %v1584, %v1585
        %v1587 = vrot.slane %v1585, 4
        %v1588 = vrot.slane %v1342, 6
        %v1589 = vsel %vm1532, %v1587, %v1588
        %v1590 = vrot.slane %v1588, 4
        %v1591 = vrot.slane %v1400, 6
        %v1592 = vsel %vm1532, %v1590, %v1591
        %v1593 = vrot.slane %v1343, 6
        %v1594 = vrot.slane %v1593, 4
        %v1595 = vrot.slane %v1389, 6
        %v1596 = vsel %vm1532, %v1594, %v1595
        %v1597 = vrot.slane %v1595, 4
        %v1598 = vrot.slane %v1344, 6
        %v1599 = vsel %vm1532, %v1597, %v1598
        %v1600 = vrot.slane %v1598, 4
        %v1601 = vrot.slane %v1401, 6
        %v1602 = vsel %vm1532, %v1600, %v1601
        %v1603 = vrot.slane %v1345, 6
        %v1604 = vrot.slane %v1603, 4
        %v1605 = vrot.slane %v1390, 6
        %v1606 = vsel %vm1532, %v1604, %v1605
        %v1607 = vrot.slane %v1605, 4
        %v1608 = vrot.slane %v1346, 6
        %v1609 = vsel %vm1532, %v1607, %v1608
        %v1610 = vrot.slane %v1608, 4
        %v1611 = vrot.slane %v1402, 6
        %v1612 = vsel %vm1532, %v1610, %v1611
        %v1613 = vrot.slane %v1347, 6
        %v1614 = vrot.slane %v1613, 4
        %v1615 = vrot.slane %v1391, 6
        %v1616 = vsel %vm1532, %v1614, %v1615
        %v1617 = vrot.slane %v1615, 4
        %v1618 = vrot.slane %v1348, 6
        %v1619 = vsel %vm1532, %v1617, %v1618
        %v1620 = vrot.slane %v1618, 4
        %v1621 = vrot.slane %v1403, 6
        %v1622 = vsel %vm1532, %v1620, %v1621
        %v1623 = vrot.slane %v1349, 6
        %v1624 = vrot.slane %v1623, 4
        %v1625 = vrot.slane %v1392, 6
        %v1626 = vsel %vm1532, %v1624, %v1625
        %v1627 = vrot.slane %v1625, 4
        %v1628 = vrot.slane %v1350, 6
        %v1629 = vsel %vm1532, %v1627, %v1628
        %v1630 = vrot.slane %v1628, 4
        %v1631 = vrot.slane %v1404, 6
        %v1632 = vsel %vm1532, %v1630, %v1631
        %v1633 = vrot.slane %v1351, 6
        %v1634 = vrot.slane %v1633, 4
        %v1635 = vrot.slane %v1393, 6
        %v1636 = vsel %vm1532, %v1634, %v1635
        %v1637 = vrot.slane %v1635, 4
        %v1638 = vrot.slane %v1352, 6
        %v1639 = vsel %vm1532, %v1637, %v1638
        %v1640 = vrot.slane %v1638, 4
        %v1641 = vrot.slane %v1405, 6
        %v1642 = vsel %vm1532, %v1640, %v1641
        %v1643 = vrot.slane %v1353, 6
        %v1644 = vrot.slane %v1643, 4
        %v1645 = vrot.slane %v1394, 6
        %v1646 = vsel %vm1532, %v1644, %v1645
        %v1647 = vrot.slane %v1645, 4
        %v1648 = vrot.slane %v1354, 6
        %v1649 = vsel %vm1532, %v1647, %v1648
        %v1650 = vrot.slane %v1648, 4
        %v1651 = vrot.slane %v1406, 6
        %v1652 = vsel %vm1532, %v1650, %v1651
        %v1655 = vcombine.high %v1355, %v1355
        %v1656 = vcombine.high %v1356, %v1356
        %v1657 = vrot.slane %v1355, 5
        %v1658 = vrot.slane %v1657, 4
        %v1659 = vrot.slane %v1655, 5
        %v1660 = vsel %vm1409, %v1658, %v1659
        %v1661 = vrot.slane %v1659, 4
        %v1662 = vrot.slane %v1356, 5
        %v1663 = vsel %vm1409, %v1661, %v1662
        %v1664 = vrot.slane %v1662, 4
        %v1665 = vrot.slane %v1656, 5
        %v1666 = vsel %vm1409, %v1664, %v1665
        %v1667 = vrot.slane %v1355, 6
        %v1668 = vrot.slane %v1667, 4
        %v1669 = vrot.slane %v1655, 6
        %v1670 = vsel %vm1532, %v1668, %v1669
        %v1671 = vrot.slane %v1669, 4
        %v1672 = vrot.slane %v1356, 6
        %v1673 = vsel %vm1532, %v1671, %v1672
        %v1674 = vrot.slane %v1672, 4
        %v1675 = vrot.slane %v1656, 6
        %v1676 = vsel %vm1532, %v1674, %v1675
        %v1679 = vcombine.high %v1357, %v1357
        %v1680 = vcombine.high %v1358, %v1358
        %v1681 = vrot.slane %v1357, 5
        %v1682 = vrot.slane %v1681, 4
        %v1683 = vrot.slane %v1679, 5
        %v1684 = vsel %vm1409, %v1682, %v1683
        %v1685 = vrot.slane %v1683, 4
        %v1686 = vrot.slane %v1358, 5
        %v1687 = vsel %vm1409, %v1685, %v1686
        %v1688 = vrot.slane %v1686, 4
        %v1689 = vrot.slane %v1680, 5
        %v1690 = vsel %vm1409, %v1688, %v1689
        %v1691 = vrot.slane %v1357, 6
        %v1692 = vrot.slane %v1691, 4
        %v1693 = vrot.slane %v1679, 6
        %v1694 = vsel %vm1532, %v1692, %v1693
        %v1695 = vrot.slane %v1693, 4
        %v1696 = vrot.slane %v1358, 6
        %v1697 = vsel %vm1532, %v1695, %v1696
        %v1698 = vrot.slane %v1696, 4
        %v1699 = vrot.slane %v1680, 6
        %v1700 = vsel %vm1532, %v1698, %v1699
        %v1701 = vcombine.low %v1331, %v1383
        %v1702 = vcombine.low %v1332, %v1333
        %v1703 = vcombine.low %v1384, %v1334
        %v1704 = vcombine.low %v1335, %v1385
        %v1705 = vcombine.low %v1336, %v1337
        %v1706 = vcombine.low %v1386, %v1338
        %v1707 = vcombine.low %v1339, %v1387
        %v1708 = vcombine.low %v1340, %v1341
        %v1709 = vcombine.low %v1388, %v1342
        %v1710 = vcombine.low %v1343, %v1389
        %v1711 = vcombine.low %v1344, %v1345
        %v1712 = vcombine.low %v1390, %v1346
        %v1713 = vcombine.low %v1347, %v1391
        %v1714 = vcombine.low %v1348, %v1349
        %v1715 = vcombine.low %v1392, %v1350
        %v1716 = vcombine.low %v1351, %v1393
        %v1717 = vcombine.low %v1352, %v1353
        %v1718 = vcombine.low %v1394, %v1354
        %v1737 = vcombine.low %v1413, %v1416
        %v1738 = vcombine.low %v1419, %v1423
        %v1739 = vcombine.low %v1426, %v1429
        %v1740 = vcombine.low %v1433, %v1436
        %v1741 = vcombine.low %v1439, %v1443
        %v1742 = vcombine.low %v1446, %v1449
        %v1743 = vcombine.low %v1453, %v1456
        %v1744 = vcombine.low %v1459, %v1463
        %v1745 = vcombine.low %v1466, %v1469
        %v1746 = vcombine.low %v1473, %v1476
        %v1747 = vcombine.low %v1479, %v1483
        %v1748 = vcombine.low %v1486, %v1489
        %v1749 = vcombine.low %v1493, %v1496
        %v1750 = vcombine.low %v1499, %v1503
        %v1751 = vcombine.low %v1506, %v1509
        %v1752 = vcombine.low %v1513, %v1516
        %v1753 = vcombine.low %v1519, %v1523
        %v1754 = vcombine.low %v1526, %v1529
        %1755 = vrot.lane.b32.xlu0 %v1737, 32
        %v1756 = vpop.permute.xlu0 %1755
        %1757 = vrot.lane.b32.xlu0 %v1738, 32
        %v1758 = vpop.permute.xlu0 %1757
        %1759 = vrot.lane.b32.xlu0 %v1739, 32
        %v1760 = vpop.permute.xlu0 %1759
        %1761 = vrot.lane.b32.xlu0 %v1740, 32
        %v1762 = vpop.permute.xlu0 %1761
        %1763 = vrot.lane.b32.xlu0 %v1741, 32
        %v1764 = vpop.permute.xlu0 %1763
        %1765 = vrot.lane.b32.xlu0 %v1742, 32
        %v1766 = vpop.permute.xlu0 %1765
        %1767 = vrot.lane.b32.xlu0 %v1743, 32
        %v1768 = vpop.permute.xlu0 %1767
        %1769 = vrot.lane.b32.xlu0 %v1744, 32
        %v1770 = vpop.permute.xlu0 %1769
        %1771 = vrot.lane.b32.xlu0 %v1745, 32
        %v1772 = vpop.permute.xlu0 %1771
        %1773 = vrot.lane.b32.xlu0 %v1746, 32
        %v1774 = vpop.permute.xlu0 %1773
        %1775 = vrot.lane.b32.xlu0 %v1747, 32
        %v1776 = vpop.permute.xlu0 %1775
        %1777 = vrot.lane.b32.xlu0 %v1748, 32
        %v1778 = vpop.permute.xlu0 %1777
        %1779 = vrot.lane.b32.xlu0 %v1749, 32
        %v1780 = vpop.permute.xlu0 %1779
        %1781 = vrot.lane.b32.xlu0 %v1750, 32
        %v1782 = vpop.permute.xlu0 %1781
        %1783 = vrot.lane.b32.xlu0 %v1751, 32
        %v1784 = vpop.permute.xlu0 %1783
        %1785 = vrot.lane.b32.xlu0 %v1752, 32
        %v1786 = vpop.permute.xlu0 %1785
        %1787 = vrot.lane.b32.xlu0 %v1753, 32
        %v1788 = vpop.permute.xlu0 %1787
        %1789 = vrot.lane.b32.xlu0 %v1754, 32
        %v1790 = vpop.permute.xlu0 %1789
        %v1809 = vcombine.low %v1536, %v1539
        %v1810 = vcombine.low %v1542, %v1546
        %v1811 = vcombine.low %v1549, %v1552
        %v1812 = vcombine.low %v1556, %v1559
        %v1813 = vcombine.low %v1562, %v1566
        %v1814 = vcombine.low %v1569, %v1572
        %v1815 = vcombine.low %v1576, %v1579
        %v1816 = vcombine.low %v1582, %v1586
        %v1817 = vcombine.low %v1589, %v1592
        %v1818 = vcombine.low %v1596, %v1599
        %v1819 = vcombine.low %v1602, %v1606
        %v1820 = vcombine.low %v1609, %v1612
        %v1821 = vcombine.low %v1616, %v1619
        %v1822 = vcombine.low %v1622, %v1626
        %v1823 = vcombine.low %v1629, %v1632
        %v1824 = vcombine.low %v1636, %v1639
        %v1825 = vcombine.low %v1642, %v1646
        %v1826 = vcombine.low %v1649, %v1652
        %1827 = vrot.lane.b32.xlu0 %v1809, 64
        %v1828 = vpop.permute.xlu0 %1827
        %1829 = vrot.lane.b32.xlu0 %v1810, 64
        %v1830 = vpop.permute.xlu0 %1829
        %1831 = vrot.lane.b32.xlu0 %v1811, 64
        %v1832 = vpop.permute.xlu0 %1831
        %1833 = vrot.lane.b32.xlu0 %v1812, 64
        %v1834 = vpop.permute.xlu0 %1833
        %1835 = vrot.lane.b32.xlu0 %v1813, 64
        %v1836 = vpop.permute.xlu0 %1835
        %1837 = vrot.lane.b32.xlu0 %v1814, 64
        %v1838 = vpop.permute.xlu0 %1837
        %1839 = vrot.lane.b32.xlu0 %v1815, 64
        %v1840 = vpop.permute.xlu0 %1839
        %1841 = vrot.lane.b32.xlu0 %v1816, 64
        %v1842 = vpop.permute.xlu0 %1841
        %1843 = vrot.lane.b32.xlu0 %v1817, 64
        %v1844 = vpop.permute.xlu0 %1843
        %1845 = vrot.lane.b32.xlu0 %v1818, 64
        %v1846 = vpop.permute.xlu0 %1845
        %1847 = vrot.lane.b32.xlu0 %v1819, 64
        %v1848 = vpop.permute.xlu0 %1847
        %1849 = vrot.lane.b32.xlu0 %v1820, 64
        %v1850 = vpop.permute.xlu0 %1849
        %1851 = vrot.lane.b32.xlu0 %v1821, 64
        %v1852 = vpop.permute.xlu0 %1851
        %1853 = vrot.lane.b32.xlu0 %v1822, 64
        %v1854 = vpop.permute.xlu0 %1853
        %1855 = vrot.lane.b32.xlu0 %v1823, 64
        %v1856 = vpop.permute.xlu0 %1855
        %1857 = vrot.lane.b32.xlu0 %v1824, 64
        %v1858 = vpop.permute.xlu0 %1857
        %1859 = vrot.lane.b32.xlu0 %v1825, 64
        %v1860 = vpop.permute.xlu0 %1859
        %1861 = vrot.lane.b32.xlu0 %v1826, 64
        %v1862 = vpop.permute.xlu0 %1861
        %v1881 = vcombine.low %v1333, %v1384
        %v1882 = vcombine.low %v1334, %v1335
        %v1883 = vcombine.low %v1385, %v1336
        %v1884 = vcombine.low %v1337, %v1386
        %v1885 = vcombine.low %v1338, %v1339
        %v1886 = vcombine.low %v1387, %v1340
        %v1887 = vcombine.low %v1341, %v1388
        %v1888 = vcombine.low %v1342, %v1343
        %v1889 = vcombine.low %v1389, %v1344
        %v1890 = vcombine.low %v1345, %v1390
        %v1891 = vcombine.low %v1346, %v1347
        %v1892 = vcombine.low %v1391, %v1348
        %v1893 = vcombine.low %v1349, %v1392
        %v1894 = vcombine.low %v1350, %v1351
        %v1895 = vcombine.low %v1393, %v1352
        %v1896 = vcombine.low %v1353, %v1394
        %v1897 = vcombine.low %v1354, %v1355
        %v1898 = vcombine.low %v1655, %v1356
        %1899 = vrot.lane.b32.xlu0 %v1881, 96
        %v1900 = vpop.permute.xlu0 %1899
        %1901 = vrot.lane.b32.xlu0 %v1882, 96
        %v1902 = vpop.permute.xlu0 %1901
        %1903 = vrot.lane.b32.xlu0 %v1883, 96
        %v1904 = vpop.permute.xlu0 %1903
        %1905 = vrot.lane.b32.xlu0 %v1884, 96
        %v1906 = vpop.permute.xlu0 %1905
        %1907 = vrot.lane.b32.xlu0 %v1885, 96
        %v1908 = vpop.permute.xlu0 %1907
        %1909 = vrot.lane.b32.xlu0 %v1886, 96
        %v1910 = vpop.permute.xlu0 %1909
        %1911 = vrot.lane.b32.xlu0 %v1887, 96
        %v1912 = vpop.permute.xlu0 %1911
        %1913 = vrot.lane.b32.xlu0 %v1888, 96
        %v1914 = vpop.permute.xlu0 %1913
        %1915 = vrot.lane.b32.xlu0 %v1889, 96
        %v1916 = vpop.permute.xlu0 %1915
        %1917 = vrot.lane.b32.xlu0 %v1890, 96
        %v1918 = vpop.permute.xlu0 %1917
        %1919 = vrot.lane.b32.xlu0 %v1891, 96
        %v1920 = vpop.permute.xlu0 %1919
        %1921 = vrot.lane.b32.xlu0 %v1892, 96
        %v1922 = vpop.permute.xlu0 %1921
        %1923 = vrot.lane.b32.xlu0 %v1893, 96
        %v1924 = vpop.permute.xlu0 %1923
        %1925 = vrot.lane.b32.xlu0 %v1894, 96
        %v1926 = vpop.permute.xlu0 %1925
        %1927 = vrot.lane.b32.xlu0 %v1895, 96
        %v1928 = vpop.permute.xlu0 %1927
        %1929 = vrot.lane.b32.xlu0 %v1896, 96
        %v1930 = vpop.permute.xlu0 %1929
        %1931 = vrot.lane.b32.xlu0 %v1897, 96
        %v1932 = vpop.permute.xlu0 %1931
        %1933 = vrot.lane.b32.xlu0 %v1898, 96
        %v1934 = vpop.permute.xlu0 %1933
        %v1953 = vcombine.low %v1423, %v1426
        %v1954 = vcombine.low %v1429, %v1433
        %v1955 = vcombine.low %v1436, %v1439
        %v1956 = vcombine.low %v1443, %v1446
        %v1957 = vcombine.low %v1449, %v1453
        %v1958 = vcombine.low %v1456, %v1459
        %v1959 = vcombine.low %v1463, %v1466
        %v1960 = vcombine.low %v1469, %v1473
        %v1961 = vcombine.low %v1476, %v1479
        %v1962 = vcombine.low %v1483, %v1486
        %v1963 = vcombine.low %v1489, %v1493
        %v1964 = vcombine.low %v1496, %v1499
        %v1965 = vcombine.low %v1503, %v1506
        %v1966 = vcombine.low %v1509, %v1513
        %v1967 = vcombine.low %v1516, %v1519
        %v1968 = vcombine.low %v1523, %v1526
        %v1969 = vcombine.low %v1529, %v1660
        %v1970 = vcombine.low %v1663, %v1666
        %v1989 = vcombine.low %v1546, %v1549
        %v1990 = vcombine.low %v1552, %v1556
        %v1991 = vcombine.low %v1559, %v1562
        %v1992 = vcombine.low %v1566, %v1569
        %v1993 = vcombine.low %v1572, %v1576
        %v1994 = vcombine.low %v1579, %v1582
        %v1995 = vcombine.low %v1586, %v1589
        %v1996 = vcombine.low %v1592, %v1596
        %v1997 = vcombine.low %v1599, %v1602
        %v1998 = vcombine.low %v1606, %v1609
        %v1999 = vcombine.low %v1612, %v1616
        %v2000 = vcombine.low %v1619, %v1622
        %v2001 = vcombine.low %v1626, %v1629
        %v2002 = vcombine.low %v1632, %v1636
        %v2003 = vcombine.low %v1639, %v1642
        %v2004 = vcombine.low %v1646, %v1649
        %v2005 = vcombine.low %v1652, %v1670
        %v2006 = vcombine.low %v1673, %v1676
        %2007 = vrot.lane.b32.xlu0 %v1989, 32
        %v2008 = vpop.permute.xlu0 %2007
        %2009 = vrot.lane.b32.xlu0 %v1990, 32
        %v2010 = vpop.permute.xlu0 %2009
        %2011 = vrot.lane.b32.xlu0 %v1991, 32
        %v2012 = vpop.permute.xlu0 %2011
        %2013 = vrot.lane.b32.xlu0 %v1992, 32
        %v2014 = vpop.permute.xlu0 %2013
        %2015 = vrot.lane.b32.xlu0 %v1993, 32
        %v2016 = vpop.permute.xlu0 %2015
        %2017 = vrot.lane.b32.xlu0 %v1994, 32
        %v2018 = vpop.permute.xlu0 %2017
        %2019 = vrot.lane.b32.xlu0 %v1995, 32
        %v2020 = vpop.permute.xlu0 %2019
        %2021 = vrot.lane.b32.xlu0 %v1996, 32
        %v2022 = vpop.permute.xlu0 %2021
        %2023 = vrot.lane.b32.xlu0 %v1997, 32
        %v2024 = vpop.permute.xlu0 %2023
        %2025 = vrot.lane.b32.xlu0 %v1998, 32
        %v2026 = vpop.permute.xlu0 %2025
        %2027 = vrot.lane.b32.xlu0 %v1999, 32
        %v2028 = vpop.permute.xlu0 %2027
        %2029 = vrot.lane.b32.xlu0 %v2000, 32
        %v2030 = vpop.permute.xlu0 %2029
        %2031 = vrot.lane.b32.xlu0 %v2001, 32
        %v2032 = vpop.permute.xlu0 %2031
        %2033 = vrot.lane.b32.xlu0 %v2002, 32
        %v2034 = vpop.permute.xlu0 %2033
        %2035 = vrot.lane.b32.xlu0 %v2003, 32
        %v2036 = vpop.permute.xlu0 %2035
        %2037 = vrot.lane.b32.xlu0 %v2004, 32
        %v2038 = vpop.permute.xlu0 %2037
        %2039 = vrot.lane.b32.xlu0 %v2005, 32
        %v2040 = vpop.permute.xlu0 %2039
        %2041 = vrot.lane.b32.xlu0 %v2006, 32
        %v2042 = vpop.permute.xlu0 %2041
        %v2061 = vcombine.low %v1355, %v1655
        %v2062 = vcombine.low %v1356, %v1357
        %v2063 = vcombine.low %v1679, %v1358
        %2064 = vrot.lane.b32.xlu0 %v1704, 64
        %v2065 = vpop.permute.xlu0 %2064
        %2066 = vrot.lane.b32.xlu0 %v1705, 64
        %v2067 = vpop.permute.xlu0 %2066
        %2068 = vrot.lane.b32.xlu0 %v1706, 64
        %v2069 = vpop.permute.xlu0 %2068
        %2070 = vrot.lane.b32.xlu0 %v1707, 64
        %v2071 = vpop.permute.xlu0 %2070
        %2072 = vrot.lane.b32.xlu0 %v1708, 64
        %v2073 = vpop.permute.xlu0 %2072
        %2074 = vrot.lane.b32.xlu0 %v1709, 64
        %v2075 = vpop.permute.xlu0 %2074
        %2076 = vrot.lane.b32.xlu0 %v1710, 64
        %v2077 = vpop.permute.xlu0 %2076
        %2078 = vrot.lane.b32.xlu0 %v1711, 64
        %v2079 = vpop.permute.xlu0 %2078
        %2080 = vrot.lane.b32.xlu0 %v1712, 64
        %v2081 = vpop.permute.xlu0 %2080
        %2082 = vrot.lane.b32.xlu0 %v1713, 64
        %v2083 = vpop.permute.xlu0 %2082
        %2084 = vrot.lane.b32.xlu0 %v1714, 64
        %v2085 = vpop.permute.xlu0 %2084
        %2086 = vrot.lane.b32.xlu0 %v1715, 64
        %v2087 = vpop.permute.xlu0 %2086
        %2088 = vrot.lane.b32.xlu0 %v1716, 64
        %v2089 = vpop.permute.xlu0 %2088
        %2090 = vrot.lane.b32.xlu0 %v1717, 64
        %v2091 = vpop.permute.xlu0 %2090
        %2092 = vrot.lane.b32.xlu0 %v1718, 64
        %v2093 = vpop.permute.xlu0 %2092
        %2094 = vrot.lane.b32.xlu0 %v2061, 64
        %v2095 = vpop.permute.xlu0 %2094
        %2096 = vrot.lane.b32.xlu0 %v2062, 64
        %v2097 = vpop.permute.xlu0 %2096
        %2098 = vrot.lane.b32.xlu0 %v2063, 64
        %v2099 = vpop.permute.xlu0 %2098
        %v2118 = vcombine.low %v1660, %v1663
        %v2119 = vcombine.low %v1666, %v1684
        %v2120 = vcombine.low %v1687, %v1690
        %2121 = vrot.lane.b32.xlu0 %v1740, 96
        %v2122 = vpop.permute.xlu0 %2121
        %2123 = vrot.lane.b32.xlu0 %v1741, 96
        %v2124 = vpop.permute.xlu0 %2123
        %2125 = vrot.lane.b32.xlu0 %v1742, 96
        %v2126 = vpop.permute.xlu0 %2125
        %2127 = vrot.lane.b32.xlu0 %v1743, 96
        %v2128 = vpop.permute.xlu0 %2127
        %2129 = vrot.lane.b32.xlu0 %v1744, 96
        %v2130 = vpop.permute.xlu0 %2129
        %2131 = vrot.lane.b32.xlu0 %v1745, 96
        %v2132 = vpop.permute.xlu0 %2131
        %2133 = vrot.lane.b32.xlu0 %v1746, 96
        %v2134 = vpop.permute.xlu0 %2133
        %2135 = vrot.lane.b32.xlu0 %v1747, 96
        %v2136 = vpop.permute.xlu0 %2135
        %2137 = vrot.lane.b32.xlu0 %v1748, 96
        %v2138 = vpop.permute.xlu0 %2137
        %2139 = vrot.lane.b32.xlu0 %v1749, 96
        %v2140 = vpop.permute.xlu0 %2139
        %2141 = vrot.lane.b32.xlu0 %v1750, 96
        %v2142 = vpop.permute.xlu0 %2141
        %2143 = vrot.lane.b32.xlu0 %v1751, 96
        %v2144 = vpop.permute.xlu0 %2143
        %2145 = vrot.lane.b32.xlu0 %v1752, 96
        %v2146 = vpop.permute.xlu0 %2145
        %2147 = vrot.lane.b32.xlu0 %v1753, 96
        %v2148 = vpop.permute.xlu0 %2147
        %2149 = vrot.lane.b32.xlu0 %v1754, 96
        %v2150 = vpop.permute.xlu0 %2149
        %2151 = vrot.lane.b32.xlu0 %v2118, 96
        %v2152 = vpop.permute.xlu0 %2151
        %2153 = vrot.lane.b32.xlu0 %v2119, 96
        %v2154 = vpop.permute.xlu0 %2153
        %2155 = vrot.lane.b32.xlu0 %v2120, 96
        %v2156 = vpop.permute.xlu0 %2155
        %v2175 = vcombine.low %v1670, %v1673
        %v2176 = vcombine.low %v1676, %v1694
        %v2177 = vcombine.low %v1697, %v1700
        %vm2196 = vcmask 261120
        %v2197 = vsel %vm2196, %v1701, %v1756
        %v2198 = vsel %vm2196, %v1702, %v1758
        %v2199 = vsel %vm2196, %v1703, %v1760
        %v2200 = vsel %vm2196, %v1704, %v1762
        %v2201 = vsel %vm2196, %v1705, %v1764
        %v2202 = vsel %vm2196, %v1706, %v1766
        %v2203 = vsel %vm2196, %v1707, %v1768
        %v2204 = vsel %vm2196, %v1708, %v1770
        %v2205 = vsel %vm2196, %v1709, %v1772
        %v2206 = vsel %vm2196, %v1710, %v1774
        %v2207 = vsel %vm2196, %v1711, %v1776
        %v2208 = vsel %vm2196, %v1712, %v1778
        %v2209 = vsel %vm2196, %v1713, %v1780
        %v2210 = vsel %vm2196, %v1714, %v1782
        %v2211 = vsel %vm2196, %v1715, %v1784
        %v2212 = vsel %vm2196, %v1716, %v1786
        %v2213 = vsel %vm2196, %v1717, %v1788
        %v2214 = vsel %vm2196, %v1718, %v1790
        %vm2215 = vcmask 523264
        %v2216 = vsel %vm2215, %v2197, %v1828
        %v2217 = vsel %vm2215, %v2198, %v1830
        %v2218 = vsel %vm2215, %v2199, %v1832
        %v2219 = vsel %vm2215, %v2200, %v1834
        %v2220 = vsel %vm2215, %v2201, %v1836
        %v2221 = vsel %vm2215, %v2202, %v1838
        %v2222 = vsel %vm2215, %v2203, %v1840
        %v2223 = vsel %vm2215, %v2204, %v1842
        %v2224 = vsel %vm2215, %v2205, %v1844
        %v2225 = vsel %vm2215, %v2206, %v1846
        %v2226 = vsel %vm2215, %v2207, %v1848
        %v2227 = vsel %vm2215, %v2208, %v1850
        %v2228 = vsel %vm2215, %v2209, %v1852
        %v2229 = vsel %vm2215, %v2210, %v1854
        %v2230 = vsel %vm2215, %v2211, %v1856
        %v2231 = vsel %vm2215, %v2212, %v1858
        %v2232 = vsel %vm2215, %v2213, %v1860
        %v2233 = vsel %vm2215, %v2214, %v1862
        %vm2234 = vcmask 785408
        %v2235 = vsel %vm2234, %v2216, %v1900
        %v2236 = vsel %vm2234, %v2217, %v1902
        %v2237 = vsel %vm2234, %v2218, %v1904
        %v2238 = vsel %vm2234, %v2219, %v1906
        %v2239 = vsel %vm2234, %v2220, %v1908
        %v2240 = vsel %vm2234, %v2221, %v1910
        %v2241 = vsel %vm2234, %v2222, %v1912
        %v2242 = vsel %vm2234, %v2223, %v1914
        %v2243 = vsel %vm2234, %v2224, %v1916
        %v2244 = vsel %vm2234, %v2225, %v1918
        %v2245 = vsel %vm2234, %v2226, %v1920
        %v2246 = vsel %vm2234, %v2227, %v1922
        %v2247 = vsel %vm2234, %v2228, %v1924
        %v2248 = vsel %vm2234, %v2229, %v1926
        %v2249 = vsel %vm2234, %v2230, %v1928
        %v2250 = vsel %vm2234, %v2231, %v1930
        %v2251 = vsel %vm2234, %v2232, %v1932
        %v2252 = vsel %vm2234, %v2233, %v1934
        %v2253 = vsel %vm2196, %v1953, %v2008
        %v2254 = vsel %vm2196, %v1954, %v2010
        %v2255 = vsel %vm2196, %v1955, %v2012
        %v2256 = vsel %vm2196, %v1956, %v2014
        %v2257 = vsel %vm2196, %v1957, %v2016
        %v2258 = vsel %vm2196, %v1958, %v2018
        %v2259 = vsel %vm2196, %v1959, %v2020
        %v2260 = vsel %vm2196, %v1960, %v2022
        %v2261 = vsel %vm2196, %v1961, %v2024
        %v2262 = vsel %vm2196, %v1962, %v2026
        %v2263 = vsel %vm2196, %v1963, %v2028
        %v2264 = vsel %vm2196, %v1964, %v2030
        %v2265 = vsel %vm2196, %v1965, %v2032
        %v2266 = vsel %vm2196, %v1966, %v2034
        %v2267 = vsel %vm2196, %v1967, %v2036
        %v2268 = vsel %vm2196, %v1968, %v2038
        %v2269 = vsel %vm2196, %v1969, %v2040
        %v2270 = vsel %vm2196, %v1970, %v2042
        %v2271 = vsel %vm2215, %v2253, %v2065
        %v2272 = vsel %vm2215, %v2254, %v2067
        %v2273 = vsel %vm2215, %v2255, %v2069
        %v2274 = vsel %vm2215, %v2256, %v2071
        %v2275 = vsel %vm2215, %v2257, %v2073
        %v2276 = vsel %vm2215, %v2258, %v2075
        %v2277 = vsel %vm2215, %v2259, %v2077
        %v2278 = vsel %vm2215, %v2260, %v2079
        %v2279 = vsel %vm2215, %v2261, %v2081
        %v2280 = vsel %vm2215, %v2262, %v2083
        %v2281 = vsel %vm2215, %v2263, %v2085
        %v2282 = vsel %vm2215, %v2264, %v2087
        %v2283 = vsel %vm2215, %v2265, %v2089
        %v2284 = vsel %vm2215, %v2266, %v2091
        %v2285 = vsel %vm2215, %v2267, %v2093
        %v2286 = vsel %vm2215, %v2268, %v2095
        %v2287 = vsel %vm2215, %v2269, %v2097
        %v2288 = vsel %vm2215, %v2270, %v2099
        %v2289 = vsel %vm2234, %v2271, %v2122
        %v2290 = vsel %vm2234, %v2272, %v2124
        %v2291 = vsel %vm2234, %v2273, %v2126
        %v2292 = vsel %vm2234, %v2274, %v2128
        %v2293 = vsel %vm2234, %v2275, %v2130
        %v2294 = vsel %vm2234, %v2276, %v2132
        %v2295 = vsel %vm2234, %v2277, %v2134
        %v2296 = vsel %vm2234, %v2278, %v2136
        %v2297 = vsel %vm2234, %v2279, %v2138
        %v2298 = vsel %vm2234, %v2280, %v2140
        %v2299 = vsel %vm2234, %v2281, %v2142
        %v2300 = vsel %vm2234, %v2282, %v2144
        %v2301 = vsel %vm2234, %v2283, %v2146
        %v2302 = vsel %vm2234, %v2284, %v2148
        %v2303 = vsel %vm2234, %v2285, %v2150
        %v2304 = vsel %vm2234, %v2286, %v2152
        %v2305 = vsel %vm2234, %v2287, %v2154
        %v2306 = vsel %vm2234, %v2288, %v2156
        %v2307 = vpack.c.bf16 %v2236, %v2235
        %v2308 = vpack.c.bf16 %v2290, %v2289
        %v2309 = vpack.c.bf16 %v1813, %v1812
        %v2310 = vpack.c.bf16 %v2238, %v2237
        %v2311 = vpack.c.bf16 %v2292, %v2291
        %v2312 = vpack.c.bf16 %v1815, %v1814
        %v2313 = vpack.c.bf16 %v2240, %v2239
        %v2314 = vpack.c.bf16 %v2294, %v2293
        %v2315 = vpack.c.bf16 %v1817, %v1816
        %v2316 = vpack.c.bf16 %v2242, %v2241
        %v2317 = vpack.c.bf16 %v2296, %v2295
        %v2318 = vpack.c.bf16 %v1819, %v1818
        %v2319 = vpack.c.bf16 %v2244, %v2243
        %v2320 = vpack.c.bf16 %v2298, %v2297
        %v2321 = vpack.c.bf16 %v1821, %v1820
        %v2322 = vpack.c.bf16 %v2246, %v2245
        %v2323 = vpack.c.bf16 %v2300, %v2299
        %v2324 = vpack.c.bf16 %v1823, %v1822
        %v2325 = vpack.c.bf16 %v2248, %v2247
        %v2326 = vpack.c.bf16 %v2302, %v2301
        %v2327 = vpack.c.bf16 %v1825, %v1824
        %v2328 = vpack.c.bf16 %v2250, %v2249
        %v2329 = vpack.c.bf16 %v2304, %v2303
        %v2330 = vpack.c.bf16 %v2175, %v1826
        %v2331 = vpack.c.bf16 %v2252, %v2251
        %v2332 = vpack.c.bf16 %v2306, %v2305
        %v2333 = vpack.c.bf16 %v2177, %v2176
        %v2334 = vld [vmem:[%s3] sm:$0xf]
        %v2335 = vld [vmem:[%s3 + $0x4] sm:$0xf]
        %v2336 = vld [vmem:[%s3 + $0x8] sm:$0xf]
        %v2337 = vld [vmem:[%s3 + $0xc] sm:$0xf]
        %v2338 = vld [vmem:[%s3 + $0x10] sm:$0xf]
        %v2339 = vld [vmem:[%s3 + $0x14] sm:$0xf]
        %v2340 = vld [vmem:[%s3 + $0x18] sm:$0xf]
        %v2341 = vld [vmem:[%s3 + $0x1c] sm:$0xf]
        %v2342 = vld [vmem:[%s3 + $0x20] sm:$0xf]
        %v2343 = vld [vmem:[%s3 + $0x24] sm:$0xf]
        %v2344 = vld [vmem:[%s3 + $0x28] sm:$0xf]
        %v2345 = vld [vmem:[%s3 + $0x2c] sm:$0xf]
        %v2346 = vld [vmem:[%s3 + $0x30] sm:$0xf]
        %v2347 = vld [vmem:[%s3 + $0x34] sm:$0xf]
        %v2348 = vld [vmem:[%s3 + $0x38] sm:$0xf]
        %v2349 = vld [vmem:[%s3 + $0x3c] sm:$0xf]
        %v2350 = vld [vmem:[%s3 + $0x40] sm:$0xf]
        %v2351 = vld [vmem:[%s3 + $0x44] sm:$0xf]
        %v2352 = vld [vmem:[%s3 + $0x48] sm:$0xf]
        %v2353 = vld [vmem:[%s3 + $0x4c] sm:$0xf]
        %v2354 = vld [vmem:[%s3 + $0x50] sm:$0xf]
        %v2355 = vld [vmem:[%s3 + $0x54] sm:$0xf]
        %v2356 = vld [vmem:[%s3 + $0x58] sm:$0xf]
        %v2357 = vld [vmem:[%s3 + $0x5c] sm:$0xf]
        %v2358 = vld [vmem:[%s3 + $0x60] sm:$0xf]
        %v2359 = vld [vmem:[%s3 + $0x64] sm:$0xf]
        %v2360 = vld [vmem:[%s3 + $0x68] sm:$0xf]
        %v2361 = vld [vmem:[%s3 + $0x6c] sm:$0xf]
        %v2362 = vld [vmem:[%s3 + $0x70] sm:$0xf]
        %v2363 = vld [vmem:[%s3 + $0x74] sm:$0xf]
        %v2364 = vld [vmem:[%s3 + $0x78] sm:$0xf]
        %v2365 = vld [vmem:[%s3 + $0x7c] sm:$0xf]
        %v2366 = vld [vmem:[%s3 + $0x80] sm:$0xf]
        %v2367 = vld [vmem:[%s3 + $0x84] sm:$0xf]
        %v2368 = vld [vmem:[%s3 + $0x88] sm:$0xf]
        %v2369 = vld [vmem:[%s3 + $0x8c] sm:$0xf]
        %v2370 = vld [vmem:[%s4] sm:$0x1]
        %v2372 = vlaneseq
        %v2373 = vshrl.u32 %v2372, 7
        %v2374 = vsub.s32 0, %v2373
        %v2375 = vrot.slane %v2370, %v2374
        %v2413 = vunpack.c.l.b16 %v2334
        %v2414 = vunpack.c.l.b16 %v2335
        %v2415 = vunpack.c.l.b16 %v2336
        %v2416 = vunpack.c.l.b16 %v2337
        %v2417 = vunpack.c.l.b16 %v2338
        %v2418 = vunpack.c.l.b16 %v2339
        %v2419 = vunpack.c.l.b16 %v2340
        %v2420 = vunpack.c.l.b16 %v2341
        %v2421 = vunpack.c.l.b16 %v2342
        %v2422 = vunpack.c.l.b16 %v2343
        %v2423 = vunpack.c.l.b16 %v2344
        %v2424 = vunpack.c.l.b16 %v2345
        %v2425 = vunpack.c.l.b16 %v2346
        %v2426 = vunpack.c.l.b16 %v2347
        %v2427 = vunpack.c.l.b16 %v2348
        %v2428 = vunpack.c.l.b16 %v2349
        %v2429 = vunpack.c.l.b16 %v2350
        %v2430 = vunpack.c.l.b16 %v2351
        %v2431 = vunpack.c.l.b16 %v2352
        %v2432 = vunpack.c.l.b16 %v2353
        %v2433 = vunpack.c.l.b16 %v2354
        %v2434 = vunpack.c.l.b16 %v2355
        %v2435 = vunpack.c.l.b16 %v2356
        %v2436 = vunpack.c.l.b16 %v2357
        %v2437 = vunpack.c.l.b16 %v2358
        %v2438 = vunpack.c.l.b16 %v2359
        %v2439 = vunpack.c.l.b16 %v2360
        %v2440 = vunpack.c.l.b16 %v2361
        %v2441 = vunpack.c.l.b16 %v2362
        %v2442 = vunpack.c.l.b16 %v2363
        %v2443 = vunpack.c.l.b16 %v2364
        %v2444 = vunpack.c.l.b16 %v2365
        %v2445 = vunpack.c.l.b16 %v2366
        %v2446 = vunpack.c.l.b16 %v2367
        %v2447 = vunpack.c.l.b16 %v2368
        %v2448 = vunpack.c.l.b16 %v2369
        %v2449 = vpack.c.b16 %v2414, %v2413
        %v2450 = vpack.c.b16 %v2416, %v2415
        %v2451 = vpack.c.b16 %v2418, %v2417
        %v2452 = vpack.c.b16 %v2420, %v2419
        %v2453 = vpack.c.b16 %v2422, %v2421
        %v2454 = vpack.c.b16 %v2424, %v2423
        %v2455 = vpack.c.b16 %v2426, %v2425
        %v2456 = vpack.c.b16 %v2428, %v2427
        %v2457 = vpack.c.b16 %v2430, %v2429
        %v2458 = vpack.c.b16 %v2432, %v2431
        %v2459 = vpack.c.b16 %v2434, %v2433
        %v2460 = vpack.c.b16 %v2436, %v2435
        %v2461 = vpack.c.b16 %v2438, %v2437
        %v2462 = vpack.c.b16 %v2440, %v2439
        %v2463 = vpack.c.b16 %v2442, %v2441
        %v2464 = vpack.c.b16 %v2444, %v2443
        %v2465 = vpack.c.b16 %v2446, %v2445
        %v2466 = vpack.c.b16 %v2448, %v2447
        %v2486 = vsel %vm2196, %v2309, 0
        %v2489 = vsel %vm2196, %v2312, 0
        %v2492 = vsel %vm2196, %v2315, 0
        %v2495 = vsel %vm2196, %v2318, 0
        %v2498 = vsel %vm2196, %v2321, 0
        %v2501 = vsel %vm2196, %v2324, 0
        %v2504 = vsel %vm2196, %v2327, 0
        %v2507 = vsel %vm2196, %v2330, 0
        %v2510 = vsel %vm2196, %v2333, 0
        %2512 = vmatprep.subr.bf16.mxu0 0
        %2513 = vmatpush1.bf16.msra.mxu0 %v2456
        %2514 = vmatprep.subr.bf16.mxu0 0
        %2515 = vmatpush1.bf16.msra.mxu0 %v2455
        %2516 = vmatprep.subr.bf16.mxu0 0
        %2517 = vmatpush1.bf16.msra.mxu0 %v2454
        %2518 = vmatprep.subr.bf16.mxu0 0
        %2519 = vmatpush1.bf16.msra.mxu0 %v2453
        %2520 = vmatprep.subr.bf16.mxu0 0
        %2521 = vmatpush1.bf16.msra.mxu0 %v2452
        %2522 = vmatprep.subr.bf16.mxu0 0
        %2523 = vmatpush1.bf16.msra.mxu0 %v2451
        %2524 = vmatprep.subr.bf16.mxu0 0
        %2525 = vmatpush1.bf16.msra.mxu0 %v2450
        %2526 = vmatprep.subr.bf16.mxu0 0
        %2527 = vmatpush1.bf16.msra.mxu0 %v2449
        %2528 = vmatprep.subr.bf16.mxu0 0
        %2529 = vmatpush2.bf16.msra.mxu0 %v2464
        %2530 = vmatprep.subr.bf16.mxu0 0
        %2531 = vmatpush2.bf16.msra.mxu0 %v2463
        %2532 = vmatprep.subr.bf16.mxu0 0
        %2533 = vmatpush2.bf16.msra.mxu0 %v2462
        %2534 = vmatprep.subr.bf16.mxu0 0
        %2535 = vmatpush2.bf16.msra.mxu0 %v2461
        %2536 = vmatprep.subr.bf16.mxu0 0
        %2537 = vmatpush2.bf16.msra.mxu0 %v2460
        %2538 = vmatprep.subr.bf16.mxu0 0
        %2539 = vmatpush2.bf16.msra.mxu0 %v2459
        %2540 = vmatprep.subr.bf16.mxu0 0
        %2541 = vmatpush2.bf16.msra.mxu0 %v2458
        %2542 = vmatprep.subr.bf16.mxu0 0
        %2543 = vmatpush2.bf16.msra.mxu0 %v2457
        %2544 = vmatprep.mubr.bf16.mxu0 %v2308
        %2545 = vmatmul.mubr.bf16.gmra.mxu0 %v2307
        %v2546 = vpop.f32.mrf.mxu0
        %v2547 = vadd.f32 %v2375, %v2546
        %v2548 = vpop.f32.mrf.mxu0
        %v2549 = vpop.f32.mrf.mxu0
        %v2550 = vadd.f32 %v2375, %v2549
        %v2551 = vpop.f32.mrf.mxu0
        %2552 = vmatprep.mubr.bf16.mxu0 %v2311
        %2553 = vmatmul.mubr.bf16.gmra.mxu0 %v2310
        %v2554 = vpop.f32.mrf.mxu0
        %v2555 = vadd.f32 %v2375, %v2554
        %v2556 = vpop.f32.mrf.mxu0
        %v2557 = vpop.f32.mrf.mxu0
        %v2558 = vadd.f32 %v2375, %v2557
        %v2559 = vpop.f32.mrf.mxu0
        %2560 = vmatprep.mubr.bf16.mxu0 %v2314
        %2561 = vmatmul.mubr.bf16.gmra.mxu0 %v2313
        %v2562 = vpop.f32.mrf.mxu0
        %v2563 = vadd.f32 %v2375, %v2562
        %v2564 = vpop.f32.mrf.mxu0
        %v2565 = vpop.f32.mrf.mxu0
        %v2566 = vadd.f32 %v2375, %v2565
        %v2567 = vpop.f32.mrf.mxu0
        %2568 = vmatprep.mubr.bf16.mxu0 %v2317
        %2569 = vmatmul.mubr.bf16.gmra.mxu0 %v2316
        %v2570 = vpop.f32.mrf.mxu0
        %v2571 = vadd.f32 %v2375, %v2570
        %v2572 = vpop.f32.mrf.mxu0
        %v2573 = vpop.f32.mrf.mxu0
        %v2574 = vadd.f32 %v2375, %v2573
        %v2575 = vpop.f32.mrf.mxu0
        %2576 = vmatprep.mubr.bf16.mxu0 %v2320
        %2577 = vmatmul.mubr.bf16.gmra.mxu0 %v2319
        %v2578 = vpop.f32.mrf.mxu0
        %v2579 = vadd.f32 %v2375, %v2578
        %v2580 = vpop.f32.mrf.mxu0
        %v2581 = vpop.f32.mrf.mxu0
        %v2582 = vadd.f32 %v2375, %v2581
        %v2583 = vpop.f32.mrf.mxu0
        %2584 = vmatprep.mubr.bf16.mxu0 %v2323
        %2585 = vmatmul.mubr.bf16.gmra.mxu0 %v2322
        %v2586 = vpop.f32.mrf.mxu0
        %v2587 = vadd.f32 %v2375, %v2586
        %v2588 = vpop.f32.mrf.mxu0
        %v2589 = vpop.f32.mrf.mxu0
        %v2590 = vadd.f32 %v2375, %v2589
        %v2591 = vpop.f32.mrf.mxu0
        %2592 = vmatprep.mubr.bf16.mxu0 %v2326
        %2593 = vmatmul.mubr.bf16.gmra.mxu0 %v2325
        %v2594 = vpop.f32.mrf.mxu0
        %v2595 = vadd.f32 %v2375, %v2594
        %v2596 = vpop.f32.mrf.mxu0
        %v2597 = vpop.f32.mrf.mxu0
        %v2598 = vadd.f32 %v2375, %v2597
        %v2599 = vpop.f32.mrf.mxu0
        %2600 = vmatprep.mubr.bf16.mxu0 %v2329
        %2601 = vmatmul.mubr.bf16.gmra.mxu0 %v2328
        %v2602 = vpop.f32.mrf.mxu0
        %v2603 = vadd.f32 %v2375, %v2602
        %v2604 = vpop.f32.mrf.mxu0
        %v2605 = vpop.f32.mrf.mxu0
        %v2606 = vadd.f32 %v2375, %v2605
        %v2607 = vpop.f32.mrf.mxu0
        %2608 = vmatprep.mubr.bf16.mxu0 %v2332
        %2609 = vmatmul.mubr.bf16.gmra.mxu0 %v2331
        %v2610 = vpop.f32.mrf.mxu0
        %v2611 = vadd.f32 %v2375, %v2610
        %v2612 = vpop.f32.mrf.mxu0
        %v2613 = vpop.f32.mrf.mxu0
        %v2614 = vadd.f32 %v2375, %v2613
        %v2615 = vpop.f32.mrf.mxu0
        %2616 = vdwg.mxu0
        %2617 = vmatprep.subr.bf16.mxu0 0
        %2618 = vmatpush1.bf16.msra.mxu0 0
        %2619 = vmatprep.subr.bf16.mxu0 0
        %2620 = vmatpush1.bf16.msra.mxu0 0
        %2621 = vmatprep.subr.bf16.mxu0 0
        %2622 = vmatpush1.bf16.msra.mxu0 0
        %2623 = vmatprep.subr.bf16.mxu0 0
        %2624 = vmatpush1.bf16.msra.mxu0 0
        %2625 = vmatprep.subr.bf16.mxu0 0
        %2626 = vmatpush1.bf16.msra.mxu0 0
        %2627 = vmatprep.subr.bf16.mxu0 0
        %2628 = vmatpush1.bf16.msra.mxu0 0
        %2629 = vmatprep.subr.bf16.mxu0 0
        %2630 = vmatpush1.bf16.msra.mxu0 %v2466
        %2631 = vmatprep.subr.bf16.mxu0 0
        %2632 = vmatpush1.bf16.msra.mxu0 %v2465
        %2633 = vmatprep.subr.bf16.mxu0 0
        %2634 = vmatpush2.bf16.msra.mxu0 0
        %2635 = vmatprep.subr.bf16.mxu0 0
        %2636 = vmatpush2.bf16.msra.mxu0 0
        %2637 = vmatprep.subr.bf16.mxu0 0
        %2638 = vmatpush2.bf16.msra.mxu0 0
        %2639 = vmatprep.subr.bf16.mxu0 0
        %2640 = vmatpush2.bf16.msra.mxu0 0
        %2641 = vmatprep.subr.bf16.mxu0 0
        %2642 = vmatpush2.bf16.msra.mxu0 0
        %2643 = vmatprep.subr.bf16.mxu0 0
        %2644 = vmatpush2.bf16.msra.mxu0 0
        %2645 = vmatprep.subr.bf16.mxu0 0
        %2646 = vmatpush2.bf16.msra.mxu0 0
        %2647 = vmatprep.subr.bf16.mxu0 0
        %2648 = vmatpush2.bf16.msra.mxu0 0
        %2649 = vmatprep.mubr.bf16.mxu0 0
        %2650 = vmatmul.mubr.bf16.gmra.mxu0 %v2486
        %v2651 = vpop.f32.mrf.mxu0
        %v2652 = vadd.f32 %v2547, %v2651
        %v2653 = vpop.f32.mrf.mxu0
        %v2654 = vpop.f32.mrf.mxu0
        %v2655 = vadd.f32 %v2550, %v2654
        %v2656 = vpop.f32.mrf.mxu0
        %2657 = vmatprep.mubr.bf16.mxu0 0
        %2658 = vmatmul.mubr.bf16.gmra.mxu0 %v2489
        %v2659 = vpop.f32.mrf.mxu0
        %v2660 = vadd.f32 %v2555, %v2659
        %v2661 = vpop.f32.mrf.mxu0
        %v2662 = vpop.f32.mrf.mxu0
        %v2663 = vadd.f32 %v2558, %v2662
        %v2664 = vpop.f32.mrf.mxu0
        %2665 = vmatprep.mubr.bf16.mxu0 0
        %2666 = vmatmul.mubr.bf16.gmra.mxu0 %v2492
        %v2667 = vpop.f32.mrf.mxu0
        %v2668 = vadd.f32 %v2563, %v2667
        %v2669 = vpop.f32.mrf.mxu0
        %v2670 = vpop.f32.mrf.mxu0
        %v2671 = vadd.f32 %v2566, %v2670
        %v2672 = vpop.f32.mrf.mxu0
        %2673 = vmatprep.mubr.bf16.mxu0 0
        %2674 = vmatmul.mubr.bf16.gmra.mxu0 %v2495
        %v2675 = vpop.f32.mrf.mxu0
        %v2676 = vadd.f32 %v2571, %v2675
        %v2677 = vpop.f32.mrf.mxu0
        %v2678 = vpop.f32.mrf.mxu0
        %v2679 = vadd.f32 %v2574, %v2678
        %v2680 = vpop.f32.mrf.mxu0
        %2681 = vmatprep.mubr.bf16.mxu0 0
        %2682 = vmatmul.mubr.bf16.gmra.mxu0 %v2498
        %v2683 = vpop.f32.mrf.mxu0
        %v2684 = vadd.f32 %v2579, %v2683
        %v2685 = vpop.f32.mrf.mxu0
        %v2686 = vpop.f32.mrf.mxu0
        %v2687 = vadd.f32 %v2582, %v2686
        %v2688 = vpop.f32.mrf.mxu0
        %2689 = vmatprep.mubr.bf16.mxu0 0
        %2690 = vmatmul.mubr.bf16.gmra.mxu0 %v2501
        %v2691 = vpop.f32.mrf.mxu0
        %v2692 = vadd.f32 %v2587, %v2691
        %v2693 = vpop.f32.mrf.mxu0
        %v2694 = vpop.f32.mrf.mxu0
        %v2695 = vadd.f32 %v2590, %v2694
        %v2696 = vpop.f32.mrf.mxu0
        %2697 = vmatprep.mubr.bf16.mxu0 0
        %2698 = vmatmul.mubr.bf16.gmra.mxu0 %v2504
        %v2699 = vpop.f32.mrf.mxu0
        %v2700 = vadd.f32 %v2595, %v2699
        %v2701 = vpop.f32.mrf.mxu0
        %v2702 = vpop.f32.mrf.mxu0
        %v2703 = vadd.f32 %v2598, %v2702
        %v2704 = vpop.f32.mrf.mxu0
        %2705 = vmatprep.mubr.bf16.mxu0 0
        %2706 = vmatmul.mubr.bf16.gmra.mxu0 %v2507
        %v2707 = vpop.f32.mrf.mxu0
        %v2708 = vadd.f32 %v2603, %v2707
        %v2709 = vpop.f32.mrf.mxu0
        %v2710 = vpop.f32.mrf.mxu0
        %v2711 = vadd.f32 %v2606, %v2710
        %v2712 = vpop.f32.mrf.mxu0
        %2713 = vmatprep.mubr.bf16.mxu0 0
        %2714 = vmatmul.mubr.bf16.gmra.mxu0 %v2510
        %v2715 = vpop.f32.mrf.mxu0
        %v2716 = vadd.f32 %v2611, %v2715
        %v2717 = vpop.f32.mrf.mxu0
        %v2718 = vpop.f32.mrf.mxu0
        %v2719 = vadd.f32 %v2614, %v2718
        %v2720 = vpop.f32.mrf.mxu0
        %2721 = vdwg.mxu0
        %v2722 = vmax.f32 %v2652, 0.0
        %v2723 = vmax.f32 %v2655, 0.0
        %v2724 = vmax.f32 %v2660, 0.0
        %v2725 = vmax.f32 %v2663, 0.0
        %v2726 = vmax.f32 %v2668, 0.0
        %v2727 = vmax.f32 %v2671, 0.0
        %v2728 = vmax.f32 %v2676, 0.0
        %v2729 = vmax.f32 %v2679, 0.0
        %v2730 = vmax.f32 %v2684, 0.0
        %v2731 = vmax.f32 %v2687, 0.0
        %v2732 = vmax.f32 %v2692, 0.0
        %v2733 = vmax.f32 %v2695, 0.0
        %v2734 = vmax.f32 %v2700, 0.0
        %v2735 = vmax.f32 %v2703, 0.0
        %v2736 = vmax.f32 %v2708, 0.0
        %v2737 = vmax.f32 %v2711, 0.0
        %v2738 = vmax.f32 %v2716, 0.0
        %v2739 = vmax.f32 %v2719, 0.0
        %v2758 = vcombine.high %v2722, %v2722
        %v2760 = vunpack.c.l.s4 1983009808
        %v2761 = vunpack.c.0.s8 %v2760
        %v2762 = vlaneseq
        %v2763 = vshrl.u32 %v2762, 7
        %v2764 = vsub.s32 %v2761, %v2763
        %v2765 = vrot.slane %v2722, %v2764
        %v2767 = vunpack.c.l.s4 1983009808
        %v2768 = vunpack.c.0.s8 %v2767
        %v2769 = vlaneseq
        %v2770 = vshrl.u32 %v2769, 7
        %v2771 = vsub.s32 %v2768, %v2770
        %v2772 = vrot.slane %v2758, %v2771
        %v2773 = vcombine.high %v2765, %v2765
        %v2774 = vcombine.high %v2772, %v2772
        %v2775 = vcombine.high %v2723, %v2723
        %v2777 = vunpack.c.l.s4 1983009808
        %v2778 = vunpack.c.0.s8 %v2777
        %v2779 = vlaneseq
        %v2780 = vshrl.u32 %v2779, 7
        %v2781 = vsub.s32 %v2778, %v2780
        %v2782 = vrot.slane %v2723, %v2781
        %v2784 = vunpack.c.l.s4 1983009808
        %v2785 = vunpack.c.0.s8 %v2784
        %v2786 = vlaneseq
        %v2787 = vshrl.u32 %v2786, 7
        %v2788 = vsub.s32 %v2785, %v2787
        %v2789 = vrot.slane %v2775, %v2788
        %v2790 = vcombine.high %v2782, %v2782
        %v2791 = vcombine.high %v2789, %v2789
        %v2792 = vcombine.high %v2724, %v2724
        %v2794 = vunpack.c.l.s4 1983009808
        %v2795 = vunpack.c.0.s8 %v2794
        %v2796 = vlaneseq
        %v2797 = vshrl.u32 %v2796, 7
        %v2798 = vsub.s32 %v2795, %v2797
        %v2799 = vrot.slane %v2724, %v2798
        %v2801 = vunpack.c.l.s4 1983009808
        %v2802 = vunpack.c.0.s8 %v2801
        %v2803 = vlaneseq
        %v2804 = vshrl.u32 %v2803, 7
        %v2805 = vsub.s32 %v2802, %v2804
        %v2806 = vrot.slane %v2792, %v2805
        %v2807 = vcombine.high %v2799, %v2799
        %v2808 = vcombine.high %v2806, %v2806
        %v2809 = vcombine.high %v2725, %v2725
        %v2811 = vunpack.c.l.s4 1983009808
        %v2812 = vunpack.c.0.s8 %v2811
        %v2813 = vlaneseq
        %v2814 = vshrl.u32 %v2813, 7
        %v2815 = vsub.s32 %v2812, %v2814
        %v2816 = vrot.slane %v2725, %v2815
        %v2818 = vunpack.c.l.s4 1983009808
        %v2819 = vunpack.c.0.s8 %v2818
        %v2820 = vlaneseq
        %v2821 = vshrl.u32 %v2820, 7
        %v2822 = vsub.s32 %v2819, %v2821
        %v2823 = vrot.slane %v2809, %v2822
        %v2824 = vcombine.high %v2816, %v2816
        %v2825 = vcombine.high %v2823, %v2823
        %v2826 = vcombine.high %v2726, %v2726
        %v2828 = vunpack.c.l.s4 1983009808
        %v2829 = vunpack.c.0.s8 %v2828
        %v2830 = vlaneseq
        %v2831 = vshrl.u32 %v2830, 7
        %v2832 = vsub.s32 %v2829, %v2831
        %v2833 = vrot.slane %v2726, %v2832
        %v2835 = vunpack.c.l.s4 1983009808
        %v2836 = vunpack.c.0.s8 %v2835
        %v2837 = vlaneseq
        %v2838 = vshrl.u32 %v2837, 7
        %v2839 = vsub.s32 %v2836, %v2838
        %v2840 = vrot.slane %v2826, %v2839
        %v2841 = vcombine.high %v2833, %v2833
        %v2842 = vcombine.high %v2840, %v2840
        %v2843 = vcombine.high %v2727, %v2727
        %v2845 = vunpack.c.l.s4 1983009808
        %v2846 = vunpack.c.0.s8 %v2845
        %v2847 = vlaneseq
        %v2848 = vshrl.u32 %v2847, 7
        %v2849 = vsub.s32 %v2846, %v2848
        %v2850 = vrot.slane %v2727, %v2849
        %v2852 = vunpack.c.l.s4 1983009808
        %v2853 = vunpack.c.0.s8 %v2852
        %v2854 = vlaneseq
        %v2855 = vshrl.u32 %v2854, 7
        %v2856 = vsub.s32 %v2853, %v2855
        %v2857 = vrot.slane %v2843, %v2856
        %v2858 = vcombine.high %v2850, %v2850
        %v2859 = vcombine.high %v2857, %v2857
        %v2860 = vcombine.high %v2728, %v2728
        %v2862 = vunpack.c.l.s4 1983009808
        %v2863 = vunpack.c.0.s8 %v2862
        %v2864 = vlaneseq
        %v2865 = vshrl.u32 %v2864, 7
        %v2866 = vsub.s32 %v2863, %v2865
        %v2867 = vrot.slane %v2728, %v2866
        %v2869 = vunpack.c.l.s4 1983009808
        %v2870 = vunpack.c.0.s8 %v2869
        %v2871 = vlaneseq
        %v2872 = vshrl.u32 %v2871, 7
        %v2873 = vsub.s32 %v2870, %v2872
        %v2874 = vrot.slane %v2860, %v2873
        %v2875 = vcombine.high %v2867, %v2867
        %v2876 = vcombine.high %v2874, %v2874
        %v2877 = vcombine.high %v2729, %v2729
        %v2879 = vunpack.c.l.s4 1983009808
        %v2880 = vunpack.c.0.s8 %v2879
        %v2881 = vlaneseq
        %v2882 = vshrl.u32 %v2881, 7
        %v2883 = vsub.s32 %v2880, %v2882
        %v2884 = vrot.slane %v2729, %v2883
        %v2886 = vunpack.c.l.s4 1983009808
        %v2887 = vunpack.c.0.s8 %v2886
        %v2888 = vlaneseq
        %v2889 = vshrl.u32 %v2888, 7
        %v2890 = vsub.s32 %v2887, %v2889
        %v2891 = vrot.slane %v2877, %v2890
        %v2892 = vcombine.high %v2884, %v2884
        %v2893 = vcombine.high %v2891, %v2891
        %v2894 = vcombine.high %v2730, %v2730
        %v2896 = vunpack.c.l.s4 1983009808
        %v2897 = vunpack.c.0.s8 %v2896
        %v2898 = vlaneseq
        %v2899 = vshrl.u32 %v2898, 7
        %v2900 = vsub.s32 %v2897, %v2899
        %v2901 = vrot.slane %v2730, %v2900
        %v2903 = vunpack.c.l.s4 1983009808
        %v2904 = vunpack.c.0.s8 %v2903
        %v2905 = vlaneseq
        %v2906 = vshrl.u32 %v2905, 7
        %v2907 = vsub.s32 %v2904, %v2906
        %v2908 = vrot.slane %v2894, %v2907
        %v2909 = vcombine.high %v2901, %v2901
        %v2910 = vcombine.high %v2908, %v2908
        %v2911 = vcombine.high %v2731, %v2731
        %v2913 = vunpack.c.l.s4 1983009808
        %v2914 = vunpack.c.0.s8 %v2913
        %v2915 = vlaneseq
        %v2916 = vshrl.u32 %v2915, 7
        %v2917 = vsub.s32 %v2914, %v2916
        %v2918 = vrot.slane %v2731, %v2917
        %v2920 = vunpack.c.l.s4 1983009808
        %v2921 = vunpack.c.0.s8 %v2920
        %v2922 = vlaneseq
        %v2923 = vshrl.u32 %v2922, 7
        %v2924 = vsub.s32 %v2921, %v2923
        %v2925 = vrot.slane %v2911, %v2924
        %v2926 = vcombine.high %v2918, %v2918
        %v2927 = vcombine.high %v2925, %v2925
        %v2928 = vcombine.high %v2732, %v2732
        %v2930 = vunpack.c.l.s4 1983009808
        %v2931 = vunpack.c.0.s8 %v2930
        %v2932 = vlaneseq
        %v2933 = vshrl.u32 %v2932, 7
        %v2934 = vsub.s32 %v2931, %v2933
        %v2935 = vrot.slane %v2732, %v2934
        %v2937 = vunpack.c.l.s4 1983009808
        %v2938 = vunpack.c.0.s8 %v2937
        %v2939 = vlaneseq
        %v2940 = vshrl.u32 %v2939, 7
        %v2941 = vsub.s32 %v2938, %v2940
        %v2942 = vrot.slane %v2928, %v2941
        %v2943 = vcombine.high %v2935, %v2935
        %v2944 = vcombine.high %v2942, %v2942
        %v2945 = vcombine.high %v2733, %v2733
        %v2947 = vunpack.c.l.s4 1983009808
        %v2948 = vunpack.c.0.s8 %v2947
        %v2949 = vlaneseq
        %v2950 = vshrl.u32 %v2949, 7
        %v2951 = vsub.s32 %v2948, %v2950
        %v2952 = vrot.slane %v2733, %v2951
        %v2954 = vunpack.c.l.s4 1983009808
        %v2955 = vunpack.c.0.s8 %v2954
        %v2956 = vlaneseq
        %v2957 = vshrl.u32 %v2956, 7
        %v2958 = vsub.s32 %v2955, %v2957
        %v2959 = vrot.slane %v2945, %v2958
        %v2960 = vcombine.high %v2952, %v2952
        %v2961 = vcombine.high %v2959, %v2959
        %v2962 = vcombine.high %v2734, %v2734
        %v2964 = vunpack.c.l.s4 1983009808
        %v2965 = vunpack.c.0.s8 %v2964
        %v2966 = vlaneseq
        %v2967 = vshrl.u32 %v2966, 7
        %v2968 = vsub.s32 %v2965, %v2967
        %v2969 = vrot.slane %v2734, %v2968
        %v2971 = vunpack.c.l.s4 1983009808
        %v2972 = vunpack.c.0.s8 %v2971
        %v2973 = vlaneseq
        %v2974 = vshrl.u32 %v2973, 7
        %v2975 = vsub.s32 %v2972, %v2974
        %v2976 = vrot.slane %v2962, %v2975
        %v2977 = vcombine.high %v2969, %v2969
        %v2978 = vcombine.high %v2976, %v2976
        %v2979 = vcombine.high %v2735, %v2735
        %v2981 = vunpack.c.l.s4 1983009808
        %v2982 = vunpack.c.0.s8 %v2981
        %v2983 = vlaneseq
        %v2984 = vshrl.u32 %v2983, 7
        %v2985 = vsub.s32 %v2982, %v2984
        %v2986 = vrot.slane %v2735, %v2985
        %v2988 = vunpack.c.l.s4 1983009808
        %v2989 = vunpack.c.0.s8 %v2988
        %v2990 = vlaneseq
        %v2991 = vshrl.u32 %v2990, 7
        %v2992 = vsub.s32 %v2989, %v2991
        %v2993 = vrot.slane %v2979, %v2992
        %v2994 = vcombine.high %v2986, %v2986
        %v2995 = vcombine.high %v2993, %v2993
        %v2996 = vcombine.high %v2736, %v2736
        %v2998 = vunpack.c.l.s4 1983009808
        %v2999 = vunpack.c.0.s8 %v2998
        %v3000 = vlaneseq
        %v3001 = vshrl.u32 %v3000, 7
        %v3002 = vsub.s32 %v2999, %v3001
        %v3003 = vrot.slane %v2736, %v3002
        %v3005 = vunpack.c.l.s4 1983009808
        %v3006 = vunpack.c.0.s8 %v3005
        %v3007 = vlaneseq
        %v3008 = vshrl.u32 %v3007, 7
        %v3009 = vsub.s32 %v3006, %v3008
        %v3010 = vrot.slane %v2996, %v3009
        %v3011 = vcombine.high %v3003, %v3003
        %v3012 = vcombine.high %v3010, %v3010
        %v3013 = vcombine.high %v2737, %v2737
        %v3015 = vunpack.c.l.s4 1983009808
        %v3016 = vunpack.c.0.s8 %v3015
        %v3017 = vlaneseq
        %v3018 = vshrl.u32 %v3017, 7
        %v3019 = vsub.s32 %v3016, %v3018
        %v3020 = vrot.slane %v2737, %v3019
        %v3022 = vunpack.c.l.s4 1983009808
        %v3023 = vunpack.c.0.s8 %v3022
        %v3024 = vlaneseq
        %v3025 = vshrl.u32 %v3024, 7
        %v3026 = vsub.s32 %v3023, %v3025
        %v3027 = vrot.slane %v3013, %v3026
        %v3028 = vcombine.high %v3020, %v3020
        %v3029 = vcombine.high %v3027, %v3027
        %v3030 = vcombine.high %v2738, %v2738
        %v3032 = vunpack.c.l.s4 1983009808
        %v3033 = vunpack.c.0.s8 %v3032
        %v3034 = vlaneseq
        %v3035 = vshrl.u32 %v3034, 7
        %v3036 = vsub.s32 %v3033, %v3035
        %v3037 = vrot.slane %v2738, %v3036
        %v3039 = vunpack.c.l.s4 1983009808
        %v3040 = vunpack.c.0.s8 %v3039
        %v3041 = vlaneseq
        %v3042 = vshrl.u32 %v3041, 7
        %v3043 = vsub.s32 %v3040, %v3042
        %v3044 = vrot.slane %v3030, %v3043
        %v3045 = vcombine.high %v3037, %v3037
        %v3046 = vcombine.high %v3044, %v3044
        %v3047 = vcombine.high %v2739, %v2739
        %v3049 = vunpack.c.l.s4 1983009808
        %v3050 = vunpack.c.0.s8 %v3049
        %v3051 = vlaneseq
        %v3052 = vshrl.u32 %v3051, 7
        %v3053 = vsub.s32 %v3050, %v3052
        %v3054 = vrot.slane %v2739, %v3053
        %v3056 = vunpack.c.l.s4 1983009808
        %v3057 = vunpack.c.0.s8 %v3056
        %v3058 = vlaneseq
        %v3059 = vshrl.u32 %v3058, 7
        %v3060 = vsub.s32 %v3057, %v3059
        %v3061 = vrot.slane %v3047, %v3060
        %v3062 = vcombine.high %v3054, %v3054
        %v3063 = vcombine.high %v3061, %v3061
        %vm3136 = vcmask 517120
        %v3137 = vsel %vm3136, %v2765, -inf
        %v3138 = vrot.slane %v3137, 4
        %v3139 = vmax.f32 %v3137, %v3138
        %v3140 = vrot.slane %v3139, 2
        %v3141 = vmax.f32 %v3139, %v3140
        %v3142 = vrot.slane %v3141, 1
        %v3143 = vmax.f32 %v3141, %v3142
        %v3144 = vsel %vm3136, %v2773, -inf
        %v3145 = vrot.slane %v3144, 4
        %v3146 = vmax.f32 %v3144, %v3145
        %v3147 = vrot.slane %v3146, 2
        %v3148 = vmax.f32 %v3146, %v3147
        %v3149 = vrot.slane %v3148, 1
        %v3150 = vmax.f32 %v3148, %v3149
        %v3151 = vsel %vm3136, %v2772, -inf
        %v3152 = vrot.slane %v3151, 4
        %v3153 = vmax.f32 %v3151, %v3152
        %v3154 = vrot.slane %v3153, 2
        %v3155 = vmax.f32 %v3153, %v3154
        %v3156 = vrot.slane %v3155, 1
        %v3157 = vmax.f32 %v3155, %v3156
        %v3158 = vsel %vm3136, %v2774, -inf
        %v3159 = vrot.slane %v3158, 4
        %v3160 = vmax.f32 %v3158, %v3159
        %v3161 = vrot.slane %v3160, 2
        %v3162 = vmax.f32 %v3160, %v3161
        %v3163 = vrot.slane %v3162, 1
        %v3164 = vmax.f32 %v3162, %v3163
        %v3165 = vsel %vm3136, %v2782, -inf
        %v3166 = vrot.slane %v3165, 4
        %v3167 = vmax.f32 %v3165, %v3166
        %v3168 = vrot.slane %v3167, 2
        %v3169 = vmax.f32 %v3167, %v3168
        %v3170 = vrot.slane %v3169, 1
        %v3171 = vmax.f32 %v3169, %v3170
        %v3172 = vsel %vm3136, %v2790, -inf
        %v3173 = vrot.slane %v3172, 4
        %v3174 = vmax.f32 %v3172, %v3173
        %v3175 = vrot.slane %v3174, 2
        %v3176 = vmax.f32 %v3174, %v3175
        %v3177 = vrot.slane %v3176, 1
        %v3178 = vmax.f32 %v3176, %v3177
        %v3179 = vsel %vm3136, %v2789, -inf
        %v3180 = vrot.slane %v3179, 4
        %v3181 = vmax.f32 %v3179, %v3180
        %v3182 = vrot.slane %v3181, 2
        %v3183 = vmax.f32 %v3181, %v3182
        %v3184 = vrot.slane %v3183, 1
        %v3185 = vmax.f32 %v3183, %v3184
        %v3186 = vsel %vm3136, %v2791, -inf
        %v3187 = vrot.slane %v3186, 4
        %v3188 = vmax.f32 %v3186, %v3187
        %v3189 = vrot.slane %v3188, 2
        %v3190 = vmax.f32 %v3188, %v3189
        %v3191 = vrot.slane %v3190, 1
        %v3192 = vmax.f32 %v3190, %v3191
        %v3193 = vsel %vm3136, %v2799, -inf
        %v3194 = vrot.slane %v3193, 4
        %v3195 = vmax.f32 %v3193, %v3194
        %v3196 = vrot.slane %v3195, 2
        %v3197 = vmax.f32 %v3195, %v3196
        %v3198 = vrot.slane %v3197, 1
        %v3199 = vmax.f32 %v3197, %v3198
        %v3200 = vsel %vm3136, %v2807, -inf
        %v3201 = vrot.slane %v3200, 4
        %v3202 = vmax.f32 %v3200, %v3201
        %v3203 = vrot.slane %v3202, 2
        %v3204 = vmax.f32 %v3202, %v3203
        %v3205 = vrot.slane %v3204, 1
        %v3206 = vmax.f32 %v3204, %v3205
        %v3207 = vsel %vm3136, %v2806, -inf
        %v3208 = vrot.slane %v3207, 4
        %v3209 = vmax.f32 %v3207, %v3208
        %v3210 = vrot.slane %v3209, 2
        %v3211 = vmax.f32 %v3209, %v3210
        %v3212 = vrot.slane %v3211, 1
        %v3213 = vmax.f32 %v3211, %v3212
        %v3214 = vsel %vm3136, %v2808, -inf
        %v3215 = vrot.slane %v3214, 4
        %v3216 = vmax.f32 %v3214, %v3215
        %v3217 = vrot.slane %v3216, 2
        %v3218 = vmax.f32 %v3216, %v3217
        %v3219 = vrot.slane %v3218, 1
        %v3220 = vmax.f32 %v3218, %v3219
        %v3221 = vsel %vm3136, %v2816, -inf
        %v3222 = vrot.slane %v3221, 4
        %v3223 = vmax.f32 %v3221, %v3222
        %v3224 = vrot.slane %v3223, 2
        %v3225 = vmax.f32 %v3223, %v3224
        %v3226 = vrot.slane %v3225, 1
        %v3227 = vmax.f32 %v3225, %v3226
        %v3228 = vsel %vm3136, %v2824, -inf
        %v3229 = vrot.slane %v3228, 4
        %v3230 = vmax.f32 %v3228, %v3229
        %v3231 = vrot.slane %v3230, 2
        %v3232 = vmax.f32 %v3230, %v3231
        %v3233 = vrot.slane %v3232, 1
        %v3234 = vmax.f32 %v3232, %v3233
        %v3235 = vsel %vm3136, %v2823, -inf
        %v3236 = vrot.slane %v3235, 4
        %v3237 = vmax.f32 %v3235, %v3236
        %v3238 = vrot.slane %v3237, 2
        %v3239 = vmax.f32 %v3237, %v3238
        %v3240 = vrot.slane %v3239, 1
        %v3241 = vmax.f32 %v3239, %v3240
        %v3242 = vsel %vm3136, %v2825, -inf
        %v3243 = vrot.slane %v3242, 4
        %v3244 = vmax.f32 %v3242, %v3243
        %v3245 = vrot.slane %v3244, 2
        %v3246 = vmax.f32 %v3244, %v3245
        %v3247 = vrot.slane %v3246, 1
        %v3248 = vmax.f32 %v3246, %v3247
        %v3249 = vsel %vm3136, %v2833, -inf
        %v3250 = vrot.slane %v3249, 4
        %v3251 = vmax.f32 %v3249, %v3250
        %v3252 = vrot.slane %v3251, 2
        %v3253 = vmax.f32 %v3251, %v3252
        %v3254 = vrot.slane %v3253, 1
        %v3255 = vmax.f32 %v3253, %v3254
        %v3256 = vsel %vm3136, %v2841, -inf
        %v3257 = vrot.slane %v3256, 4
        %v3258 = vmax.f32 %v3256, %v3257
        %v3259 = vrot.slane %v3258, 2
        %v3260 = vmax.f32 %v3258, %v3259
        %v3261 = vrot.slane %v3260, 1
        %v3262 = vmax.f32 %v3260, %v3261
        %v3263 = vsel %vm3136, %v2840, -inf
        %v3264 = vrot.slane %v3263, 4
        %v3265 = vmax.f32 %v3263, %v3264
        %v3266 = vrot.slane %v3265, 2
        %v3267 = vmax.f32 %v3265, %v3266
        %v3268 = vrot.slane %v3267, 1
        %v3269 = vmax.f32 %v3267, %v3268
        %v3270 = vsel %vm3136, %v2842, -inf
        %v3271 = vrot.slane %v3270, 4
        %v3272 = vmax.f32 %v3270, %v3271
        %v3273 = vrot.slane %v3272, 2
        %v3274 = vmax.f32 %v3272, %v3273
        %v3275 = vrot.slane %v3274, 1
        %v3276 = vmax.f32 %v3274, %v3275
        %v3277 = vsel %vm3136, %v2850, -inf
        %v3278 = vrot.slane %v3277, 4
        %v3279 = vmax.f32 %v3277, %v3278
        %v3280 = vrot.slane %v3279, 2
        %v3281 = vmax.f32 %v3279, %v3280
        %v3282 = vrot.slane %v3281, 1
        %v3283 = vmax.f32 %v3281, %v3282
        %v3284 = vsel %vm3136, %v2858, -inf
        %v3285 = vrot.slane %v3284, 4
        %v3286 = vmax.f32 %v3284, %v3285
        %v3287 = vrot.slane %v3286, 2
        %v3288 = vmax.f32 %v3286, %v3287
        %v3289 = vrot.slane %v3288, 1
        %v3290 = vmax.f32 %v3288, %v3289
        %v3291 = vsel %vm3136, %v2857, -inf
        %v3292 = vrot.slane %v3291, 4
        %v3293 = vmax.f32 %v3291, %v3292
        %v3294 = vrot.slane %v3293, 2
        %v3295 = vmax.f32 %v3293, %v3294
        %v3296 = vrot.slane %v3295, 1
        %v3297 = vmax.f32 %v3295, %v3296
        %v3298 = vsel %vm3136, %v2859, -inf
        %v3299 = vrot.slane %v3298, 4
        %v3300 = vmax.f32 %v3298, %v3299
        %v3301 = vrot.slane %v3300, 2
        %v3302 = vmax.f32 %v3300, %v3301
        %v3303 = vrot.slane %v3302, 1
        %v3304 = vmax.f32 %v3302, %v3303
        %v3305 = vsel %vm3136, %v2867, -inf
        %v3306 = vrot.slane %v3305, 4
        %v3307 = vmax.f32 %v3305, %v3306
        %v3308 = vrot.slane %v3307, 2
        %v3309 = vmax.f32 %v3307, %v3308
        %v3310 = vrot.slane %v3309, 1
        %v3311 = vmax.f32 %v3309, %v3310
        %v3312 = vsel %vm3136, %v2875, -inf
        %v3313 = vrot.slane %v3312, 4
        %v3314 = vmax.f32 %v3312, %v3313
        %v3315 = vrot.slane %v3314, 2
        %v3316 = vmax.f32 %v3314, %v3315
        %v3317 = vrot.slane %v3316, 1
        %v3318 = vmax.f32 %v3316, %v3317
        %v3319 = vsel %vm3136, %v2874, -inf
        %v3320 = vrot.slane %v3319, 4
        %v3321 = vmax.f32 %v3319, %v3320
        %v3322 = vrot.slane %v3321, 2
        %v3323 = vmax.f32 %v3321, %v3322
        %v3324 = vrot.slane %v3323, 1
        %v3325 = vmax.f32 %v3323, %v3324
        %v3326 = vsel %vm3136, %v2876, -inf
        %v3327 = vrot.slane %v3326, 4
        %v3328 = vmax.f32 %v3326, %v3327
        %v3329 = vrot.slane %v3328, 2
        %v3330 = vmax.f32 %v3328, %v3329
        %v3331 = vrot.slane %v3330, 1
        %v3332 = vmax.f32 %v3330, %v3331
        %v3333 = vsel %vm3136, %v2884, -inf
        %v3334 = vrot.slane %v3333, 4
        %v3335 = vmax.f32 %v3333, %v3334
        %v3336 = vrot.slane %v3335, 2
        %v3337 = vmax.f32 %v3335, %v3336
        %v3338 = vrot.slane %v3337, 1
        %v3339 = vmax.f32 %v3337, %v3338
        %v3340 = vsel %vm3136, %v2892, -inf
        %v3341 = vrot.slane %v3340, 4
        %v3342 = vmax.f32 %v3340, %v3341
        %v3343 = vrot.slane %v3342, 2
        %v3344 = vmax.f32 %v3342, %v3343
        %v3345 = vrot.slane %v3344, 1
        %v3346 = vmax.f32 %v3344, %v3345
        %v3347 = vsel %vm3136, %v2891, -inf
        %v3348 = vrot.slane %v3347, 4
        %v3349 = vmax.f32 %v3347, %v3348
        %v3350 = vrot.slane %v3349, 2
        %v3351 = vmax.f32 %v3349, %v3350
        %v3352 = vrot.slane %v3351, 1
        %v3353 = vmax.f32 %v3351, %v3352
        %v3354 = vsel %vm3136, %v2893, -inf
        %v3355 = vrot.slane %v3354, 4
        %v3356 = vmax.f32 %v3354, %v3355
        %v3357 = vrot.slane %v3356, 2
        %v3358 = vmax.f32 %v3356, %v3357
        %v3359 = vrot.slane %v3358, 1
        %v3360 = vmax.f32 %v3358, %v3359
        %v3361 = vsel %vm3136, %v2901, -inf
        %v3362 = vrot.slane %v3361, 4
        %v3363 = vmax.f32 %v3361, %v3362
        %v3364 = vrot.slane %v3363, 2
        %v3365 = vmax.f32 %v3363, %v3364
        %v3366 = vrot.slane %v3365, 1
        %v3367 = vmax.f32 %v3365, %v3366
        %v3368 = vsel %vm3136, %v2909, -inf
        %v3369 = vrot.slane %v3368, 4
        %v3370 = vmax.f32 %v3368, %v3369
        %v3371 = vrot.slane %v3370, 2
        %v3372 = vmax.f32 %v3370, %v3371
        %v3373 = vrot.slane %v3372, 1
        %v3374 = vmax.f32 %v3372, %v3373
        %v3375 = vsel %vm3136, %v2908, -inf
        %v3376 = vrot.slane %v3375, 4
        %v3377 = vmax.f32 %v3375, %v3376
        %v3378 = vrot.slane %v3377, 2
        %v3379 = vmax.f32 %v3377, %v3378
        %v3380 = vrot.slane %v3379, 1
        %v3381 = vmax.f32 %v3379, %v3380
        %v3382 = vsel %vm3136, %v2910, -inf
        %v3383 = vrot.slane %v3382, 4
        %v3384 = vmax.f32 %v3382, %v3383
        %v3385 = vrot.slane %v3384, 2
        %v3386 = vmax.f32 %v3384, %v3385
        %v3387 = vrot.slane %v3386, 1
        %v3388 = vmax.f32 %v3386, %v3387
        %v3389 = vsel %vm3136, %v2918, -inf
        %v3390 = vrot.slane %v3389, 4
        %v3391 = vmax.f32 %v3389, %v3390
        %v3392 = vrot.slane %v3391, 2
        %v3393 = vmax.f32 %v3391, %v3392
        %v3394 = vrot.slane %v3393, 1
        %v3395 = vmax.f32 %v3393, %v3394
        %v3396 = vsel %vm3136, %v2926, -inf
        %v3397 = vrot.slane %v3396, 4
        %v3398 = vmax.f32 %v3396, %v3397
        %v3399 = vrot.slane %v3398, 2
        %v3400 = vmax.f32 %v3398, %v3399
        %v3401 = vrot.slane %v3400, 1
        %v3402 = vmax.f32 %v3400, %v3401
        %v3403 = vsel %vm3136, %v2925, -inf
        %v3404 = vrot.slane %v3403, 4
        %v3405 = vmax.f32 %v3403, %v3404
        %v3406 = vrot.slane %v3405, 2
        %v3407 = vmax.f32 %v3405, %v3406
        %v3408 = vrot.slane %v3407, 1
        %v3409 = vmax.f32 %v3407, %v3408
        %v3410 = vsel %vm3136, %v2927, -inf
        %v3411 = vrot.slane %v3410, 4
        %v3412 = vmax.f32 %v3410, %v3411
        %v3413 = vrot.slane %v3412, 2
        %v3414 = vmax.f32 %v3412, %v3413
        %v3415 = vrot.slane %v3414, 1
        %v3416 = vmax.f32 %v3414, %v3415
        %v3417 = vsel %vm3136, %v2935, -inf
        %v3418 = vrot.slane %v3417, 4
        %v3419 = vmax.f32 %v3417, %v3418
        %v3420 = vrot.slane %v3419, 2
        %v3421 = vmax.f32 %v3419, %v3420
        %v3422 = vrot.slane %v3421, 1
        %v3423 = vmax.f32 %v3421, %v3422
        %v3424 = vsel %vm3136, %v2943, -inf
        %v3425 = vrot.slane %v3424, 4
        %v3426 = vmax.f32 %v3424, %v3425
        %v3427 = vrot.slane %v3426, 2
        %v3428 = vmax.f32 %v3426, %v3427
        %v3429 = vrot.slane %v3428, 1
        %v3430 = vmax.f32 %v3428, %v3429
        %v3431 = vsel %vm3136, %v2942, -inf
        %v3432 = vrot.slane %v3431, 4
        %v3433 = vmax.f32 %v3431, %v3432
        %v3434 = vrot.slane %v3433, 2
        %v3435 = vmax.f32 %v3433, %v3434
        %v3436 = vrot.slane %v3435, 1
        %v3437 = vmax.f32 %v3435, %v3436
        %v3438 = vsel %vm3136, %v2944, -inf
        %v3439 = vrot.slane %v3438, 4
        %v3440 = vmax.f32 %v3438, %v3439
        %v3441 = vrot.slane %v3440, 2
        %v3442 = vmax.f32 %v3440, %v3441
        %v3443 = vrot.slane %v3442, 1
        %v3444 = vmax.f32 %v3442, %v3443
        %v3445 = vsel %vm3136, %v2952, -inf
        %v3446 = vrot.slane %v3445, 4
        %v3447 = vmax.f32 %v3445, %v3446
        %v3448 = vrot.slane %v3447, 2
        %v3449 = vmax.f32 %v3447, %v3448
        %v3450 = vrot.slane %v3449, 1
        %v3451 = vmax.f32 %v3449, %v3450
        %v3452 = vsel %vm3136, %v2960, -inf
        %v3453 = vrot.slane %v3452, 4
        %v3454 = vmax.f32 %v3452, %v3453
        %v3455 = vrot.slane %v3454, 2
        %v3456 = vmax.f32 %v3454, %v3455
        %v3457 = vrot.slane %v3456, 1
        %v3458 = vmax.f32 %v3456, %v3457
        %v3459 = vsel %vm3136, %v2959, -inf
        %v3460 = vrot.slane %v3459, 4
        %v3461 = vmax.f32 %v3459, %v3460
        %v3462 = vrot.slane %v3461, 2
        %v3463 = vmax.f32 %v3461, %v3462
        %v3464 = vrot.slane %v3463, 1
        %v3465 = vmax.f32 %v3463, %v3464
        %v3466 = vsel %vm3136, %v2961, -inf
        %v3467 = vrot.slane %v3466, 4
        %v3468 = vmax.f32 %v3466, %v3467
        %v3469 = vrot.slane %v3468, 2
        %v3470 = vmax.f32 %v3468, %v3469
        %v3471 = vrot.slane %v3470, 1
        %v3472 = vmax.f32 %v3470, %v3471
        %v3473 = vsel %vm3136, %v2969, -inf
        %v3474 = vrot.slane %v3473, 4
        %v3475 = vmax.f32 %v3473, %v3474
        %v3476 = vrot.slane %v3475, 2
        %v3477 = vmax.f32 %v3475, %v3476
        %v3478 = vrot.slane %v3477, 1
        %v3479 = vmax.f32 %v3477, %v3478
        %v3480 = vsel %vm3136, %v2977, -inf
        %v3481 = vrot.slane %v3480, 4
        %v3482 = vmax.f32 %v3480, %v3481
        %v3483 = vrot.slane %v3482, 2
        %v3484 = vmax.f32 %v3482, %v3483
        %v3485 = vrot.slane %v3484, 1
        %v3486 = vmax.f32 %v3484, %v3485
        %v3487 = vsel %vm3136, %v2976, -inf
        %v3488 = vrot.slane %v3487, 4
        %v3489 = vmax.f32 %v3487, %v3488
        %v3490 = vrot.slane %v3489, 2
        %v3491 = vmax.f32 %v3489, %v3490
        %v3492 = vrot.slane %v3491, 1
        %v3493 = vmax.f32 %v3491, %v3492
        %v3494 = vsel %vm3136, %v2978, -inf
        %v3495 = vrot.slane %v3494, 4
        %v3496 = vmax.f32 %v3494, %v3495
        %v3497 = vrot.slane %v3496, 2
        %v3498 = vmax.f32 %v3496, %v3497
        %v3499 = vrot.slane %v3498, 1
        %v3500 = vmax.f32 %v3498, %v3499
        %v3501 = vsel %vm3136, %v2986, -inf
        %v3502 = vrot.slane %v3501, 4
        %v3503 = vmax.f32 %v3501, %v3502
        %v3504 = vrot.slane %v3503, 2
        %v3505 = vmax.f32 %v3503, %v3504
        %v3506 = vrot.slane %v3505, 1
        %v3507 = vmax.f32 %v3505, %v3506
        %v3508 = vsel %vm3136, %v2994, -inf
        %v3509 = vrot.slane %v3508, 4
        %v3510 = vmax.f32 %v3508, %v3509
        %v3511 = vrot.slane %v3510, 2
        %v3512 = vmax.f32 %v3510, %v3511
        %v3513 = vrot.slane %v3512, 1
        %v3514 = vmax.f32 %v3512, %v3513
        %v3515 = vsel %vm3136, %v2993, -inf
        %v3516 = vrot.slane %v3515, 4
        %v3517 = vmax.f32 %v3515, %v3516
        %v3518 = vrot.slane %v3517, 2
        %v3519 = vmax.f32 %v3517, %v3518
        %v3520 = vrot.slane %v3519, 1
        %v3521 = vmax.f32 %v3519, %v3520
        %v3522 = vsel %vm3136, %v2995, -inf
        %v3523 = vrot.slane %v3522, 4
        %v3524 = vmax.f32 %v3522, %v3523
        %v3525 = vrot.slane %v3524, 2
        %v3526 = vmax.f32 %v3524, %v3525
        %v3527 = vrot.slane %v3526, 1
        %v3528 = vmax.f32 %v3526, %v3527
        %v3529 = vsel %vm3136, %v3003, -inf
        %v3530 = vrot.slane %v3529, 4
        %v3531 = vmax.f32 %v3529, %v3530
        %v3532 = vrot.slane %v3531, 2
        %v3533 = vmax.f32 %v3531, %v3532
        %v3534 = vrot.slane %v3533, 1
        %v3535 = vmax.f32 %v3533, %v3534
        %v3536 = vsel %vm3136, %v3011, -inf
        %v3537 = vrot.slane %v3536, 4
        %v3538 = vmax.f32 %v3536, %v3537
        %v3539 = vrot.slane %v3538, 2
        %v3540 = vmax.f32 %v3538, %v3539
        %v3541 = vrot.slane %v3540, 1
        %v3542 = vmax.f32 %v3540, %v3541
        %v3543 = vsel %vm3136, %v3010, -inf
        %v3544 = vrot.slane %v3543, 4
        %v3545 = vmax.f32 %v3543, %v3544
        %v3546 = vrot.slane %v3545, 2
        %v3547 = vmax.f32 %v3545, %v3546
        %v3548 = vrot.slane %v3547, 1
        %v3549 = vmax.f32 %v3547, %v3548
        %v3550 = vsel %vm3136, %v3012, -inf
        %v3551 = vrot.slane %v3550, 4
        %v3552 = vmax.f32 %v3550, %v3551
        %v3553 = vrot.slane %v3552, 2
        %v3554 = vmax.f32 %v3552, %v3553
        %v3555 = vrot.slane %v3554, 1
        %v3556 = vmax.f32 %v3554, %v3555
        %v3557 = vsel %vm3136, %v3020, -inf
        %v3558 = vrot.slane %v3557, 4
        %v3559 = vmax.f32 %v3557, %v3558
        %v3560 = vrot.slane %v3559, 2
        %v3561 = vmax.f32 %v3559, %v3560
        %v3562 = vrot.slane %v3561, 1
        %v3563 = vmax.f32 %v3561, %v3562
        %v3564 = vsel %vm3136, %v3028, -inf
        %v3565 = vrot.slane %v3564, 4
        %v3566 = vmax.f32 %v3564, %v3565
        %v3567 = vrot.slane %v3566, 2
        %v3568 = vmax.f32 %v3566, %v3567
        %v3569 = vrot.slane %v3568, 1
        %v3570 = vmax.f32 %v3568, %v3569
        %v3571 = vsel %vm3136, %v3027, -inf
        %v3572 = vrot.slane %v3571, 4
        %v3573 = vmax.f32 %v3571, %v3572
        %v3574 = vrot.slane %v3573, 2
        %v3575 = vmax.f32 %v3573, %v3574
        %v3576 = vrot.slane %v3575, 1
        %v3577 = vmax.f32 %v3575, %v3576
        %v3578 = vsel %vm3136, %v3029, -inf
        %v3579 = vrot.slane %v3578, 4
        %v3580 = vmax.f32 %v3578, %v3579
        %v3581 = vrot.slane %v3580, 2
        %v3582 = vmax.f32 %v3580, %v3581
        %v3583 = vrot.slane %v3582, 1
        %v3584 = vmax.f32 %v3582, %v3583
        %v3585 = vsel %vm3136, %v3037, -inf
        %v3586 = vrot.slane %v3585, 4
        %v3587 = vmax.f32 %v3585, %v3586
        %v3588 = vrot.slane %v3587, 2
        %v3589 = vmax.f32 %v3587, %v3588
        %v3590 = vrot.slane %v3589, 1
        %v3591 = vmax.f32 %v3589, %v3590
        %v3592 = vsel %vm3136, %v3045, -inf
        %v3593 = vrot.slane %v3592, 4
        %v3594 = vmax.f32 %v3592, %v3593
        %v3595 = vrot.slane %v3594, 2
        %v3596 = vmax.f32 %v3594, %v3595
        %v3597 = vrot.slane %v3596, 1
        %v3598 = vmax.f32 %v3596, %v3597
        %v3599 = vsel %vm3136, %v3044, -inf
        %v3600 = vrot.slane %v3599, 4
        %v3601 = vmax.f32 %v3599, %v3600
        %v3602 = vrot.slane %v3601, 2
        %v3603 = vmax.f32 %v3601, %v3602
        %v3604 = vrot.slane %v3603, 1
        %v3605 = vmax.f32 %v3603, %v3604
        %v3606 = vsel %vm3136, %v3046, -inf
        %v3607 = vrot.slane %v3606, 4
        %v3608 = vmax.f32 %v3606, %v3607
        %v3609 = vrot.slane %v3608, 2
        %v3610 = vmax.f32 %v3608, %v3609
        %v3611 = vrot.slane %v3610, 1
        %v3612 = vmax.f32 %v3610, %v3611
        %v3613 = vsel %vm3136, %v3054, -inf
        %v3614 = vrot.slane %v3613, 4
        %v3615 = vmax.f32 %v3613, %v3614
        %v3616 = vrot.slane %v3615, 2
        %v3617 = vmax.f32 %v3615, %v3616
        %v3618 = vrot.slane %v3617, 1
        %v3619 = vmax.f32 %v3617, %v3618
        %v3620 = vsel %vm3136, %v3062, -inf
        %v3621 = vrot.slane %v3620, 4
        %v3622 = vmax.f32 %v3620, %v3621
        %v3623 = vrot.slane %v3622, 2
        %v3624 = vmax.f32 %v3622, %v3623
        %v3625 = vrot.slane %v3624, 1
        %v3626 = vmax.f32 %v3624, %v3625
        %v3627 = vsel %vm3136, %v3061, -inf
        %v3628 = vrot.slane %v3627, 4
        %v3629 = vmax.f32 %v3627, %v3628
        %v3630 = vrot.slane %v3629, 2
        %v3631 = vmax.f32 %v3629, %v3630
        %v3632 = vrot.slane %v3631, 1
        %v3633 = vmax.f32 %v3631, %v3632
        %v3634 = vsel %vm3136, %v3063, -inf
        %v3635 = vrot.slane %v3634, 4
        %v3636 = vmax.f32 %v3634, %v3635
        %v3637 = vrot.slane %v3636, 2
        %v3638 = vmax.f32 %v3636, %v3637
        %v3639 = vrot.slane %v3638, 1
        %v3640 = vmax.f32 %v3638, %v3639
        %v3641 = vsel %vm2215, %v3143, -inf
        %v3642 = vsel %vm2215, %v3185, -inf
        %v3643 = vmax.f32 %v3641, %v3642
        %v3644 = vsel %vm2215, %v3150, -inf
        %v3645 = vsel %vm2215, %v3192, -inf
        %v3646 = vmax.f32 %v3644, %v3645
        %v3647 = vsel %vm2215, %v3157, -inf
        %v3648 = vsel %vm2215, %v3199, -inf
        %v3649 = vmax.f32 %v3647, %v3648
        %v3650 = vsel %vm2215, %v3164, -inf
        %v3651 = vsel %vm2215, %v3206, -inf
        %v3652 = vmax.f32 %v3650, %v3651
        %v3653 = vsel %vm2215, %v3171, -inf
        %v3654 = vsel %vm2215, %v3213, -inf
        %v3655 = vmax.f32 %v3653, %v3654
        %v3656 = vsel %vm2215, %v3178, -inf
        %v3657 = vsel %vm2215, %v3220, -inf
        %v3658 = vmax.f32 %v3656, %v3657
        %v3659 = vsel %vm2215, %v3227, -inf
        %v3660 = vsel %vm2215, %v3269, -inf
        %v3661 = vmax.f32 %v3659, %v3660
        %v3662 = vsel %vm2215, %v3234, -inf
        %v3663 = vsel %vm2215, %v3276, -inf
        %v3664 = vmax.f32 %v3662, %v3663
        %v3665 = vsel %vm2215, %v3241, -inf
        %v3666 = vsel %vm2215, %v3283, -inf
        %v3667 = vmax.f32 %v3665, %v3666
        %v3668 = vsel %vm2215, %v3248, -inf
        %v3669 = vsel %vm2215, %v3290, -inf
        %v3670 = vmax.f32 %v3668, %v3669
        %v3671 = vsel %vm2215, %v3255, -inf
        %v3672 = vsel %vm2215, %v3297, -inf
        %v3673 = vmax.f32 %v3671, %v3672
        %v3674 = vsel %vm2215, %v3262, -inf
        %v3675 = vsel %vm2215, %v3304, -inf
        %v3676 = vmax.f32 %v3674, %v3675
        %v3677 = vsel %vm2215, %v3311, -inf
        %v3678 = vsel %vm2215, %v3353, -inf
        %v3679 = vmax.f32 %v3677, %v3678
        %v3680 = vsel %vm2215, %v3318, -inf
        %v3681 = vsel %vm2215, %v3360, -inf
        %v3682 = vmax.f32 %v3680, %v3681
        %v3683 = vsel %vm2215, %v3325, -inf
        %v3684 = vsel %vm2215, %v3367, -inf
        %v3685 = vmax.f32 %v3683, %v3684
        %v3686 = vsel %vm2215, %v3332, -inf
        %v3687 = vsel %vm2215, %v3374, -inf
        %v3688 = vmax.f32 %v3686, %v3687
        %v3689 = vsel %vm2215, %v3339, -inf
        %v3690 = vsel %vm2215, %v3381, -inf
        %v3691 = vmax.f32 %v3689, %v3690
        %v3692 = vsel %vm2215, %v3346, -inf
        %v3693 = vsel %vm2215, %v3388, -inf
        %v3694 = vmax.f32 %v3692, %v3693
        %v3695 = vsel %vm2215, %v3395, -inf
        %v3696 = vsel %vm2215, %v3437, -inf
        %v3697 = vmax.f32 %v3695, %v3696
        %v3698 = vsel %vm2215, %v3402, -inf
        %v3699 = vsel %vm2215, %v3444, -inf
        %v3700 = vmax.f32 %v3698, %v3699
        %v3701 = vsel %vm2215, %v3409, -inf
        %v3702 = vsel %vm2215, %v3451, -inf
        %v3703 = vmax.f32 %v3701, %v3702
        %v3704 = vsel %vm2215, %v3416, -inf
        %v3705 = vsel %vm2215, %v3458, -inf
        %v3706 = vmax.f32 %v3704, %v3705
        %v3707 = vsel %vm2215, %v3423, -inf
        %v3708 = vsel %vm2215, %v3465, -inf
        %v3709 = vmax.f32 %v3707, %v3708
        %v3710 = vsel %vm2215, %v3430, -inf
        %v3711 = vsel %vm2215, %v3472, -inf
        %v3712 = vmax.f32 %v3710, %v3711
        %v3713 = vsel %vm2215, %v3479, -inf
        %v3714 = vsel %vm2215, %v3521, -inf
        %v3715 = vmax.f32 %v3713, %v3714
        %v3716 = vsel %vm2215, %v3486, -inf
        %v3717 = vsel %vm2215, %v3528, -inf
        %v3718 = vmax.f32 %v3716, %v3717
        %v3719 = vsel %vm2215, %v3493, -inf
        %v3720 = vsel %vm2215, %v3535, -inf
        %v3721 = vmax.f32 %v3719, %v3720
        %v3722 = vsel %vm2215, %v3500, -inf
        %v3723 = vsel %vm2215, %v3542, -inf
        %v3724 = vmax.f32 %v3722, %v3723
        %v3725 = vsel %vm2215, %v3507, -inf
        %v3726 = vsel %vm2215, %v3549, -inf
        %v3727 = vmax.f32 %v3725, %v3726
        %v3728 = vsel %vm2215, %v3514, -inf
        %v3729 = vsel %vm2215, %v3556, -inf
        %v3730 = vmax.f32 %v3728, %v3729
        %v3731 = vsel %vm2215, %v3563, -inf
        %v3732 = vsel %vm2215, %v3605, -inf
        %v3733 = vmax.f32 %v3731, %v3732
        %v3734 = vsel %vm2215, %v3570, -inf
        %v3735 = vsel %vm2215, %v3612, -inf
        %v3736 = vmax.f32 %v3734, %v3735
        %v3737 = vsel %vm2215, %v3577, -inf
        %v3738 = vsel %vm2215, %v3619, -inf
        %v3739 = vmax.f32 %v3737, %v3738
        %v3740 = vsel %vm2215, %v3584, -inf
        %v3741 = vsel %vm2215, %v3626, -inf
        %v3742 = vmax.f32 %v3740, %v3741
        %v3743 = vsel %vm2215, %v3591, -inf
        %v3744 = vsel %vm2215, %v3633, -inf
        %v3745 = vmax.f32 %v3743, %v3744
        %v3746 = vsel %vm2215, %v3598, -inf
        %v3747 = vsel %vm2215, %v3640, -inf
        %v3748 = vmax.f32 %v3746, %v3747
        %3750 = vrot.lane.b32.xlu0 %v3646, 64
        %v3751 = vpop.permute.xlu0 %3750
        %3754 = vrot.lane.b32.xlu0 %v3652, 64
        %v3755 = vpop.permute.xlu0 %3754
        %3758 = vrot.lane.b32.xlu0 %v3658, 64
        %v3759 = vpop.permute.xlu0 %3758
        %3762 = vrot.lane.b32.xlu0 %v3664, 64
        %v3763 = vpop.permute.xlu0 %3762
        %3766 = vrot.lane.b32.xlu0 %v3670, 64
        %v3767 = vpop.permute.xlu0 %3766
        %3770 = vrot.lane.b32.xlu0 %v3676, 64
        %v3771 = vpop.permute.xlu0 %3770
        %3774 = vrot.lane.b32.xlu0 %v3682, 64
        %v3775 = vpop.permute.xlu0 %3774
        %3778 = vrot.lane.b32.xlu0 %v3688, 64
        %v3779 = vpop.permute.xlu0 %3778
        %v3781 = vsel %vm2215, %v3643, %v3751
        %v3782 = vsel %vm2215, %v3649, %v3755
        %v3783 = vsel %vm2215, %v3655, %v3759
        %v3784 = vsel %vm2215, %v3661, %v3763
        %v3785 = vsel %vm2215, %v3667, %v3767
        %v3786 = vsel %vm2215, %v3673, %v3771
        %v3787 = vsel %vm2215, %v3679, %v3775
        %v3788 = vsel %vm2215, %v3685, %v3779
        %3790 = vrot.lane.b32.xlu0 %v3694, 64
        %v3791 = vpop.permute.xlu0 %3790
        %3794 = vrot.lane.b32.xlu0 %v3700, 64
        %v3795 = vpop.permute.xlu0 %3794
        %3798 = vrot.lane.b32.xlu0 %v3706, 64
        %v3799 = vpop.permute.xlu0 %3798
        %3802 = vrot.lane.b32.xlu0 %v3712, 64
        %v3803 = vpop.permute.xlu0 %3802
        %3806 = vrot.lane.b32.xlu0 %v3718, 64
        %v3807 = vpop.permute.xlu0 %3806
        %3810 = vrot.lane.b32.xlu0 %v3724, 64
        %v3811 = vpop.permute.xlu0 %3810
        %3814 = vrot.lane.b32.xlu0 %v3730, 64
        %v3815 = vpop.permute.xlu0 %3814
        %3818 = vrot.lane.b32.xlu0 %v3736, 64
        %v3819 = vpop.permute.xlu0 %3818
        %v3821 = vsel %vm2215, %v3691, %v3791
        %v3822 = vsel %vm2215, %v3697, %v3795
        %v3823 = vsel %vm2215, %v3703, %v3799
        %v3824 = vsel %vm2215, %v3709, %v3803
        %v3825 = vsel %vm2215, %v3715, %v3807
        %v3826 = vsel %vm2215, %v3721, %v3811
        %v3827 = vsel %vm2215, %v3727, %v3815
        %v3828 = vsel %vm2215, %v3733, %v3819
        %3830 = vrot.lane.b32.xlu0 %v3742, 64
        %v3831 = vpop.permute.xlu0 %3830
        %3834 = vrot.lane.b32.xlu0 %v3748, 64
        %v3835 = vpop.permute.xlu0 %3834
        %v3837 = vsel %vm2215, %v3739, %v3831
        %v3838 = vsel %vm2215, %v3745, %v3835
        %v3839 = vpack.c.bf16 %v3781, %v3781
        %v3840 = vpack.c.bf16 %v3782, %v3782
        %v3841 = vpack.c.bf16 %v3783, %v3783
        %v3842 = vpack.c.bf16 %v3784, %v3784
        %v3843 = vpack.c.bf16 %v3785, %v3785
        %v3844 = vpack.c.bf16 %v3786, %v3786
        %v3845 = vpack.c.bf16 %v3787, %v3787
        %v3846 = vpack.c.bf16 %v3788, %v3788
        %v3847 = vpack.c.bf16 %v3821, %v3821
        %v3848 = vpack.c.bf16 %v3822, %v3822
        %v3849 = vpack.c.bf16 %v3823, %v3823
        %v3850 = vpack.c.bf16 %v3824, %v3824
        %v3851 = vpack.c.bf16 %v3825, %v3825
        %v3852 = vpack.c.bf16 %v3826, %v3826
        %v3853 = vpack.c.bf16 %v3827, %v3827
        %v3854 = vpack.c.bf16 %v3828, %v3828
        %v3855 = vpack.c.bf16 %v3837, %v3837
        %v3856 = vpack.c.bf16 %v3838, %v3838
        %v3857 = vld [vmem:[#allocation2] sm:$0xf]
        %v3858 = vld [vmem:[#allocation2 + $0x4] sm:$0xf]
        %v3859 = vld [vmem:[#allocation2 + $0x8] sm:$0xf]
        %v3860 = vld [vmem:[#allocation2 + $0xc] sm:$0xf]
        %v3861 = vld [vmem:[#allocation2 + $0x10] sm:$0xf]
        %v3862 = vld [vmem:[#allocation2 + $0x14] sm:$0xf]
        %v3863 = vld [vmem:[#allocation2 + $0x18] sm:$0xf]
        %v3864 = vld [vmem:[#allocation2 + $0x1c] sm:$0xf]
        %v3865 = vld [vmem:[#allocation2 + $0x20] sm:$0xf]
        %v3866 = vld [vmem:[#allocation2 + $0x24] sm:$0xf]
        %v3867 = vld [vmem:[#allocation2 + $0x28] sm:$0xf]
        %v3868 = vld [vmem:[#allocation2 + $0x2c] sm:$0xf]
        %v3869 = vld [vmem:[#allocation2 + $0x30] sm:$0xf]
        %v3870 = vld [vmem:[#allocation2 + $0x34] sm:$0xf]
        %v3871 = vld [vmem:[#allocation2 + $0x38] sm:$0xf]
        %v3872 = vld [vmem:[#allocation2 + $0x3c] sm:$0xf]
        %v3873 = vld [vmem:[#allocation2 + $0x40] sm:$0xf]
        %v3874 = vld [vmem:[#allocation2 + $0x44] sm:$0xf]
        %v3875 = vld [vmem:[#allocation2 + $0x48] sm:$0xf]
        %v3876 = vld [vmem:[#allocation2 + $0x4c] sm:$0xf]
        %v3877 = vld [vmem:[#allocation2 + $0x50] sm:$0xf]
        %v3878 = vld [vmem:[#allocation2 + $0x54] sm:$0xf]
        %v3879 = vld [vmem:[#allocation2 + $0x58] sm:$0xf]
        %v3880 = vld [vmem:[#allocation2 + $0x5c] sm:$0xf]
        %v3881 = vld [vmem:[#allocation2 + $0x60] sm:$0xf]
        %v3882 = vld [vmem:[#allocation2 + $0x64] sm:$0xf]
        %v3883 = vld [vmem:[#allocation2 + $0x68] sm:$0xf]
        %v3884 = vld [vmem:[#allocation2 + $0x6c] sm:$0xf]
        %v3885 = vld [vmem:[#allocation2 + $0x70] sm:$0xf]
        %v3886 = vld [vmem:[#allocation2 + $0x74] sm:$0xf]
        %v3887 = vld [vmem:[#allocation2 + $0x78] sm:$0xf]
        %v3888 = vld [vmem:[#allocation2 + $0x7c] sm:$0xf]
        %v3889 = vld [vmem:[#allocation2 + $0x80] sm:$0xf]
        %v3890 = vld [vmem:[#allocation2 + $0x84] sm:$0xf]
        %v3891 = vld [vmem:[#allocation2 + $0x88] sm:$0xf]
        %v3892 = vld [vmem:[#allocation2 + $0x8c] sm:$0xf]
        %v3893 = vld [vmem:[#allocation2 + $0x90] sm:$0xf]
        %v3894 = vld [vmem:[#allocation2 + $0x94] sm:$0xf]
        %v3895 = vld [vmem:[#allocation2 + $0x98] sm:$0xf]
        %v3896 = vld [vmem:[#allocation2 + $0x9c] sm:$0xf]
        %v3897 = vld [vmem:[#allocation2 + $0xa0] sm:$0xf]
        %v3898 = vld [vmem:[#allocation2 + $0xa4] sm:$0xf]
        %v3899 = vld [vmem:[#allocation2 + $0xa8] sm:$0xf]
        %v3900 = vld [vmem:[#allocation2 + $0xac] sm:$0xf]
        %v3901 = vld [vmem:[#allocation2 + $0xb0] sm:$0xf]
        %v3902 = vld [vmem:[#allocation2 + $0xb4] sm:$0xf]
        %v3903 = vld [vmem:[#allocation2 + $0xb8] sm:$0xf]
        %v3904 = vld [vmem:[#allocation2 + $0xbc] sm:$0xf]
        %v3905 = vld [vmem:[#allocation2 + $0xc0] sm:$0xf]
        %v3906 = vld [vmem:[#allocation2 + $0xc4] sm:$0xf]
        %v3907 = vld [vmem:[#allocation2 + $0xc8] sm:$0xf]
        %v3908 = vld [vmem:[#allocation2 + $0xcc] sm:$0xf]
        %v3909 = vld [vmem:[#allocation2 + $0xd0] sm:$0xf]
        %v3910 = vld [vmem:[#allocation2 + $0xd4] sm:$0xf]
        %v3911 = vld [vmem:[#allocation2 + $0xd8] sm:$0xf]
        %v3912 = vld [vmem:[#allocation2 + $0xdc] sm:$0xf]
        %v3913 = vld [vmem:[#allocation2 + $0xe0] sm:$0xf]
        %v3914 = vld [vmem:[#allocation2 + $0xe4] sm:$0xf]
        %v3915 = vld [vmem:[#allocation2 + $0xe8] sm:$0xf]
        %v3916 = vld [vmem:[#allocation2 + $0xec] sm:$0xf]
        %v3917 = vld [vmem:[#allocation2 + $0xf0] sm:$0xf]
        %v3918 = vld [vmem:[#allocation2 + $0xf4] sm:$0xf]
        %v3919 = vld [vmem:[#allocation2 + $0xf8] sm:$0xf]
        %v3920 = vld [vmem:[#allocation2 + $0xfc] sm:$0xf]
        %v3921 = vld [vmem:[#allocation2 + $0x100] sm:$0xf]
        %v3922 = vld [vmem:[#allocation2 + $0x104] sm:$0xf]
        %v3923 = vld [vmem:[#allocation2 + $0x108] sm:$0xf]
        %v3924 = vld [vmem:[#allocation2 + $0x10c] sm:$0xf]
        %v3925 = vld [vmem:[#allocation2 + $0x110] sm:$0xf]
        %v3926 = vld [vmem:[#allocation2 + $0x114] sm:$0xf]
        %v3927 = vld [vmem:[#allocation2 + $0x118] sm:$0xf]
        %v3928 = vld [vmem:[#allocation2 + $0x11c] sm:$0xf]
        %v3929 = vld [vmem:[#allocation2 + $0x120] sm:$0xf]
        %v3930 = vld [vmem:[#allocation2 + $0x124] sm:$0xf]
        %v3931 = vld [vmem:[#allocation2 + $0x128] sm:$0xf]
        %v3932 = vld [vmem:[#allocation2 + $0x12c] sm:$0xf]
        %v3933 = vld [vmem:[#allocation2 + $0x130] sm:$0xf]
        %v3934 = vld [vmem:[#allocation2 + $0x134] sm:$0xf]
        %v3935 = vld [vmem:[#allocation2 + $0x138] sm:$0xf]
        %v3936 = vld [vmem:[#allocation2 + $0x13c] sm:$0xf]
        %v3937 = vld [vmem:[#allocation2 + $0x140] sm:$0xf]
        %v3938 = vld [vmem:[#allocation2 + $0x144] sm:$0xf]
        %v3939 = vld [vmem:[#allocation2 + $0x148] sm:$0xf]
        %v3940 = vld [vmem:[#allocation2 + $0x14c] sm:$0xf]
        %v3941 = vld [vmem:[#allocation2 + $0x150] sm:$0xf]
        %v3942 = vld [vmem:[#allocation2 + $0x154] sm:$0xf]
        %v3943 = vld [vmem:[#allocation2 + $0x158] sm:$0xf]
        %v3944 = vld [vmem:[#allocation2 + $0x15c] sm:$0xf]
        %v3945 = vld [vmem:[#allocation2 + $0x160] sm:$0xf]
        %v3946 = vld [vmem:[#allocation2 + $0x164] sm:$0xf]
        %v3947 = vld [vmem:[#allocation2 + $0x168] sm:$0xf]
        %v3948 = vld [vmem:[#allocation2 + $0x16c] sm:$0xf]
        %v3949 = vld [vmem:[#allocation2 + $0x170] sm:$0xf]
        %v3950 = vld [vmem:[#allocation2 + $0x174] sm:$0xf]
        %v3951 = vld [vmem:[#allocation2 + $0x178] sm:$0xf]
        %v3952 = vld [vmem:[#allocation2 + $0x17c] sm:$0xf]
        %v3953 = vld [vmem:[#allocation2 + $0x180] sm:$0xf]
        %v3954 = vld [vmem:[#allocation2 + $0x184] sm:$0xf]
        %v3955 = vld [vmem:[#allocation2 + $0x188] sm:$0xf]
        %v3956 = vld [vmem:[#allocation2 + $0x18c] sm:$0xf]
        %v3957 = vld [vmem:[#allocation2 + $0x190] sm:$0xf]
        %v3958 = vld [vmem:[#allocation2 + $0x194] sm:$0xf]
        %v3959 = vld [vmem:[#allocation2 + $0x198] sm:$0xf]
        %v3960 = vld [vmem:[#allocation2 + $0x19c] sm:$0xf]
        %v3961 = vld [vmem:[#allocation2 + $0x1a0] sm:$0xf]
        %v3962 = vld [vmem:[#allocation2 + $0x1a4] sm:$0xf]
        %v3963 = vld [vmem:[#allocation2 + $0x1a8] sm:$0xf]
        %v3964 = vld [vmem:[#allocation2 + $0x1ac] sm:$0xf]
        %v3965 = vld [vmem:[#allocation2 + $0x1b0] sm:$0xf]
        %v3966 = vld [vmem:[#allocation2 + $0x1b4] sm:$0xf]
        %v3967 = vld [vmem:[#allocation2 + $0x1b8] sm:$0xf]
        %v3968 = vld [vmem:[#allocation2 + $0x1bc] sm:$0xf]
        %v3969 = vld [vmem:[#allocation2 + $0x1c0] sm:$0xf]
        %v3970 = vld [vmem:[#allocation2 + $0x1c4] sm:$0xf]
        %v3971 = vld [vmem:[#allocation2 + $0x1c8] sm:$0xf]
        %v3972 = vld [vmem:[#allocation2 + $0x1cc] sm:$0xf]
        %v3973 = vld [vmem:[#allocation2 + $0x1d0] sm:$0xf]
        %v3974 = vld [vmem:[#allocation2 + $0x1d4] sm:$0xf]
        %v3975 = vld [vmem:[#allocation2 + $0x1d8] sm:$0xf]
        %v3976 = vld [vmem:[#allocation2 + $0x1dc] sm:$0xf]
        %v3977 = vld [vmem:[#allocation2 + $0x1e0] sm:$0xf]
        %v3978 = vld [vmem:[#allocation2 + $0x1e4] sm:$0xf]
        %v3979 = vld [vmem:[#allocation2 + $0x1e8] sm:$0xf]
        %v3980 = vld [vmem:[#allocation2 + $0x1ec] sm:$0xf]
        %v3981 = vld [vmem:[#allocation2 + $0x1f0] sm:$0xf]
        %v3982 = vld [vmem:[#allocation2 + $0x1f4] sm:$0xf]
        %v3983 = vld [vmem:[#allocation2 + $0x1f8] sm:$0xf]
        %v3984 = vld [vmem:[#allocation2 + $0x1fc] sm:$0xf]
        %v3985 = vld [vmem:[#allocation2 + $0x200] sm:$0xf]
        %v3986 = vld [vmem:[#allocation2 + $0x204] sm:$0xf]
        %v3987 = vld [vmem:[#allocation2 + $0x208] sm:$0xf]
        %v3988 = vld [vmem:[#allocation2 + $0x20c] sm:$0xf]
        %v3989 = vld [vmem:[#allocation2 + $0x210] sm:$0xf]
        %v3990 = vld [vmem:[#allocation2 + $0x214] sm:$0xf]
        %v3991 = vld [vmem:[#allocation2 + $0x218] sm:$0xf]
        %v3992 = vld [vmem:[#allocation2 + $0x21c] sm:$0xf]
        %v3993 = vld [vmem:[#allocation2 + $0x220] sm:$0xf]
        %v3994 = vld [vmem:[#allocation2 + $0x224] sm:$0xf]
        %v3995 = vld [vmem:[#allocation2 + $0x228] sm:$0xf]
        %v3996 = vld [vmem:[#allocation2 + $0x22c] sm:$0xf]
        %v3997 = vld [vmem:[#allocation2 + $0x230] sm:$0xf]
        %v3998 = vld [vmem:[#allocation2 + $0x234] sm:$0xf]
        %v3999 = vld [vmem:[#allocation2 + $0x238] sm:$0xf]
        %v4000 = vld [vmem:[#allocation2 + $0x23c] sm:$0xf]
        %v4001 = vld [vmem:[#allocation2 + $0x240] sm:$0xf]
        %v4002 = vld [vmem:[#allocation2 + $0x244] sm:$0xf]
        %v4003 = vld [vmem:[#allocation2 + $0x248] sm:$0xf]
        %v4004 = vld [vmem:[#allocation2 + $0x24c] sm:$0xf]
        %v4005 = vld [vmem:[#allocation2 + $0x250] sm:$0xf]
        %v4006 = vld [vmem:[#allocation2 + $0x254] sm:$0xf]
        %v4007 = vld [vmem:[#allocation2 + $0x258] sm:$0xf]
        %v4008 = vld [vmem:[#allocation2 + $0x25c] sm:$0xf]
        %v4009 = vld [vmem:[#allocation2 + $0x260] sm:$0xf]
        %v4010 = vld [vmem:[#allocation2 + $0x264] sm:$0xf]
        %v4011 = vld [vmem:[#allocation2 + $0x268] sm:$0xf]
        %v4012 = vld [vmem:[#allocation2 + $0x26c] sm:$0xf]
        %v4013 = vld [vmem:[#allocation2 + $0x270] sm:$0xf]
        %v4014 = vld [vmem:[#allocation2 + $0x274] sm:$0xf]
        %v4015 = vld [vmem:[#allocation2 + $0x278] sm:$0xf]
        %v4016 = vld [vmem:[#allocation2 + $0x27c] sm:$0xf]
        %v4017 = vld [vmem:[#allocation2 + $0x280] sm:$0xf]
        %v4018 = vld [vmem:[#allocation2 + $0x284] sm:$0xf]
        %v4019 = vld [vmem:[#allocation2 + $0x288] sm:$0xf]
        %v4020 = vld [vmem:[#allocation2 + $0x28c] sm:$0xf]
        %v4021 = vld [vmem:[#allocation2 + $0x290] sm:$0xf]
        %v4022 = vld [vmem:[#allocation2 + $0x294] sm:$0xf]
        %v4023 = vld [vmem:[#allocation2 + $0x298] sm:$0xf]
        %v4024 = vld [vmem:[#allocation2 + $0x29c] sm:$0xf]
        %v4025 = vld [vmem:[#allocation2 + $0x2a0] sm:$0xf]
        %v4026 = vld [vmem:[#allocation2 + $0x2a4] sm:$0xf]
        %v4027 = vld [vmem:[#allocation2 + $0x2a8] sm:$0xf]
        %v4028 = vld [vmem:[#allocation2 + $0x2ac] sm:$0xf]
        %v4029 = vld [vmem:[#allocation2 + $0x2b0] sm:$0xf]
        %v4030 = vld [vmem:[#allocation2 + $0x2b4] sm:$0xf]
        %v4031 = vld [vmem:[#allocation2 + $0x2b8] sm:$0xf]
        %v4032 = vld [vmem:[#allocation2 + $0x2bc] sm:$0xf]
        %v4033 = vld [vmem:[#allocation2 + $0x2c0] sm:$0xf]
        %v4034 = vld [vmem:[#allocation2 + $0x2c4] sm:$0xf]
        %v4035 = vld [vmem:[#allocation2 + $0x2c8] sm:$0xf]
        %v4036 = vld [vmem:[#allocation2 + $0x2cc] sm:$0xf]
        %v4037 = vld [vmem:[#allocation2 + $0x2d0] sm:$0xf]
        %v4038 = vld [vmem:[#allocation2 + $0x2d4] sm:$0xf]
        %v4039 = vld [vmem:[#allocation2 + $0x2d8] sm:$0xf]
        %v4040 = vld [vmem:[#allocation2 + $0x2dc] sm:$0xf]
        %v4041 = vld [vmem:[#allocation2 + $0x2e0] sm:$0xf]
        %v4042 = vld [vmem:[#allocation2 + $0x2e4] sm:$0xf]
        %v4043 = vld [vmem:[#allocation2 + $0x2e8] sm:$0xf]
        %v4044 = vld [vmem:[#allocation2 + $0x2ec] sm:$0xf]
        %v4045 = vld [vmem:[#allocation2 + $0x2f0] sm:$0xf]
        %v4046 = vld [vmem:[#allocation2 + $0x2f4] sm:$0xf]
        %v4047 = vld [vmem:[#allocation2 + $0x2f8] sm:$0xf]
        %v4048 = vld [vmem:[#allocation2 + $0x2fc] sm:$0xf]
        %v4049 = vld [vmem:[#allocation2 + $0x300] sm:$0xf]
        %v4050 = vld [vmem:[#allocation2 + $0x304] sm:$0xf]
        %v4051 = vld [vmem:[#allocation2 + $0x308] sm:$0xf]
        %v4052 = vld [vmem:[#allocation2 + $0x30c] sm:$0xf]
        %v4053 = vld [vmem:[#allocation2 + $0x310] sm:$0xf]
        %v4054 = vld [vmem:[#allocation2 + $0x314] sm:$0xf]
        %v4055 = vld [vmem:[#allocation2 + $0x318] sm:$0xf]
        %v4056 = vld [vmem:[#allocation2 + $0x31c] sm:$0xf]
        %v4057 = vld [vmem:[#allocation2 + $0x320] sm:$0xf]
        %v4058 = vld [vmem:[#allocation2 + $0x324] sm:$0xf]
        %v4059 = vld [vmem:[#allocation2 + $0x328] sm:$0xf]
        %v4060 = vld [vmem:[#allocation2 + $0x32c] sm:$0xf]
        %v4061 = vld [vmem:[#allocation2 + $0x330] sm:$0xf]
        %v4062 = vld [vmem:[#allocation2 + $0x334] sm:$0xf]
        %v4063 = vld [vmem:[#allocation2 + $0x338] sm:$0xf]
        %v4064 = vld [vmem:[#allocation2 + $0x33c] sm:$0xf]
        %v4065 = vld [vmem:[#allocation2 + $0x340] sm:$0xf]
        %v4066 = vld [vmem:[#allocation2 + $0x344] sm:$0xf]
        %v4067 = vld [vmem:[#allocation2 + $0x348] sm:$0xf]
        %v4068 = vld [vmem:[#allocation2 + $0x34c] sm:$0xf]
        %v4069 = vld [vmem:[#allocation2 + $0x350] sm:$0xf]
        %v4070 = vld [vmem:[#allocation2 + $0x354] sm:$0xf]
        %v4071 = vld [vmem:[#allocation2 + $0x358] sm:$0xf]
        %v4072 = vld [vmem:[#allocation2 + $0x35c] sm:$0xf]
        %v4073 = vld [vmem:[#allocation2 + $0x360] sm:$0xf]
        %v4074 = vld [vmem:[#allocation2 + $0x364] sm:$0xf]
        %v4075 = vld [vmem:[#allocation2 + $0x368] sm:$0xf]
        %v4076 = vld [vmem:[#allocation2 + $0x36c] sm:$0xf]
        %v4077 = vld [vmem:[#allocation2 + $0x370] sm:$0xf]
        %v4078 = vld [vmem:[#allocation2 + $0x374] sm:$0xf]
        %v4079 = vld [vmem:[#allocation2 + $0x378] sm:$0xf]
        %v4080 = vld [vmem:[#allocation2 + $0x37c] sm:$0xf]
        %v4081 = vld [vmem:[#allocation2 + $0x380] sm:$0xf]
        %v4082 = vld [vmem:[#allocation2 + $0x384] sm:$0xf]
        %v4083 = vld [vmem:[#allocation2 + $0x388] sm:$0xf]
        %v4084 = vld [vmem:[#allocation2 + $0x38c] sm:$0xf]
        %v4085 = vld [vmem:[#allocation2 + $0x390] sm:$0xf]
        %v4086 = vld [vmem:[#allocation2 + $0x394] sm:$0xf]
        %v4087 = vld [vmem:[#allocation2 + $0x398] sm:$0xf]
        %v4088 = vld [vmem:[#allocation2 + $0x39c] sm:$0xf]
        %v4089 = vld [vmem:[#allocation2 + $0x3a0] sm:$0xf]
        %v4090 = vld [vmem:[#allocation2 + $0x3a4] sm:$0xf]
        %v4091 = vld [vmem:[#allocation2 + $0x3a8] sm:$0xf]
        %v4092 = vld [vmem:[#allocation2 + $0x3ac] sm:$0xf]
        %v4093 = vld [vmem:[#allocation2 + $0x3b0] sm:$0xf]
        %v4094 = vld [vmem:[#allocation2 + $0x3b4] sm:$0xf]
        %v4095 = vld [vmem:[#allocation2 + $0x3b8] sm:$0xf]
        %v4096 = vld [vmem:[#allocation2 + $0x3bc] sm:$0xf]
        %v4097 = vld [vmem:[#allocation2 + $0x3c0] sm:$0xf]
        %v4098 = vld [vmem:[#allocation2 + $0x3c4] sm:$0xf]
        %v4099 = vld [vmem:[#allocation2 + $0x3c8] sm:$0xf]
        %v4100 = vld [vmem:[#allocation2 + $0x3cc] sm:$0xf]
        %v4101 = vld [vmem:[#allocation2 + $0x3d0] sm:$0xf]
        %v4102 = vld [vmem:[#allocation2 + $0x3d4] sm:$0xf]
        %v4103 = vld [vmem:[#allocation2 + $0x3d8] sm:$0xf]
        %v4104 = vld [vmem:[#allocation2 + $0x3dc] sm:$0xf]
        %v4105 = vld [vmem:[#allocation2 + $0x3e0] sm:$0xf]
        %v4106 = vld [vmem:[#allocation2 + $0x3e4] sm:$0xf]
        %v4107 = vld [vmem:[#allocation2 + $0x3e8] sm:$0xf]
        %v4108 = vld [vmem:[#allocation2 + $0x3ec] sm:$0xf]
        %v4109 = vld [vmem:[#allocation2 + $0x3f0] sm:$0xf]
        %v4110 = vld [vmem:[#allocation2 + $0x3f4] sm:$0xf]
        %v4111 = vld [vmem:[#allocation2 + $0x3f8] sm:$0xf]
        %v4112 = vld [vmem:[#allocation2 + $0x3fc] sm:$0xf]
        %v4113 = vld [vmem:[#allocation2 + $0x400] sm:$0xf]
        %v4114 = vld [vmem:[#allocation2 + $0x404] sm:$0xf]
        %v4115 = vld [vmem:[#allocation2 + $0x408] sm:$0xf]
        %v4116 = vld [vmem:[#allocation2 + $0x40c] sm:$0xf]
        %v4117 = vld [vmem:[#allocation2 + $0x410] sm:$0xf]
        %v4118 = vld [vmem:[#allocation2 + $0x414] sm:$0xf]
        %v4119 = vld [vmem:[#allocation2 + $0x418] sm:$0xf]
        %v4120 = vld [vmem:[#allocation2 + $0x41c] sm:$0xf]
        %v4121 = vld [vmem:[#allocation2 + $0x420] sm:$0xf]
        %v4122 = vld [vmem:[#allocation2 + $0x424] sm:$0xf]
        %v4123 = vld [vmem:[#allocation2 + $0x428] sm:$0xf]
        %v4124 = vld [vmem:[#allocation2 + $0x42c] sm:$0xf]
        %v4125 = vld [vmem:[#allocation2 + $0x430] sm:$0xf]
        %v4126 = vld [vmem:[#allocation2 + $0x434] sm:$0xf]
        %v4127 = vld [vmem:[#allocation2 + $0x438] sm:$0xf]
        %v4128 = vld [vmem:[#allocation2 + $0x43c] sm:$0xf]
        %v4129 = vld [vmem:[#allocation2 + $0x440] sm:$0xf]
        %v4130 = vld [vmem:[#allocation2 + $0x444] sm:$0xf]
        %v4131 = vld [vmem:[#allocation2 + $0x448] sm:$0xf]
        %v4132 = vld [vmem:[#allocation2 + $0x44c] sm:$0xf]
        %v4133 = vld [vmem:[#allocation2 + $0x450] sm:$0xf]
        %v4134 = vld [vmem:[#allocation2 + $0x454] sm:$0xf]
        %v4135 = vld [vmem:[#allocation2 + $0x458] sm:$0xf]
        %v4136 = vld [vmem:[#allocation2 + $0x45c] sm:$0xf]
        %v4137 = vld [vmem:[#allocation2 + $0x460] sm:$0xf]
        %v4138 = vld [vmem:[#allocation2 + $0x464] sm:$0xf]
        %v4139 = vld [vmem:[#allocation2 + $0x468] sm:$0xf]
        %v4140 = vld [vmem:[#allocation2 + $0x46c] sm:$0xf]
        %v4141 = vld [vmem:[#allocation2 + $0x470] sm:$0xf]
        %v4142 = vld [vmem:[#allocation2 + $0x474] sm:$0xf]
        %v4143 = vld [vmem:[#allocation2 + $0x478] sm:$0xf]
        %v4144 = vld [vmem:[#allocation2 + $0x47c] sm:$0xf]
        %v4145 = vld [vmem:[%s6] sm:$0x1]
        %v4434 = vunpack.c.l.b16 %v3857
        %v4435 = vunpack.c.l.b16 %v3858
        %v4436 = vunpack.c.l.b16 %v3859
        %v4437 = vunpack.c.l.b16 %v3860
        %v4438 = vunpack.c.l.b16 %v3861
        %v4439 = vunpack.c.l.b16 %v3862
        %v4440 = vunpack.c.l.b16 %v3863
        %v4441 = vunpack.c.l.b16 %v3864
        %v4442 = vunpack.c.l.b16 %v3865
        %v4443 = vunpack.c.l.b16 %v3866
        %v4444 = vunpack.c.l.b16 %v3867
        %v4445 = vunpack.c.l.b16 %v3868
        %v4446 = vunpack.c.l.b16 %v3869
        %v4447 = vunpack.c.l.b16 %v3870
        %v4448 = vunpack.c.l.b16 %v3871
        %v4449 = vunpack.c.l.b16 %v3872
        %v4450 = vunpack.c.l.b16 %v3873
        %v4451 = vunpack.c.l.b16 %v3874
        %v4452 = vunpack.c.l.b16 %v3875
        %v4453 = vunpack.c.l.b16 %v3876
        %v4454 = vunpack.c.l.b16 %v3877
        %v4455 = vunpack.c.l.b16 %v3878
        %v4456 = vunpack.c.l.b16 %v3879
        %v4457 = vunpack.c.l.b16 %v3880
        %v4458 = vunpack.c.l.b16 %v3881
        %v4459 = vunpack.c.l.b16 %v3882
        %v4460 = vunpack.c.l.b16 %v3883
        %v4461 = vunpack.c.l.b16 %v3884
        %v4462 = vunpack.c.l.b16 %v3885
        %v4463 = vunpack.c.l.b16 %v3886
        %v4464 = vunpack.c.l.b16 %v3887
        %v4465 = vunpack.c.l.b16 %v3888
        %v4466 = vunpack.c.l.b16 %v3889
        %v4467 = vunpack.c.l.b16 %v3890
        %v4468 = vunpack.c.l.b16 %v3891
        %v4469 = vunpack.c.l.b16 %v3892
        %v4470 = vunpack.c.l.b16 %v3893
        %v4471 = vunpack.c.l.b16 %v3894
        %v4472 = vunpack.c.l.b16 %v3895
        %v4473 = vunpack.c.l.b16 %v3896
        %v4474 = vunpack.c.l.b16 %v3897
        %v4475 = vunpack.c.l.b16 %v3898
        %v4476 = vunpack.c.l.b16 %v3899
        %v4477 = vunpack.c.l.b16 %v3900
        %v4478 = vunpack.c.l.b16 %v3901
        %v4479 = vunpack.c.l.b16 %v3902
        %v4480 = vunpack.c.l.b16 %v3903
        %v4481 = vunpack.c.l.b16 %v3904
        %v4482 = vunpack.c.l.b16 %v3905
        %v4483 = vunpack.c.l.b16 %v3906
        %v4484 = vunpack.c.l.b16 %v3907
        %v4485 = vunpack.c.l.b16 %v3908
        %v4486 = vunpack.c.l.b16 %v3909
        %v4487 = vunpack.c.l.b16 %v3910
        %v4488 = vunpack.c.l.b16 %v3911
        %v4489 = vunpack.c.l.b16 %v3912
        %v4490 = vunpack.c.l.b16 %v3913
        %v4491 = vunpack.c.l.b16 %v3914
        %v4492 = vunpack.c.l.b16 %v3915
        %v4493 = vunpack.c.l.b16 %v3916
        %v4494 = vunpack.c.l.b16 %v3917
        %v4495 = vunpack.c.l.b16 %v3918
        %v4496 = vunpack.c.l.b16 %v3919
        %v4497 = vunpack.c.l.b16 %v3920
        %v4498 = vunpack.c.l.b16 %v3921
        %v4499 = vunpack.c.l.b16 %v3922
        %v4500 = vunpack.c.l.b16 %v3923
        %v4501 = vunpack.c.l.b16 %v3924
        %v4502 = vunpack.c.l.b16 %v3925
        %v4503 = vunpack.c.l.b16 %v3926
        %v4504 = vunpack.c.l.b16 %v3927
        %v4505 = vunpack.c.l.b16 %v3928
        %v4506 = vunpack.c.l.b16 %v3929
        %v4507 = vunpack.c.l.b16 %v3930
        %v4508 = vunpack.c.l.b16 %v3931
        %v4509 = vunpack.c.l.b16 %v3932
        %v4510 = vunpack.c.l.b16 %v3933
        %v4511 = vunpack.c.l.b16 %v3934
        %v4512 = vunpack.c.l.b16 %v3935
        %v4513 = vunpack.c.l.b16 %v3936
        %v4514 = vunpack.c.l.b16 %v3937
        %v4515 = vunpack.c.l.b16 %v3938
        %v4516 = vunpack.c.l.b16 %v3939
        %v4517 = vunpack.c.l.b16 %v3940
        %v4518 = vunpack.c.l.b16 %v3941
        %v4519 = vunpack.c.l.b16 %v3942
        %v4520 = vunpack.c.l.b16 %v3943
        %v4521 = vunpack.c.l.b16 %v3944
        %v4522 = vunpack.c.l.b16 %v3945
        %v4523 = vunpack.c.l.b16 %v3946
        %v4524 = vunpack.c.l.b16 %v3947
        %v4525 = vunpack.c.l.b16 %v3948
        %v4526 = vunpack.c.l.b16 %v3949
        %v4527 = vunpack.c.l.b16 %v3950
        %v4528 = vunpack.c.l.b16 %v3951
        %v4529 = vunpack.c.l.b16 %v3952
        %v4530 = vunpack.c.l.b16 %v3953
        %v4531 = vunpack.c.l.b16 %v3954
        %v4532 = vunpack.c.l.b16 %v3955
        %v4533 = vunpack.c.l.b16 %v3956
        %v4534 = vunpack.c.l.b16 %v3957
        %v4535 = vunpack.c.l.b16 %v3958
        %v4536 = vunpack.c.l.b16 %v3959
        %v4537 = vunpack.c.l.b16 %v3960
        %v4538 = vunpack.c.l.b16 %v3961
        %v4539 = vunpack.c.l.b16 %v3962
        %v4540 = vunpack.c.l.b16 %v3963
        %v4541 = vunpack.c.l.b16 %v3964
        %v4542 = vunpack.c.l.b16 %v3965
        %v4543 = vunpack.c.l.b16 %v3966
        %v4544 = vunpack.c.l.b16 %v3967
        %v4545 = vunpack.c.l.b16 %v3968
        %v4546 = vunpack.c.l.b16 %v3969
        %v4547 = vunpack.c.l.b16 %v3970
        %v4548 = vunpack.c.l.b16 %v3971
        %v4549 = vunpack.c.l.b16 %v3972
        %v4550 = vunpack.c.l.b16 %v3973
        %v4551 = vunpack.c.l.b16 %v3974
        %v4552 = vunpack.c.l.b16 %v3975
        %v4553 = vunpack.c.l.b16 %v3976
        %v4554 = vunpack.c.l.b16 %v3977
        %v4555 = vunpack.c.l.b16 %v3978
        %v4556 = vunpack.c.l.b16 %v3979
        %v4557 = vunpack.c.l.b16 %v3980
        %v4558 = vunpack.c.l.b16 %v3981
        %v4559 = vunpack.c.l.b16 %v3982
        %v4560 = vunpack.c.l.b16 %v3983
        %v4561 = vunpack.c.l.b16 %v3984
        %v4562 = vunpack.c.l.b16 %v3985
        %v4563 = vunpack.c.l.b16 %v3986
        %v4564 = vunpack.c.l.b16 %v3987
        %v4565 = vunpack.c.l.b16 %v3988
        %v4566 = vunpack.c.l.b16 %v3989
        %v4567 = vunpack.c.l.b16 %v3990
        %v4568 = vunpack.c.l.b16 %v3991
        %v4569 = vunpack.c.l.b16 %v3992
        %v4570 = vunpack.c.l.b16 %v3993
        %v4571 = vunpack.c.l.b16 %v3994
        %v4572 = vunpack.c.l.b16 %v3995
        %v4573 = vunpack.c.l.b16 %v3996
        %v4574 = vunpack.c.l.b16 %v3997
        %v4575 = vunpack.c.l.b16 %v3998
        %v4576 = vunpack.c.l.b16 %v3999
        %v4577 = vunpack.c.l.b16 %v4000
        %v4578 = vunpack.c.l.b16 %v4001
        %v4579 = vunpack.c.l.b16 %v4002
        %v4580 = vunpack.c.l.b16 %v4003
        %v4581 = vunpack.c.l.b16 %v4004
        %v4582 = vunpack.c.l.b16 %v4005
        %v4583 = vunpack.c.l.b16 %v4006
        %v4584 = vunpack.c.l.b16 %v4007
        %v4585 = vunpack.c.l.b16 %v4008
        %v4586 = vunpack.c.l.b16 %v4009
        %v4587 = vunpack.c.l.b16 %v4010
        %v4588 = vunpack.c.l.b16 %v4011
        %v4589 = vunpack.c.l.b16 %v4012
        %v4590 = vunpack.c.l.b16 %v4013
        %v4591 = vunpack.c.l.b16 %v4014
        %v4592 = vunpack.c.l.b16 %v4015
        %v4593 = vunpack.c.l.b16 %v4016
        %v4594 = vunpack.c.l.b16 %v4017
        %v4595 = vunpack.c.l.b16 %v4018
        %v4596 = vunpack.c.l.b16 %v4019
        %v4597 = vunpack.c.l.b16 %v4020
        %v4598 = vunpack.c.l.b16 %v4021
        %v4599 = vunpack.c.l.b16 %v4022
        %v4600 = vunpack.c.l.b16 %v4023
        %v4601 = vunpack.c.l.b16 %v4024
        %v4602 = vunpack.c.l.b16 %v4025
        %v4603 = vunpack.c.l.b16 %v4026
        %v4604 = vunpack.c.l.b16 %v4027
        %v4605 = vunpack.c.l.b16 %v4028
        %v4606 = vunpack.c.l.b16 %v4029
        %v4607 = vunpack.c.l.b16 %v4030
        %v4608 = vunpack.c.l.b16 %v4031
        %v4609 = vunpack.c.l.b16 %v4032
        %v4610 = vunpack.c.l.b16 %v4033
        %v4611 = vunpack.c.l.b16 %v4034
        %v4612 = vunpack.c.l.b16 %v4035
        %v4613 = vunpack.c.l.b16 %v4036
        %v4614 = vunpack.c.l.b16 %v4037
        %v4615 = vunpack.c.l.b16 %v4038
        %v4616 = vunpack.c.l.b16 %v4039
        %v4617 = vunpack.c.l.b16 %v4040
        %v4618 = vunpack.c.l.b16 %v4041
        %v4619 = vunpack.c.l.b16 %v4042
        %v4620 = vunpack.c.l.b16 %v4043
        %v4621 = vunpack.c.l.b16 %v4044
        %v4622 = vunpack.c.l.b16 %v4045
        %v4623 = vunpack.c.l.b16 %v4046
        %v4624 = vunpack.c.l.b16 %v4047
        %v4625 = vunpack.c.l.b16 %v4048
        %v4626 = vunpack.c.l.b16 %v4049
        %v4627 = vunpack.c.l.b16 %v4050
        %v4628 = vunpack.c.l.b16 %v4051
        %v4629 = vunpack.c.l.b16 %v4052
        %v4630 = vunpack.c.l.b16 %v4053
        %v4631 = vunpack.c.l.b16 %v4054
        %v4632 = vunpack.c.l.b16 %v4055
        %v4633 = vunpack.c.l.b16 %v4056
        %v4634 = vunpack.c.l.b16 %v4057
        %v4635 = vunpack.c.l.b16 %v4058
        %v4636 = vunpack.c.l.b16 %v4059
        %v4637 = vunpack.c.l.b16 %v4060
        %v4638 = vunpack.c.l.b16 %v4061
        %v4639 = vunpack.c.l.b16 %v4062
        %v4640 = vunpack.c.l.b16 %v4063
        %v4641 = vunpack.c.l.b16 %v4064
        %v4642 = vunpack.c.l.b16 %v4065
        %v4643 = vunpack.c.l.b16 %v4066
        %v4644 = vunpack.c.l.b16 %v4067
        %v4645 = vunpack.c.l.b16 %v4068
        %v4646 = vunpack.c.l.b16 %v4069
        %v4647 = vunpack.c.l.b16 %v4070
        %v4648 = vunpack.c.l.b16 %v4071
        %v4649 = vunpack.c.l.b16 %v4072
        %v4650 = vunpack.c.l.b16 %v4073
        %v4651 = vunpack.c.l.b16 %v4074
        %v4652 = vunpack.c.l.b16 %v4075
        %v4653 = vunpack.c.l.b16 %v4076
        %v4654 = vunpack.c.l.b16 %v4077
        %v4655 = vunpack.c.l.b16 %v4078
        %v4656 = vunpack.c.l.b16 %v4079
        %v4657 = vunpack.c.l.b16 %v4080
        %v4658 = vunpack.c.l.b16 %v4081
        %v4659 = vunpack.c.l.b16 %v4082
        %v4660 = vunpack.c.l.b16 %v4083
        %v4661 = vunpack.c.l.b16 %v4084
        %v4662 = vunpack.c.l.b16 %v4085
        %v4663 = vunpack.c.l.b16 %v4086
        %v4664 = vunpack.c.l.b16 %v4087
        %v4665 = vunpack.c.l.b16 %v4088
        %v4666 = vunpack.c.l.b16 %v4089
        %v4667 = vunpack.c.l.b16 %v4090
        %v4668 = vunpack.c.l.b16 %v4091
        %v4669 = vunpack.c.l.b16 %v4092
        %v4670 = vunpack.c.l.b16 %v4093
        %v4671 = vunpack.c.l.b16 %v4094
        %v4672 = vunpack.c.l.b16 %v4095
        %v4673 = vunpack.c.l.b16 %v4096
        %v4674 = vunpack.c.l.b16 %v4097
        %v4675 = vunpack.c.l.b16 %v4098
        %v4676 = vunpack.c.l.b16 %v4099
        %v4677 = vunpack.c.l.b16 %v4100
        %v4678 = vunpack.c.l.b16 %v4101
        %v4679 = vunpack.c.l.b16 %v4102
        %v4680 = vunpack.c.l.b16 %v4103
        %v4681 = vunpack.c.l.b16 %v4104
        %v4682 = vunpack.c.l.b16 %v4105
        %v4683 = vunpack.c.l.b16 %v4106
        %v4684 = vunpack.c.l.b16 %v4107
        %v4685 = vunpack.c.l.b16 %v4108
        %v4686 = vunpack.c.l.b16 %v4109
        %v4687 = vunpack.c.l.b16 %v4110
        %v4688 = vunpack.c.l.b16 %v4111
        %v4689 = vunpack.c.l.b16 %v4112
        %v4690 = vunpack.c.l.b16 %v4113
        %v4691 = vunpack.c.l.b16 %v4114
        %v4692 = vunpack.c.l.b16 %v4115
        %v4693 = vunpack.c.l.b16 %v4116
        %v4694 = vunpack.c.l.b16 %v4117
        %v4695 = vunpack.c.l.b16 %v4118
        %v4696 = vunpack.c.l.b16 %v4119
        %v4697 = vunpack.c.l.b16 %v4120
        %v4698 = vunpack.c.l.b16 %v4121
        %v4699 = vunpack.c.l.b16 %v4122
        %v4700 = vunpack.c.l.b16 %v4123
        %v4701 = vunpack.c.l.b16 %v4124
        %v4702 = vunpack.c.l.b16 %v4125
        %v4703 = vunpack.c.l.b16 %v4126
        %v4704 = vunpack.c.l.b16 %v4127
        %v4705 = vunpack.c.l.b16 %v4128
        %v4706 = vunpack.c.l.b16 %v4129
        %v4707 = vunpack.c.l.b16 %v4130
        %v4708 = vunpack.c.l.b16 %v4131
        %v4709 = vunpack.c.l.b16 %v4132
        %v4710 = vunpack.c.l.b16 %v4133
        %v4711 = vunpack.c.l.b16 %v4134
        %v4712 = vunpack.c.l.b16 %v4135
        %v4713 = vunpack.c.l.b16 %v4136
        %v4714 = vunpack.c.l.b16 %v4137
        %v4715 = vunpack.c.l.b16 %v4138
        %v4716 = vunpack.c.l.b16 %v4139
        %v4717 = vunpack.c.l.b16 %v4140
        %v4718 = vunpack.c.l.b16 %v4141
        %v4719 = vunpack.c.l.b16 %v4142
        %v4720 = vunpack.c.l.b16 %v4143
        %v4721 = vunpack.c.l.b16 %v4144
        %v4722 = vpack.c.b16 %v4435, %v4434
        %v4723 = vpack.c.b16 %v4437, %v4436
        %v4724 = vpack.c.b16 %v4439, %v4438
        %v4725 = vpack.c.b16 %v4441, %v4440
        %v4726 = vpack.c.b16 %v4443, %v4442
        %v4727 = vpack.c.b16 %v4445, %v4444
        %v4728 = vpack.c.b16 %v4447, %v4446
        %v4729 = vpack.c.b16 %v4449, %v4448
        %v4730 = vpack.c.b16 %v4451, %v4450
        %v4731 = vpack.c.b16 %v4453, %v4452
        %v4732 = vpack.c.b16 %v4455, %v4454
        %v4733 = vpack.c.b16 %v4457, %v4456
        %v4734 = vpack.c.b16 %v4459, %v4458
        %v4735 = vpack.c.b16 %v4461, %v4460
        %v4736 = vpack.c.b16 %v4463, %v4462
        %v4737 = vpack.c.b16 %v4465, %v4464
        %v4738 = vpack.c.b16 %v4467, %v4466
        %v4739 = vpack.c.b16 %v4469, %v4468
        %v4740 = vpack.c.b16 %v4471, %v4470
        %v4741 = vpack.c.b16 %v4473, %v4472
        %v4742 = vpack.c.b16 %v4475, %v4474
        %v4743 = vpack.c.b16 %v4477, %v4476
        %v4744 = vpack.c.b16 %v4479, %v4478
        %v4745 = vpack.c.b16 %v4481, %v4480
        %v4746 = vpack.c.b16 %v4483, %v4482
        %v4747 = vpack.c.b16 %v4485, %v4484
        %v4748 = vpack.c.b16 %v4487, %v4486
        %v4749 = vpack.c.b16 %v4489, %v4488
        %v4750 = vpack.c.b16 %v4491, %v4490
        %v4751 = vpack.c.b16 %v4493, %v4492
        %v4752 = vpack.c.b16 %v4495, %v4494
        %v4753 = vpack.c.b16 %v4497, %v4496
        %v4754 = vpack.c.b16 %v4499, %v4498
        %v4755 = vpack.c.b16 %v4501, %v4500
        %v4756 = vpack.c.b16 %v4503, %v4502
        %v4757 = vpack.c.b16 %v4505, %v4504
        %v4758 = vpack.c.b16 %v4507, %v4506
        %v4759 = vpack.c.b16 %v4509, %v4508
        %v4760 = vpack.c.b16 %v4511, %v4510
        %v4761 = vpack.c.b16 %v4513, %v4512
        %v4762 = vpack.c.b16 %v4515, %v4514
        %v4763 = vpack.c.b16 %v4517, %v4516
        %v4764 = vpack.c.b16 %v4519, %v4518
        %v4765 = vpack.c.b16 %v4521, %v4520
        %v4766 = vpack.c.b16 %v4523, %v4522
        %v4767 = vpack.c.b16 %v4525, %v4524
        %v4768 = vpack.c.b16 %v4527, %v4526
        %v4769 = vpack.c.b16 %v4529, %v4528
        %v4770 = vpack.c.b16 %v4531, %v4530
        %v4771 = vpack.c.b16 %v4533, %v4532
        %v4772 = vpack.c.b16 %v4535, %v4534
        %v4773 = vpack.c.b16 %v4537, %v4536
        %v4774 = vpack.c.b16 %v4539, %v4538
        %v4775 = vpack.c.b16 %v4541, %v4540
        %v4776 = vpack.c.b16 %v4543, %v4542
        %v4777 = vpack.c.b16 %v4545, %v4544
        %v4778 = vpack.c.b16 %v4547, %v4546
        %v4779 = vpack.c.b16 %v4549, %v4548
        %v4780 = vpack.c.b16 %v4551, %v4550
        %v4781 = vpack.c.b16 %v4553, %v4552
        %v4782 = vpack.c.b16 %v4555, %v4554
        %v4783 = vpack.c.b16 %v4557, %v4556
        %v4784 = vpack.c.b16 %v4559, %v4558
        %v4785 = vpack.c.b16 %v4561, %v4560
        %v4786 = vpack.c.b16 %v4563, %v4562
        %v4787 = vpack.c.b16 %v4565, %v4564
        %v4788 = vpack.c.b16 %v4567, %v4566
        %v4789 = vpack.c.b16 %v4569, %v4568
        %v4790 = vpack.c.b16 %v4571, %v4570
        %v4791 = vpack.c.b16 %v4573, %v4572
        %v4792 = vpack.c.b16 %v4575, %v4574
        %v4793 = vpack.c.b16 %v4577, %v4576
        %v4794 = vpack.c.b16 %v4579, %v4578
        %v4795 = vpack.c.b16 %v4581, %v4580
        %v4796 = vpack.c.b16 %v4583, %v4582
        %v4797 = vpack.c.b16 %v4585, %v4584
        %v4798 = vpack.c.b16 %v4587, %v4586
        %v4799 = vpack.c.b16 %v4589, %v4588
        %v4800 = vpack.c.b16 %v4591, %v4590
        %v4801 = vpack.c.b16 %v4593, %v4592
        %v4802 = vpack.c.b16 %v4595, %v4594
        %v4803 = vpack.c.b16 %v4597, %v4596
        %v4804 = vpack.c.b16 %v4599, %v4598
        %v4805 = vpack.c.b16 %v4601, %v4600
        %v4806 = vpack.c.b16 %v4603, %v4602
        %v4807 = vpack.c.b16 %v4605, %v4604
        %v4808 = vpack.c.b16 %v4607, %v4606
        %v4809 = vpack.c.b16 %v4609, %v4608
        %v4810 = vpack.c.b16 %v4611, %v4610
        %v4811 = vpack.c.b16 %v4613, %v4612
        %v4812 = vpack.c.b16 %v4615, %v4614
        %v4813 = vpack.c.b16 %v4617, %v4616
        %v4814 = vpack.c.b16 %v4619, %v4618
        %v4815 = vpack.c.b16 %v4621, %v4620
        %v4816 = vpack.c.b16 %v4623, %v4622
        %v4817 = vpack.c.b16 %v4625, %v4624
        %v4818 = vpack.c.b16 %v4627, %v4626
        %v4819 = vpack.c.b16 %v4629, %v4628
        %v4820 = vpack.c.b16 %v4631, %v4630
        %v4821 = vpack.c.b16 %v4633, %v4632
        %v4822 = vpack.c.b16 %v4635, %v4634
        %v4823 = vpack.c.b16 %v4637, %v4636
        %v4824 = vpack.c.b16 %v4639, %v4638
        %v4825 = vpack.c.b16 %v4641, %v4640
        %v4826 = vpack.c.b16 %v4643, %v4642
        %v4827 = vpack.c.b16 %v4645, %v4644
        %v4828 = vpack.c.b16 %v4647, %v4646
        %v4829 = vpack.c.b16 %v4649, %v4648
        %v4830 = vpack.c.b16 %v4651, %v4650
        %v4831 = vpack.c.b16 %v4653, %v4652
        %v4832 = vpack.c.b16 %v4655, %v4654
        %v4833 = vpack.c.b16 %v4657, %v4656
        %v4834 = vpack.c.b16 %v4659, %v4658
        %v4835 = vpack.c.b16 %v4661, %v4660
        %v4836 = vpack.c.b16 %v4663, %v4662
        %v4837 = vpack.c.b16 %v4665, %v4664
        %v4838 = vpack.c.b16 %v4667, %v4666
        %v4839 = vpack.c.b16 %v4669, %v4668
        %v4840 = vpack.c.b16 %v4671, %v4670
        %v4841 = vpack.c.b16 %v4673, %v4672
        %v4842 = vpack.c.b16 %v4675, %v4674
        %v4843 = vpack.c.b16 %v4677, %v4676
        %v4844 = vpack.c.b16 %v4679, %v4678
        %v4845 = vpack.c.b16 %v4681, %v4680
        %v4846 = vpack.c.b16 %v4683, %v4682
        %v4847 = vpack.c.b16 %v4685, %v4684
        %v4848 = vpack.c.b16 %v4687, %v4686
        %v4849 = vpack.c.b16 %v4689, %v4688
        %v4850 = vpack.c.b16 %v4691, %v4690
        %v4851 = vpack.c.b16 %v4693, %v4692
        %v4852 = vpack.c.b16 %v4695, %v4694
        %v4853 = vpack.c.b16 %v4697, %v4696
        %v4854 = vpack.c.b16 %v4699, %v4698
        %v4855 = vpack.c.b16 %v4701, %v4700
        %v4856 = vpack.c.b16 %v4703, %v4702
        %v4857 = vpack.c.b16 %v4705, %v4704
        %v4858 = vpack.c.b16 %v4707, %v4706
        %v4859 = vpack.c.b16 %v4709, %v4708
        %v4860 = vpack.c.b16 %v4711, %v4710
        %v4861 = vpack.c.b16 %v4713, %v4712
        %v4862 = vpack.c.b16 %v4715, %v4714
        %v4863 = vpack.c.b16 %v4717, %v4716
        %v4864 = vpack.c.b16 %v4719, %v4718
        %v4865 = vpack.c.b16 %v4721, %v4720
        %5010 = vmatprep.subr.bf16.mxu0 0
        %5011 = vmatpush1.bf16.msra.mxu0 %v4729
        %5012 = vmatprep.subr.bf16.mxu0 0
        %5013 = vmatpush1.bf16.msra.mxu0 %v4728
        %5014 = vmatprep.subr.bf16.mxu0 0
        %5015 = vmatpush1.bf16.msra.mxu0 %v4727
        %5016 = vmatprep.subr.bf16.mxu0 0
        %5017 = vmatpush1.bf16.msra.mxu0 %v4726
        %5018 = vmatprep.subr.bf16.mxu0 0
        %5019 = vmatpush1.bf16.msra.mxu0 %v4725
        %5020 = vmatprep.subr.bf16.mxu0 0
        %5021 = vmatpush1.bf16.msra.mxu0 %v4724
        %5022 = vmatprep.subr.bf16.mxu0 0
        %5023 = vmatpush1.bf16.msra.mxu0 %v4723
        %5024 = vmatprep.subr.bf16.mxu0 0
        %5025 = vmatpush1.bf16.msra.mxu0 %v4722
        %5026 = vmatprep.subr.bf16.mxu0 0
        %5027 = vmatpush2.bf16.msra.mxu0 %v4737
        %5028 = vmatprep.subr.bf16.mxu0 0
        %5029 = vmatpush2.bf16.msra.mxu0 %v4736
        %5030 = vmatprep.subr.bf16.mxu0 0
        %5031 = vmatpush2.bf16.msra.mxu0 %v4735
        %5032 = vmatprep.subr.bf16.mxu0 0
        %5033 = vmatpush2.bf16.msra.mxu0 %v4734
        %5034 = vmatprep.subr.bf16.mxu0 0
        %5035 = vmatpush2.bf16.msra.mxu0 %v4733
        %5036 = vmatprep.subr.bf16.mxu0 0
        %5037 = vmatpush2.bf16.msra.mxu0 %v4732
        %5038 = vmatprep.subr.bf16.mxu0 0
        %5039 = vmatpush2.bf16.msra.mxu0 %v4731
        %5040 = vmatprep.subr.bf16.mxu0 0
        %5041 = vmatpush2.bf16.msra.mxu0 %v4730
        %5042 = vmatprep.mubr.bf16.mxu0 %v3840
        %5043 = vmatmul.mubr.bf16.gmra.mxu0 %v3839
        %v5044 = vpop.f32.mrf.mxu0
        %v5045 = vadd.f32 %v4145, %v5044
        %v5046 = vpop.f32.mrf.mxu0
        %v5047 = vpop.f32.mrf.mxu0
        %v5048 = vpop.f32.mrf.mxu0
        %5049 = vdwg.mxu0
        %5050 = vmatprep.subr.bf16.mxu0 0
        %5051 = vmatpush1.bf16.msra.mxu0 %v4745
        %5052 = vmatprep.subr.bf16.mxu0 0
        %5053 = vmatpush1.bf16.msra.mxu0 %v4744
        %5054 = vmatprep.subr.bf16.mxu0 0
        %5055 = vmatpush1.bf16.msra.mxu0 %v4743
        %5056 = vmatprep.subr.bf16.mxu0 0
        %5057 = vmatpush1.bf16.msra.mxu0 %v4742
        %5058 = vmatprep.subr.bf16.mxu0 0
        %5059 = vmatpush1.bf16.msra.mxu0 %v4741
        %5060 = vmatprep.subr.bf16.mxu0 0
        %5061 = vmatpush1.bf16.msra.mxu0 %v4740
        %5062 = vmatprep.subr.bf16.mxu0 0
        %5063 = vmatpush1.bf16.msra.mxu0 %v4739
        %5064 = vmatprep.subr.bf16.mxu0 0
        %5065 = vmatpush1.bf16.msra.mxu0 %v4738
        %5066 = vmatprep.subr.bf16.mxu0 0
        %5067 = vmatpush2.bf16.msra.mxu0 %v4753
        %5068 = vmatprep.subr.bf16.mxu0 0
        %5069 = vmatpush2.bf16.msra.mxu0 %v4752
        %5070 = vmatprep.subr.bf16.mxu0 0
        %5071 = vmatpush2.bf16.msra.mxu0 %v4751
        %5072 = vmatprep.subr.bf16.mxu0 0
        %5073 = vmatpush2.bf16.msra.mxu0 %v4750
        %5074 = vmatprep.subr.bf16.mxu0 0
        %5075 = vmatpush2.bf16.msra.mxu0 %v4749
        %5076 = vmatprep.subr.bf16.mxu0 0
        %5077 = vmatpush2.bf16.msra.mxu0 %v4748
        %5078 = vmatprep.subr.bf16.mxu0 0
        %5079 = vmatpush2.bf16.msra.mxu0 %v4747
        %5080 = vmatprep.subr.bf16.mxu0 0
        %5081 = vmatpush2.bf16.msra.mxu0 %v4746
        %5082 = vmatprep.mubr.bf16.mxu0 %v3842
        %5083 = vmatmul.mubr.bf16.gmra.mxu0 %v3841
        %v5084 = vpop.f32.mrf.mxu0
        %v5085 = vadd.f32 %v5045, %v5084
        %v5086 = vpop.f32.mrf.mxu0
        %v5087 = vpop.f32.mrf.mxu0
        %v5088 = vpop.f32.mrf.mxu0
        %5089 = vdwg.mxu0
        %5090 = vmatprep.subr.bf16.mxu0 0
        %5091 = vmatpush1.bf16.msra.mxu0 %v4761
        %5092 = vmatprep.subr.bf16.mxu0 0
        %5093 = vmatpush1.bf16.msra.mxu0 %v4760
        %5094 = vmatprep.subr.bf16.mxu0 0
        %5095 = vmatpush1.bf16.msra.mxu0 %v4759
        %5096 = vmatprep.subr.bf16.mxu0 0
        %5097 = vmatpush1.bf16.msra.mxu0 %v4758
        %5098 = vmatprep.subr.bf16.mxu0 0
        %5099 = vmatpush1.bf16.msra.mxu0 %v4757
        %5100 = vmatprep.subr.bf16.mxu0 0
        %5101 = vmatpush1.bf16.msra.mxu0 %v4756
        %5102 = vmatprep.subr.bf16.mxu0 0
        %5103 = vmatpush1.bf16.msra.mxu0 %v4755
        %5104 = vmatprep.subr.bf16.mxu0 0
        %5105 = vmatpush1.bf16.msra.mxu0 %v4754
        %5106 = vmatprep.subr.bf16.mxu0 0
        %5107 = vmatpush2.bf16.msra.mxu0 %v4769
        %5108 = vmatprep.subr.bf16.mxu0 0
        %5109 = vmatpush2.bf16.msra.mxu0 %v4768
        %5110 = vmatprep.subr.bf16.mxu0 0
        %5111 = vmatpush2.bf16.msra.mxu0 %v4767
        %5112 = vmatprep.subr.bf16.mxu0 0
        %5113 = vmatpush2.bf16.msra.mxu0 %v4766
        %5114 = vmatprep.subr.bf16.mxu0 0
        %5115 = vmatpush2.bf16.msra.mxu0 %v4765
        %5116 = vmatprep.subr.bf16.mxu0 0
        %5117 = vmatpush2.bf16.msra.mxu0 %v4764
        %5118 = vmatprep.subr.bf16.mxu0 0
        %5119 = vmatpush2.bf16.msra.mxu0 %v4763
        %5120 = vmatprep.subr.bf16.mxu0 0
        %5121 = vmatpush2.bf16.msra.mxu0 %v4762
        %5122 = vmatprep.mubr.bf16.mxu0 %v3844
        %5123 = vmatmul.mubr.bf16.gmra.mxu0 %v3843
        %v5124 = vpop.f32.mrf.mxu0
        %v5125 = vadd.f32 %v5085, %v5124
        %v5126 = vpop.f32.mrf.mxu0
        %v5127 = vpop.f32.mrf.mxu0
        %v5128 = vpop.f32.mrf.mxu0
        %5129 = vdwg.mxu0
        %5130 = vmatprep.subr.bf16.mxu0 0
        %5131 = vmatpush1.bf16.msra.mxu0 %v4777
        %5132 = vmatprep.subr.bf16.mxu0 0
        %5133 = vmatpush1.bf16.msra.mxu0 %v4776
        %5134 = vmatprep.subr.bf16.mxu0 0
        %5135 = vmatpush1.bf16.msra.mxu0 %v4775
        %5136 = vmatprep.subr.bf16.mxu0 0
        %5137 = vmatpush1.bf16.msra.mxu0 %v4774
        %5138 = vmatprep.subr.bf16.mxu0 0
        %5139 = vmatpush1.bf16.msra.mxu0 %v4773
        %5140 = vmatprep.subr.bf16.mxu0 0
        %5141 = vmatpush1.bf16.msra.mxu0 %v4772
        %5142 = vmatprep.subr.bf16.mxu0 0
        %5143 = vmatpush1.bf16.msra.mxu0 %v4771
        %5144 = vmatprep.subr.bf16.mxu0 0
        %5145 = vmatpush1.bf16.msra.mxu0 %v4770
        %5146 = vmatprep.subr.bf16.mxu0 0
        %5147 = vmatpush2.bf16.msra.mxu0 %v4785
        %5148 = vmatprep.subr.bf16.mxu0 0
        %5149 = vmatpush2.bf16.msra.mxu0 %v4784
        %5150 = vmatprep.subr.bf16.mxu0 0
        %5151 = vmatpush2.bf16.msra.mxu0 %v4783
        %5152 = vmatprep.subr.bf16.mxu0 0
        %5153 = vmatpush2.bf16.msra.mxu0 %v4782
        %5154 = vmatprep.subr.bf16.mxu0 0
        %5155 = vmatpush2.bf16.msra.mxu0 %v4781
        %5156 = vmatprep.subr.bf16.mxu0 0
        %5157 = vmatpush2.bf16.msra.mxu0 %v4780
        %5158 = vmatprep.subr.bf16.mxu0 0
        %5159 = vmatpush2.bf16.msra.mxu0 %v4779
        %5160 = vmatprep.subr.bf16.mxu0 0
        %5161 = vmatpush2.bf16.msra.mxu0 %v4778
        %5162 = vmatprep.mubr.bf16.mxu0 %v3846
        %5163 = vmatmul.mubr.bf16.gmra.mxu0 %v3845
        %v5164 = vpop.f32.mrf.mxu0
        %v5165 = vadd.f32 %v5125, %v5164
        %v5166 = vpop.f32.mrf.mxu0
        %v5167 = vpop.f32.mrf.mxu0
        %v5168 = vpop.f32.mrf.mxu0
        %5169 = vdwg.mxu0
        %5170 = vmatprep.subr.bf16.mxu0 0
        %5171 = vmatpush1.bf16.msra.mxu0 %v4793
        %5172 = vmatprep.subr.bf16.mxu0 0
        %5173 = vmatpush1.bf16.msra.mxu0 %v4792
        %5174 = vmatprep.subr.bf16.mxu0 0
        %5175 = vmatpush1.bf16.msra.mxu0 %v4791
        %5176 = vmatprep.subr.bf16.mxu0 0
        %5177 = vmatpush1.bf16.msra.mxu0 %v4790
        %5178 = vmatprep.subr.bf16.mxu0 0
        %5179 = vmatpush1.bf16.msra.mxu0 %v4789
        %5180 = vmatprep.subr.bf16.mxu0 0
        %5181 = vmatpush1.bf16.msra.mxu0 %v4788
        %5182 = vmatprep.subr.bf16.mxu0 0
        %5183 = vmatpush1.bf16.msra.mxu0 %v4787
        %5184 = vmatprep.subr.bf16.mxu0 0
        %5185 = vmatpush1.bf16.msra.mxu0 %v4786
        %5186 = vmatprep.subr.bf16.mxu0 0
        %5187 = vmatpush2.bf16.msra.mxu0 %v4801
        %5188 = vmatprep.subr.bf16.mxu0 0
        %5189 = vmatpush2.bf16.msra.mxu0 %v4800
        %5190 = vmatprep.subr.bf16.mxu0 0
        %5191 = vmatpush2.bf16.msra.mxu0 %v4799
        %5192 = vmatprep.subr.bf16.mxu0 0
        %5193 = vmatpush2.bf16.msra.mxu0 %v4798
        %5194 = vmatprep.subr.bf16.mxu0 0
        %5195 = vmatpush2.bf16.msra.mxu0 %v4797
        %5196 = vmatprep.subr.bf16.mxu0 0
        %5197 = vmatpush2.bf16.msra.mxu0 %v4796
        %5198 = vmatprep.subr.bf16.mxu0 0
        %5199 = vmatpush2.bf16.msra.mxu0 %v4795
        %5200 = vmatprep.subr.bf16.mxu0 0
        %5201 = vmatpush2.bf16.msra.mxu0 %v4794
        %5202 = vmatprep.mubr.bf16.mxu0 %v3848
        %5203 = vmatmul.mubr.bf16.gmra.mxu0 %v3847
        %v5204 = vpop.f32.mrf.mxu0
        %v5205 = vadd.f32 %v5165, %v5204
        %v5206 = vpop.f32.mrf.mxu0
        %v5207 = vpop.f32.mrf.mxu0
        %v5208 = vpop.f32.mrf.mxu0
        %5209 = vdwg.mxu0
        %5210 = vmatprep.subr.bf16.mxu0 0
        %5211 = vmatpush1.bf16.msra.mxu0 %v4809
        %5212 = vmatprep.subr.bf16.mxu0 0
        %5213 = vmatpush1.bf16.msra.mxu0 %v4808
        %5214 = vmatprep.subr.bf16.mxu0 0
        %5215 = vmatpush1.bf16.msra.mxu0 %v4807
        %5216 = vmatprep.subr.bf16.mxu0 0
        %5217 = vmatpush1.bf16.msra.mxu0 %v4806
        %5218 = vmatprep.subr.bf16.mxu0 0
        %5219 = vmatpush1.bf16.msra.mxu0 %v4805
        %5220 = vmatprep.subr.bf16.mxu0 0
        %5221 = vmatpush1.bf16.msra.mxu0 %v4804
        %5222 = vmatprep.subr.bf16.mxu0 0
        %5223 = vmatpush1.bf16.msra.mxu0 %v4803
        %5224 = vmatprep.subr.bf16.mxu0 0
        %5225 = vmatpush1.bf16.msra.mxu0 %v4802
        %5226 = vmatprep.subr.bf16.mxu0 0
        %5227 = vmatpush2.bf16.msra.mxu0 %v4817
        %5228 = vmatprep.subr.bf16.mxu0 0
        %5229 = vmatpush2.bf16.msra.mxu0 %v4816
        %5230 = vmatprep.subr.bf16.mxu0 0
        %5231 = vmatpush2.bf16.msra.mxu0 %v4815
        %5232 = vmatprep.subr.bf16.mxu0 0
        %5233 = vmatpush2.bf16.msra.mxu0 %v4814
        %5234 = vmatprep.subr.bf16.mxu0 0
        %5235 = vmatpush2.bf16.msra.mxu0 %v4813
        %5236 = vmatprep.subr.bf16.mxu0 0
        %5237 = vmatpush2.bf16.msra.mxu0 %v4812
        %5238 = vmatprep.subr.bf16.mxu0 0
        %5239 = vmatpush2.bf16.msra.mxu0 %v4811
        %5240 = vmatprep.subr.bf16.mxu0 0
        %5241 = vmatpush2.bf16.msra.mxu0 %v4810
        %5242 = vmatprep.mubr.bf16.mxu0 %v3850
        %5243 = vmatmul.mubr.bf16.gmra.mxu0 %v3849
        %v5244 = vpop.f32.mrf.mxu0
        %v5245 = vadd.f32 %v5205, %v5244
        %v5246 = vpop.f32.mrf.mxu0
        %v5247 = vpop.f32.mrf.mxu0
        %v5248 = vpop.f32.mrf.mxu0
        %5249 = vdwg.mxu0
        %5250 = vmatprep.subr.bf16.mxu0 0
        %5251 = vmatpush1.bf16.msra.mxu0 %v4825
        %5252 = vmatprep.subr.bf16.mxu0 0
        %5253 = vmatpush1.bf16.msra.mxu0 %v4824
        %5254 = vmatprep.subr.bf16.mxu0 0
        %5255 = vmatpush1.bf16.msra.mxu0 %v4823
        %5256 = vmatprep.subr.bf16.mxu0 0
        %5257 = vmatpush1.bf16.msra.mxu0 %v4822
        %5258 = vmatprep.subr.bf16.mxu0 0
        %5259 = vmatpush1.bf16.msra.mxu0 %v4821
        %5260 = vmatprep.subr.bf16.mxu0 0
        %5261 = vmatpush1.bf16.msra.mxu0 %v4820
        %5262 = vmatprep.subr.bf16.mxu0 0
        %5263 = vmatpush1.bf16.msra.mxu0 %v4819
        %5264 = vmatprep.subr.bf16.mxu0 0
        %5265 = vmatpush1.bf16.msra.mxu0 %v4818
        %5266 = vmatprep.subr.bf16.mxu0 0
        %5267 = vmatpush2.bf16.msra.mxu0 %v4833
        %5268 = vmatprep.subr.bf16.mxu0 0
        %5269 = vmatpush2.bf16.msra.mxu0 %v4832
        %5270 = vmatprep.subr.bf16.mxu0 0
        %5271 = vmatpush2.bf16.msra.mxu0 %v4831
        %5272 = vmatprep.subr.bf16.mxu0 0
        %5273 = vmatpush2.bf16.msra.mxu0 %v4830
        %5274 = vmatprep.subr.bf16.mxu0 0
        %5275 = vmatpush2.bf16.msra.mxu0 %v4829
        %5276 = vmatprep.subr.bf16.mxu0 0
        %5277 = vmatpush2.bf16.msra.mxu0 %v4828
        %5278 = vmatprep.subr.bf16.mxu0 0
        %5279 = vmatpush2.bf16.msra.mxu0 %v4827
        %5280 = vmatprep.subr.bf16.mxu0 0
        %5281 = vmatpush2.bf16.msra.mxu0 %v4826
        %5282 = vmatprep.mubr.bf16.mxu0 %v3852
        %5283 = vmatmul.mubr.bf16.gmra.mxu0 %v3851
        %v5284 = vpop.f32.mrf.mxu0
        %v5285 = vadd.f32 %v5245, %v5284
        %v5286 = vpop.f32.mrf.mxu0
        %v5287 = vpop.f32.mrf.mxu0
        %v5288 = vpop.f32.mrf.mxu0
        %5289 = vdwg.mxu0
        %5290 = vmatprep.subr.bf16.mxu0 0
        %5291 = vmatpush1.bf16.msra.mxu0 %v4841
        %5292 = vmatprep.subr.bf16.mxu0 0
        %5293 = vmatpush1.bf16.msra.mxu0 %v4840
        %5294 = vmatprep.subr.bf16.mxu0 0
        %5295 = vmatpush1.bf16.msra.mxu0 %v4839
        %5296 = vmatprep.subr.bf16.mxu0 0
        %5297 = vmatpush1.bf16.msra.mxu0 %v4838
        %5298 = vmatprep.subr.bf16.mxu0 0
        %5299 = vmatpush1.bf16.msra.mxu0 %v4837
        %5300 = vmatprep.subr.bf16.mxu0 0
        %5301 = vmatpush1.bf16.msra.mxu0 %v4836
        %5302 = vmatprep.subr.bf16.mxu0 0
        %5303 = vmatpush1.bf16.msra.mxu0 %v4835
        %5304 = vmatprep.subr.bf16.mxu0 0
        %5305 = vmatpush1.bf16.msra.mxu0 %v4834
        %5306 = vmatprep.subr.bf16.mxu0 0
        %5307 = vmatpush2.bf16.msra.mxu0 %v4849
        %5308 = vmatprep.subr.bf16.mxu0 0
        %5309 = vmatpush2.bf16.msra.mxu0 %v4848
        %5310 = vmatprep.subr.bf16.mxu0 0
        %5311 = vmatpush2.bf16.msra.mxu0 %v4847
        %5312 = vmatprep.subr.bf16.mxu0 0
        %5313 = vmatpush2.bf16.msra.mxu0 %v4846
        %5314 = vmatprep.subr.bf16.mxu0 0
        %5315 = vmatpush2.bf16.msra.mxu0 %v4845
        %5316 = vmatprep.subr.bf16.mxu0 0
        %5317 = vmatpush2.bf16.msra.mxu0 %v4844
        %5318 = vmatprep.subr.bf16.mxu0 0
        %5319 = vmatpush2.bf16.msra.mxu0 %v4843
        %5320 = vmatprep.subr.bf16.mxu0 0
        %5321 = vmatpush2.bf16.msra.mxu0 %v4842
        %5322 = vmatprep.mubr.bf16.mxu0 %v3854
        %5323 = vmatmul.mubr.bf16.gmra.mxu0 %v3853
        %v5324 = vpop.f32.mrf.mxu0
        %v5325 = vadd.f32 %v5285, %v5324
        %v5326 = vpop.f32.mrf.mxu0
        %v5327 = vpop.f32.mrf.mxu0
        %v5328 = vpop.f32.mrf.mxu0
        %5329 = vdwg.mxu0
        %5330 = vmatprep.subr.bf16.mxu0 0
        %5331 = vmatpush1.bf16.msra.mxu0 %v4857
        %5332 = vmatprep.subr.bf16.mxu0 0
        %5333 = vmatpush1.bf16.msra.mxu0 %v4856
        %5334 = vmatprep.subr.bf16.mxu0 0
        %5335 = vmatpush1.bf16.msra.mxu0 %v4855
        %5336 = vmatprep.subr.bf16.mxu0 0
        %5337 = vmatpush1.bf16.msra.mxu0 %v4854
        %5338 = vmatprep.subr.bf16.mxu0 0
        %5339 = vmatpush1.bf16.msra.mxu0 %v4853
        %5340 = vmatprep.subr.bf16.mxu0 0
        %5341 = vmatpush1.bf16.msra.mxu0 %v4852
        %5342 = vmatprep.subr.bf16.mxu0 0
        %5343 = vmatpush1.bf16.msra.mxu0 %v4851
        %5344 = vmatprep.subr.bf16.mxu0 0
        %5345 = vmatpush1.bf16.msra.mxu0 %v4850
        %5346 = vmatprep.subr.bf16.mxu0 0
        %5347 = vmatpush2.bf16.msra.mxu0 %v4865
        %5348 = vmatprep.subr.bf16.mxu0 0
        %5349 = vmatpush2.bf16.msra.mxu0 %v4864
        %5350 = vmatprep.subr.bf16.mxu0 0
        %5351 = vmatpush2.bf16.msra.mxu0 %v4863
        %5352 = vmatprep.subr.bf16.mxu0 0
        %5353 = vmatpush2.bf16.msra.mxu0 %v4862
        %5354 = vmatprep.subr.bf16.mxu0 0
        %5355 = vmatpush2.bf16.msra.mxu0 %v4861
        %5356 = vmatprep.subr.bf16.mxu0 0
        %5357 = vmatpush2.bf16.msra.mxu0 %v4860
        %5358 = vmatprep.subr.bf16.mxu0 0
        %5359 = vmatpush2.bf16.msra.mxu0 %v4859
        %5360 = vmatprep.subr.bf16.mxu0 0
        %5361 = vmatpush2.bf16.msra.mxu0 %v4858
        %5362 = vmatprep.mubr.bf16.mxu0 %v3856
        %5363 = vmatmul.mubr.bf16.gmra.mxu0 %v3855
        %v5364 = vpop.f32.mrf.mxu0
        %v5365 = vadd.f32 %v5325, %v5364
        %v5366 = vpop.f32.mrf.mxu0
        %v5367 = vpop.f32.mrf.mxu0
        %v5368 = vpop.f32.mrf.mxu0
        %5369 = vdwg.mxu0
        %v5370 = vmax.f32 %v5365, 0.0
        %v5371 = vpack.c.bf16 %v5370, %v5370
        %v5372 = vld [vmem:[%s7] sm:$0xf]
        %v5373 = vld [vmem:[%s7 + $0x4] sm:$0xf]
        %v5374 = vld [vmem:[%s7 + $0x8] sm:$0xf]
        %v5375 = vld [vmem:[%s7 + $0xc] sm:$0xf]
        %v5376 = vld [vmem:[%s7 + $0x10] sm:$0xf]
        %v5377 = vld [vmem:[%s7 + $0x14] sm:$0xf]
        %v5378 = vld [vmem:[%s7 + $0x18] sm:$0xf]
        %v5379 = vld [vmem:[%s7 + $0x1c] sm:$0xf]
        %v5380 = vld [vmem:[%s7 + $0x20] sm:$0xf]
        %v5381 = vld [vmem:[%s7 + $0x24] sm:$0xf]
        %v5382 = vld [vmem:[%s7 + $0x28] sm:$0xf]
        %v5383 = vld [vmem:[%s7 + $0x2c] sm:$0xf]
        %v5384 = vld [vmem:[%s7 + $0x30] sm:$0xf]
        %v5385 = vld [vmem:[%s7 + $0x34] sm:$0xf]
        %v5386 = vld [vmem:[%s7 + $0x38] sm:$0xf]
        %v5387 = vld [vmem:[%s7 + $0x3c] sm:$0xf]
        %v5388 = vld [vmem:[%s8] sm:$0x1]
        %v5405 = vunpack.c.l.b16 %v5372
        %v5406 = vunpack.c.l.b16 %v5373
        %v5407 = vunpack.c.l.b16 %v5374
        %v5408 = vunpack.c.l.b16 %v5375
        %v5409 = vunpack.c.l.b16 %v5376
        %v5410 = vunpack.c.l.b16 %v5377
        %v5411 = vunpack.c.l.b16 %v5378
        %v5412 = vunpack.c.l.b16 %v5379
        %v5413 = vunpack.c.l.b16 %v5380
        %v5414 = vunpack.c.l.b16 %v5381
        %v5415 = vunpack.c.l.b16 %v5382
        %v5416 = vunpack.c.l.b16 %v5383
        %v5417 = vunpack.c.l.b16 %v5384
        %v5418 = vunpack.c.l.b16 %v5385
        %v5419 = vunpack.c.l.b16 %v5386
        %v5420 = vunpack.c.l.b16 %v5387
        %v5421 = vpack.c.b16 %v5406, %v5405
        %v5422 = vpack.c.b16 %v5408, %v5407
        %v5423 = vpack.c.b16 %v5410, %v5409
        %v5424 = vpack.c.b16 %v5412, %v5411
        %v5425 = vpack.c.b16 %v5414, %v5413
        %v5426 = vpack.c.b16 %v5416, %v5415
        %v5427 = vpack.c.b16 %v5418, %v5417
        %v5428 = vpack.c.b16 %v5420, %v5419
        %5437 = vmatprep.subr.bf16.mxu0 0
        %5438 = vmatpush1.bf16.msra.mxu0 %v5428
        %5439 = vmatprep.subr.bf16.mxu0 0
        %5440 = vmatpush1.bf16.msra.mxu0 %v5427
        %5441 = vmatprep.subr.bf16.mxu0 0
        %5442 = vmatpush1.bf16.msra.mxu0 %v5426
        %5443 = vmatprep.subr.bf16.mxu0 0
        %5444 = vmatpush1.bf16.msra.mxu0 %v5425
        %5445 = vmatprep.subr.bf16.mxu0 0
        %5446 = vmatpush1.bf16.msra.mxu0 %v5424
        %5447 = vmatprep.subr.bf16.mxu0 0
        %5448 = vmatpush1.bf16.msra.mxu0 %v5423
        %5449 = vmatprep.subr.bf16.mxu0 0
        %5450 = vmatpush1.bf16.msra.mxu0 %v5422
        %5451 = vmatprep.subr.bf16.mxu0 0
        %5452 = vmatpush1.bf16.msra.mxu0 %v5421
        %5453 = vmatprep.subr.bf16.mxu0 0
        %5454 = vmatpush2.bf16.msra.mxu0 0
        %5455 = vmatprep.subr.bf16.mxu0 0
        %5456 = vmatpush2.bf16.msra.mxu0 0
        %5457 = vmatprep.subr.bf16.mxu0 0
        %5458 = vmatpush2.bf16.msra.mxu0 0
        %5459 = vmatprep.subr.bf16.mxu0 0
        %5460 = vmatpush2.bf16.msra.mxu0 0
        %5461 = vmatprep.subr.bf16.mxu0 0
        %5462 = vmatpush2.bf16.msra.mxu0 0
        %5463 = vmatprep.subr.bf16.mxu0 0
        %5464 = vmatpush2.bf16.msra.mxu0 0
        %5465 = vmatprep.subr.bf16.mxu0 0
        %5466 = vmatpush2.bf16.msra.mxu0 0
        %5467 = vmatprep.subr.bf16.mxu0 0
        %5468 = vmatpush2.bf16.msra.mxu0 0
        %5469 = vmatprep.mubr.bf16.mxu0 0
        %5470 = vmatmul.mubr.bf16.gmra.mxu0 %v5371
        %v5471 = vpop.f32.mrf.mxu0
        %v5472 = vadd.f32 %v5388, %v5471
        %v5473 = vpop.f32.mrf.mxu0
        %v5474 = vpop.f32.mrf.mxu0
        %v5475 = vpop.f32.mrf.mxu0
        %5476 = vdwg.mxu0
        %vm5477 = vcmask 73728
        %5478 = vst.msk [vmem:[%s339] sm:$0x1] %vm5477, %v5472
        %s5479 = sand.u32 %s226, 1
        %s5480 = scalar_lea.sflag [#allocation4], %s5479
        %s5481 = sand.u32 %s226, 1
        %s5482 = scalar_lea.vmem [#allocation5], %s5481
        // Predicated region
        $region61: #{lenet_forward.1} parent=55 // pred_check
          %p5483 = pneg %p236
        $region62: #{lenet_forward.1} parent=55 // pred_check_branch
          %5485 = sbr.rel (%p5483) target = $region64
        $region63: #{lenet_forward.1} parent=55 // pred_region
          %s5487 = ssub.s32 16, 16
          %5488 = vsyncadd %s5480, %s5487
          %s5489 = smul.addr %s24, 16
          %s5490 = scalar_lea.hbm %s9, %s5489
          %s5492 = sshll.u32 %s5482, 4
          %s5493 = int_to_ptr.vmem [resolvable:$true] %s5492
          %5495 = dma.vmem_to_hbm [thread:$0]  %s5493, 16, %s5490, %s5480
        $region64: #{lenet_forward.1} parent=55 // pred_fallthru
          _
      $region56: #{lenet_forward.1} parent=5 // pred_fallthru
        _
      %p5496 = scmp.le.s32.totalorder 2, %s19
      // Predicated region
      $region65: #{lenet_forward.1} parent=5 // pred_check
        %p5497 = pneg %p5496
      $region66: #{lenet_forward.1} parent=5 // pred_check_branch
        %5499 = sbr.rel (%p5497) target = $region68
      $region67: #{lenet_forward.1} parent=5 // pred_region
        %s5500 = ssub.s32 %s19, 2
        // Predicated region
        $region69: #{lenet_forward.1} parent=67 // pred_check
          %p5501 = pneg %p242
        $region70: #{lenet_forward.1} parent=67 // pred_check_branch
          %5503 = sbr.rel (%p5501) target = $region72
        $region71: #{lenet_forward.1} parent=67 // pred_region
          %s5504 = sand.u32 %s227, 1
          %s5505 = scalar_lea.sflag [#allocation4], %s5504
          %s5506 = sand.u32 %s227, 1
          %s5507 = scalar_lea.vmem [#allocation5], %s5506
          %5508 = dma.done %s5505, 16
        $region72: #{lenet_forward.1} parent=67 // pred_fallthru
          _
      $region68: #{lenet_forward.1} parent=5 // pred_fallthru
        _
    $region6: #{lenet_forward.1} parent=1 // loop_footer
      %s23 = sadd.s32 1, %s19
    $region7: #{lenet_forward.1} parent=1 // loop_footer_branch
      %18 = sbr.rel target = $region3
    $region8: #{lenet_forward.1} parent=1 // loop_exit
      _
    %5509 = vsyncpa [#allocation3], 1
    %s5510 = scalar_lea.sflag [#allocation3], 1
    %5511 = vsyncpa %s5510, 1
    %5512 = vsyncpa [#allocation4], 1
    %s5513 = scalar_lea.sflag [#allocation4], 1
    %5514 = vsyncpa %s5513, 1

</llo_original>
